<compile_context>
chip_gen: v7x
topology: tpu7x:2x2x1
jax: 0.10.0
libtpu: 0.0.40
codegen_flags: <defaults>
</compile_context>

<pallas_src>
import functools

import jax
import jax.numpy as jnp
from jax.experimental import pallas as pl
from jax.experimental.pallas import tpu as pltpu

CFG = dict(vocab=128, hidden=128, heads=4, layers=2, ffn=512, max_pos=32, type_vocab=2)


# ----------------------------------------------------------------------------
# Fused Pallas kernel: one grid step = one sequence (batch element).
# All weights resident in VMEM (toy size: ~0.5 MiB), activations ~tens of KiB.
# ----------------------------------------------------------------------------
def _bert_fwd_kernel(
    x_ref, addm_ref,
    emb_g_ref, emb_b_ref,
    wqkv_ref, bqkv_ref, wo_ref, bo_ref,
    ln1g_ref, ln1b_ref, w1_ref, b1_ref, w2_ref, b2_ref, ln2g_ref, ln2b_ref,
    poolw_ref, poolb_ref, clsw_ref, clsb_ref,
    o_ref,
    *, S, NH, DH, L, eps):
    H = NH * DH

    def ln(v, g, b):                       # LayerNorm epilogue, f32 statistics
        mu = jnp.mean(v, axis=-1, keepdims=True)
        var = jnp.mean(jnp.square(v - mu), axis=-1, keepdims=True)
        return (v - mu) * jax.lax.rsqrt(var + eps) * g + b

    def mm(a_bf16, w):                     # bf16 MXU inputs, f32 accumulation
        return jnp.dot(a_bf16, w, preferred_element_type=jnp.float32)

    x = ln(x_ref[0], emb_g_ref[...], emb_b_ref[...])            # [S, H] f32
    addm = addm_ref[0]                                           # [1, S] additive mask

    for l in range(L):                     # static unroll (L = 2)
        # --- fused QKV projection: one lane-dense [S, 3H] matmul ---
        xb = x.astype(jnp.bfloat16)                              # cast once per layer
        qkv = mm(xb, wqkv_ref[l]) + bqkv_ref[l]                  # [S, 3H] f32
        q = qkv[:, 0 * H:1 * H].astype(jnp.bfloat16).reshape(S, NH, DH)  # scale folded
        k = qkv[:, 1 * H:2 * H].astype(jnp.bfloat16).reshape(S, NH, DH)
        v = qkv[:, 2 * H:3 * H].astype(jnp.bfloat16).reshape(S, NH, DH)

        # --- batched-head attention: single score einsum, single context einsum ---
        s = jnp.einsum("qhd,khd->hqk", q, k,
                       preferred_element_type=jnp.float32)       # [NH, S, S]
        s = s + addm                                             # [1,S] -> [NH,S,S]
        s = s - jnp.max(s, axis=-1, keepdims=True)
        p = jnp.exp(s)
        p = p * pl.reciprocal(jnp.sum(p, axis=-1, keepdims=True), approx=True)
        ctx = jnp.einsum("hqk,khd->qhd", p.astype(jnp.bfloat16), v,
                         preferred_element_type=jnp.float32).reshape(S, H)

        # --- output projection + residual + LayerNorm (fused epilogue) ---
        x = ln(x + mm(ctx.astype(jnp.bfloat16), wo_ref[l]) + bo_ref[l],
               ln1g_ref[l], ln1b_ref[l])

        # --- FFN (tanh-approx gelu -> EUP) + residual + LayerNorm ---
        xb = x.astype(jnp.bfloat16)
        hdn = jax.nn.gelu(mm(xb, w1_ref[l]) + b1_ref[l], approximate=True)
        x = ln(x + mm(hdn.astype(jnp.bfloat16), w2_ref[l]) + b2_ref[l],
               ln2g_ref[l], ln2b_ref[l])

    # --- pooler: CLS row is simply row 0 of this sequence's block ---
    cls = x[0:1, :]                                              # [1, H]
    pooled = jnp.tanh(mm(cls.astype(jnp.bfloat16), poolw_ref[...]) + poolb_ref[...])

    # nn.Dropout(0.1): identity at inference time (no RNG applied).
    # classifier padded to 128 output lanes; column 0 is the real logit
    logits = mm(pooled.astype(jnp.bfloat16), clsw_ref[...]) + clsb_ref[...]   # [1, 128]
    o_ref[0] = jax.nn.sigmoid(logits).astype(o_ref.dtype)


def _resident_spec(shape):
    """Weight stays whole-slab resident across the batch grid."""
    zero = (0,) * len(shape)
    return pl.BlockSpec(shape, lambda b, _z=zero: _z)


# ----------------------------------------------------------------------------
# Parameter init (stacked per-layer weights, bf16 matmul weights, scale folded)
# ----------------------------------------------------------------------------
def init_params(key, cfg):
    H, F, L, NH = cfg["hidden"], cfg["ffn"], cfg["layers"], cfg["heads"]
    DH = H // NH
    scale = 1.0 / (DH ** 0.5)
    PAD = 128                                  # lane-dense classifier head width

    ks = iter(jax.random.split(key, 8 * L + 16))
    n = lambda shape, s=0.02: (s * jax.random.normal(next(ks), shape)).astype(jnp.float32)
    bf = lambda a: a.astype(jnp.bfloat16)
    zeros = lambda shape: jnp.zeros(shape, jnp.float32)
    ones = lambda shape: jnp.ones(shape, jnp.float32)

    wqkv, wo, w1, w2 = [], [], [], []
    for _ in range(L):
        wq = n((H, H)) * scale                 # fold 1/sqrt(head_dim) into Q proj
        wqkv.append(jnp.concatenate([wq, n((H, H)), n((H, H))], axis=1))
        wo.append(n((H, H)))
        w1.append(n((H, F)))
        w2.append(n((F, H)))

    cls_w = jnp.zeros((H, PAD), jnp.float32).at[:, 0].set(n((H,)))

    return dict(
        num_heads=NH,
        word_emb=n((cfg["vocab"], H)),
        pos_emb=n((cfg["max_pos"], H)),
        type_emb=n((cfg["type_vocab"], H)),
        emb_ln_g=ones((1, H)), emb_ln_b=zeros((1, H)),
        wqkv=bf(jnp.stack(wqkv)), bqkv=zeros((L, 1, 3 * H)),
        wo=bf(jnp.stack(wo)),     bo=zeros((L, 1, H)),
        ln1_g=ones((L, 1, H)),    ln1_b=zeros((L, 1, H)),
        w1=bf(jnp.stack(w1)),     b1=zeros((L, 1, F)),
        w2=bf(jnp.stack(w2)),     b2=zeros((L, 1, H)),
        ln2_g=ones((L, 1, H)),    ln2_b=zeros((L, 1, H)),
        pool_w=bf(n((H, H))),     pool_b=zeros((1, H)),
        cls_w=bf(cls_w),          cls_b=zeros((1, PAD)),
    )


# ----------------------------------------------------------------------------
# Forward: embedding gather in plain JAX, everything else in one pallas_call
# with a "parallel" batch grid axis.
# ----------------------------------------------------------------------------
def bert_binary_classifier_forward(params, tokens, masks):
    """tokens:[B,S] int32, masks:[B,S] {0,1} -> proba [B,1] float32."""
    B, S = tokens.shape
    H = params["word_emb"].shape[1]
    NH = params["num_heads"]
    DH = H // NH
    L = params["wqkv"].shape[0]
    PAD = params["cls_w"].shape[1]

    # --- embeddings (gather + add: plain-JAX glue); LN happens in-kernel ---
    x = (params["word_emb"][tokens]
         + params["pos_emb"][:S][None, :, :]
         + params["type_emb"][0][None, None, :]).astype(jnp.float32)   # [B,S,H], type_ids=0

    # compact additive attention mask [B,1,S]: 0 valid, -1e9 padding (no S^2 broadcast)
    addm = ((1.0 - masks.astype(jnp.float32)) * -1e9)[:, None, :]

    weight_operands = (
        params["emb_ln_g"], params["emb_ln_b"],
        params["wqkv"], params["bqkv"], params["wo"], params["bo"],
        params["ln1_g"], params["ln1_b"],
        params["w1"], params["b1"], params["w2"], params["b2"],
        params["ln2_g"], params["ln2_b"],
        params["pool_w"], params["pool_b"],
        params["cls_w"], params["cls_b"])

    in_specs = [
        pl.BlockSpec((1, S, H), lambda b: (b, 0, 0)),     # this sequence's embeddings
        pl.BlockSpec((1, 1, S), lambda b: (b, 0, 0)),     # this sequence's additive mask
    ] + [_resident_spec(a.shape) for a in weight_operands]

    out = pl.pallas_call(
        functools.partial(_bert_fwd_kernel, S=S, NH=NH, DH=DH, L=L, eps=1e-12),
        out_shape=jax.ShapeDtypeStruct((B, 1, PAD), jnp.float32),
        grid=(B,),
        in_specs=in_specs,
        out_specs=pl.BlockSpec((1, 1, PAD), lambda b: (b, 0, 0)),
        compiler_params=pltpu.CompilerParams(
            dimension_semantics=("parallel",)),           # 2 TCs on v7x split the batch
    )(x, addm, *weight_operands)

    return out[:, 0, 0:1]                                 # real logit is column 0


# ----------------------------------------------------------------------------

if __name__ == "__main__":
    key = jax.random.PRNGKey(0)
    pkey, tkey = jax.random.split(key)

    params = init_params(pkey, CFG)

    B, S = 2, 8
    tokens = jax.random.randint(tkey, (B, S), 0, CFG["vocab"], dtype=jnp.int32)
    masks = jnp.array([[1, 1, 1, 1, 1, 1, 1, 1],
                       [1, 1, 1, 1, 1, 0, 0, 0]], dtype=jnp.int32)   # batch 1 has padding

    proba = bert_binary_classifier_forward(params, tokens, masks)
    proba = jax.block_until_ready(proba)

    assert proba.shape == (B, 1) and proba.dtype == jnp.float32
    assert bool(jnp.all((proba >= 0.0) & (proba <= 1.0)))
    print("KERNEL_OK")
</pallas_src>

<mosaic_0001>
module attributes {stable_mosaic.version = 11 : i64} {
  func.func @_bert_fwd_kernel(%arg0: i32, %arg1: memref<1x8x128xf32, #tpu.memory_space<vmem>>, %arg2: memref<1x1x8xf32, #tpu.memory_space<vmem>>, %arg3: memref<1x128xf32, #tpu.memory_space<vmem>>, %arg4: memref<1x128xf32, #tpu.memory_space<vmem>>, %arg5: memref<2x128x384xbf16, #tpu.memory_space<vmem>>, %arg6: memref<2x1x384xf32, #tpu.memory_space<vmem>>, %arg7: memref<2x128x128xbf16, #tpu.memory_space<vmem>>, %arg8: memref<2x1x128xf32, #tpu.memory_space<vmem>>, %arg9: memref<2x1x128xf32, #tpu.memory_space<vmem>>, %arg10: memref<2x1x128xf32, #tpu.memory_space<vmem>>, %arg11: memref<2x128x512xbf16, #tpu.memory_space<vmem>>, %arg12: memref<2x1x512xf32, #tpu.memory_space<vmem>>, %arg13: memref<2x512x128xbf16, #tpu.memory_space<vmem>>, %arg14: memref<2x1x128xf32, #tpu.memory_space<vmem>>, %arg15: memref<2x1x128xf32, #tpu.memory_space<vmem>>, %arg16: memref<2x1x128xf32, #tpu.memory_space<vmem>>, %arg17: memref<128x128xbf16, #tpu.memory_space<vmem>>, %arg18: memref<1x128xf32, #tpu.memory_space<vmem>>, %arg19: memref<128x128xbf16, #tpu.memory_space<vmem>>, %arg20: memref<1x128xf32, #tpu.memory_space<vmem>>, %arg21: memref<1x1x128xf32, #tpu.memory_space<vmem>>) attributes {dimension_semantics = [#tpu.dimension_semantics<parallel>], iteration_bounds = array<i64: 2>, scalar_prefetch = 0 : i64, scratch_operands = 0 : i64, tpu.core_type = #tpu.core_type<tc>, window_params = [{transform_indices = @transform_0, window_bounds = array<i64: 1, 8, 128>}, {transform_indices = @transform_1, window_bounds = array<i64: 1, 1, 8>}, {pipeline_mode = #tpu.pipeline_mode<synchronous>, transform_indices = @transform_2, window_bounds = array<i64: 1, 128>}, {pipeline_mode = #tpu.pipeline_mode<synchronous>, transform_indices = @transform_3, window_bounds = array<i64: 1, 128>}, {pipeline_mode = #tpu.pipeline_mode<synchronous>, transform_indices = @transform_4, window_bounds = array<i64: 2, 128, 384>}, {pipeline_mode = #tpu.pipeline_mode<synchronous>, transform_indices = @transform_5, window_bounds = array<i64: 2, 1, 384>}, {pipeline_mode = #tpu.pipeline_mode<synchronous>, transform_indices = @transform_6, window_bounds = array<i64: 2, 128, 128>}, {pipeline_mode = #tpu.pipeline_mode<synchronous>, transform_indices = @transform_7, window_bounds = array<i64: 2, 1, 128>}, {pipeline_mode = #tpu.pipeline_mode<synchronous>, transform_indices = @transform_8, window_bounds = array<i64: 2, 1, 128>}, {pipeline_mode = #tpu.pipeline_mode<synchronous>, transform_indices = @transform_9, window_bounds = array<i64: 2, 1, 128>}, {pipeline_mode = #tpu.pipeline_mode<synchronous>, transform_indices = @transform_10, window_bounds = array<i64: 2, 128, 512>}, {pipeline_mode = #tpu.pipeline_mode<synchronous>, transform_indices = @transform_11, window_bounds = array<i64: 2, 1, 512>}, {pipeline_mode = #tpu.pipeline_mode<synchronous>, transform_indices = @transform_12, window_bounds = array<i64: 2, 512, 128>}, {pipeline_mode = #tpu.pipeline_mode<synchronous>, transform_indices = @transform_13, window_bounds = array<i64: 2, 1, 128>}, {pipeline_mode = #tpu.pipeline_mode<synchronous>, transform_indices = @transform_14, window_bounds = array<i64: 2, 1, 128>}, {pipeline_mode = #tpu.pipeline_mode<synchronous>, transform_indices = @transform_15, window_bounds = array<i64: 2, 1, 128>}, {pipeline_mode = #tpu.pipeline_mode<synchronous>, transform_indices = @transform_16, window_bounds = array<i64: 128, 128>}, {pipeline_mode = #tpu.pipeline_mode<synchronous>, transform_indices = @transform_17, window_bounds = array<i64: 1, 128>}, {pipeline_mode = #tpu.pipeline_mode<synchronous>, transform_indices = @transform_18, window_bounds = array<i64: 128, 128>}, {pipeline_mode = #tpu.pipeline_mode<synchronous>, transform_indices = @transform_19, window_bounds = array<i64: 1, 128>}, {transform_indices = @transform_20, window_bounds = array<i64: 1, 1, 128>}]} {
    %c0 = arith.constant 0 : index
    %c0_0 = arith.constant 0 : index
    %c0_1 = arith.constant 0 : index
    %0 = vector.load %arg1[%c0, %c0_0, %c0_1] : memref<1x8x128xf32, #tpu.memory_space<vmem>>, vector<1x8x128xf32>
    %1 = vector.shape_cast %0 : vector<1x8x128xf32> to vector<8x128xf32>
    %c0_2 = arith.constant 0 : index
    %c0_3 = arith.constant 0 : index
    %2 = vector.load %arg3[%c0_2, %c0_3] : memref<1x128xf32, #tpu.memory_space<vmem>>, vector<1x128xf32>
    %c0_4 = arith.constant 0 : index
    %c0_5 = arith.constant 0 : index
    %3 = vector.load %arg4[%c0_4, %c0_5] : memref<1x128xf32, #tpu.memory_space<vmem>>, vector<1x128xf32>
    %cst = arith.constant dense<0.000000e+00> : vector<8xf32>
    %4 = vector.multi_reduction <add>, %1, %cst [1] : vector<8x128xf32> to vector<8xf32>
    %5 = vector.shape_cast %4 : vector<8xf32> to vector<8x1xf32>
    %cst_6 = arith.constant 1.280000e+02 : f32
    %6 = vector.broadcast %cst_6 : f32 to vector<8x1xf32>
    %7 = arith.divf %5, %6 : vector<8x1xf32>
    %8 = vector.broadcast %7 : vector<8x1xf32> to vector<8x128xf32>
    %9 = arith.subf %1, %8 : vector<8x128xf32>
    %10 = arith.mulf %9, %9 : vector<8x128xf32>
    %cst_7 = arith.constant dense<0.000000e+00> : vector<8xf32>
    %11 = vector.multi_reduction <add>, %10, %cst_7 [1] : vector<8x128xf32> to vector<8xf32>
    %12 = vector.shape_cast %11 : vector<8xf32> to vector<8x1xf32>
    %cst_8 = arith.constant 1.280000e+02 : f32
    %13 = vector.broadcast %cst_8 : f32 to vector<8x1xf32>
    %14 = arith.divf %12, %13 : vector<8x1xf32>
    %15 = vector.broadcast %7 : vector<8x1xf32> to vector<8x128xf32>
    %16 = arith.subf %1, %15 : vector<8x128xf32>
    %cst_9 = arith.constant 9.99999996E-13 : f32
    %17 = vector.broadcast %cst_9 : f32 to vector<8x1xf32>
    %18 = arith.addf %14, %17 : vector<8x1xf32>
    %19 = math.rsqrt %18 : vector<8x1xf32>
    %20 = vector.broadcast %19 : vector<8x1xf32> to vector<8x128xf32>
    %21 = arith.mulf %16, %20 : vector<8x128xf32>
    %22 = vector.broadcast %2 : vector<1x128xf32> to vector<8x128xf32>
    %23 = arith.mulf %21, %22 : vector<8x128xf32>
    %24 = vector.broadcast %3 : vector<1x128xf32> to vector<8x128xf32>
    %25 = arith.addf %23, %24 : vector<8x128xf32>
    %c0_10 = arith.constant 0 : index
    %c0_11 = arith.constant 0 : index
    %c0_12 = arith.constant 0 : index
    %26 = vector.load %arg2[%c0_10, %c0_11, %c0_12] : memref<1x1x8xf32, #tpu.memory_space<vmem>>, vector<1x1x8xf32>
    %27 = vector.shape_cast %26 : vector<1x1x8xf32> to vector<1x8xf32>
    %28 = arith.truncf %25 : vector<8x128xf32> to vector<8x128xbf16>
    %c0_13 = arith.constant 0 : index
    %c0_14 = arith.constant 0 : index
    %c0_15 = arith.constant 0 : index
    %29 = vector.load %arg5[%c0_13, %c0_14, %c0_15] : memref<2x128x384xbf16, #tpu.memory_space<vmem>>, vector<1x128x384xbf16>
    %30 = vector.shape_cast %29 : vector<1x128x384xbf16> to vector<128x384xbf16>
    %cst_16 = arith.constant dense<0.000000e+00> : vector<8x384xf32>
    %31 = tpu.matmul %28, %30, %cst_16 {dimension_numbers = #tpu.dot_dimension_numbers<[1], [0], [0], [1], [0, 0, 1, 1], [], []>} : vector<8x128xbf16>, vector<128x384xbf16>, vector<8x384xf32> -> vector<8x384xf32>
    %c0_17 = arith.constant 0 : index
    %c0_18 = arith.constant 0 : index
    %c0_19 = arith.constant 0 : index
    %32 = vector.load %arg6[%c0_17, %c0_18, %c0_19] : memref<2x1x384xf32, #tpu.memory_space<vmem>>, vector<1x1x384xf32>
    %33 = vector.shape_cast %32 : vector<1x1x384xf32> to vector<1x384xf32>
    %34 = vector.broadcast %33 : vector<1x384xf32> to vector<8x384xf32>
    %35 = arith.addf %31, %34 : vector<8x384xf32>
    %36 = vector.extract_strided_slice %35 {offsets = [0, 0], sizes = [8, 128], strides = [1, 1]} : vector<8x384xf32> to vector<8x128xf32>
    %37 = arith.truncf %36 : vector<8x128xf32> to vector<8x128xbf16>
    %38 = vector.shape_cast %37 : vector<8x128xbf16> to vector<8x4x32xbf16>
    %39 = vector.extract_strided_slice %35 {offsets = [0, 128], sizes = [8, 128], strides = [1, 1]} : vector<8x384xf32> to vector<8x128xf32>
    %40 = arith.truncf %39 : vector<8x128xf32> to vector<8x128xbf16>
    %41 = vector.shape_cast %40 : vector<8x128xbf16> to vector<8x4x32xbf16>
    %42 = vector.extract_strided_slice %35 {offsets = [0, 256], sizes = [8, 128], strides = [1, 1]} : vector<8x384xf32> to vector<8x128xf32>
    %43 = arith.truncf %42 : vector<8x128xf32> to vector<8x128xbf16>
    %44 = vector.shape_cast %43 : vector<8x128xbf16> to vector<8x4x32xbf16>
    "tpu.trace_start"() <{level = 10 : i32, message = "qhd,khd->hqk"}> : () -> ()
    %cst_20 = arith.constant dense<0.000000e+00> : vector<4x8x8xf32>
    %45 = tpu.matmul %38, %41, %cst_20 {dimension_numbers = #tpu.dot_dimension_numbers<[2], [2], [0], [0], [0, 1, 0, 0, 1, 0], [1], [1]>} : vector<8x4x32xbf16>, vector<8x4x32xbf16>, vector<4x8x8xf32> -> vector<4x8x8xf32>
    "tpu.trace_stop"() : () -> ()
    %46 = vector.shape_cast %27 : vector<1x8xf32> to vector<1x1x8xf32>
    %47 = vector.broadcast %46 : vector<1x1x8xf32> to vector<4x8x8xf32>
    %48 = arith.addf %45, %47 : vector<4x8x8xf32>
    %cst_21 = arith.constant dense<0xFF800000> : vector<4x8xf32>
    %49 = vector.multi_reduction <maximumf>, %48, %cst_21 [2] : vector<4x8x8xf32> to vector<4x8xf32>
    %50 = vector.shape_cast %49 : vector<4x8xf32> to vector<4x8x1xf32>
    %51 = vector.broadcast %50 : vector<4x8x1xf32> to vector<4x8x8xf32>
    %52 = arith.subf %48, %51 : vector<4x8x8xf32>
    %53 = math.exp %52 : vector<4x8x8xf32>
    %cst_22 = arith.constant dense<0.000000e+00> : vector<4x8xf32>
    %54 = vector.multi_reduction <add>, %53, %cst_22 [2] : vector<4x8x8xf32> to vector<4x8xf32>
    %55 = vector.shape_cast %54 : vector<4x8xf32> to vector<4x8x1xf32>
    %56 = tpu.reciprocal %55 {approx = true} : vector<4x8x1xf32> -> vector<4x8x1xf32>
    %57 = vector.broadcast %56 : vector<4x8x1xf32> to vector<4x8x8xf32>
    %58 = arith.mulf %53, %57 : vector<4x8x8xf32>
    %59 = arith.truncf %58 : vector<4x8x8xf32> to vector<4x8x8xbf16>
    "tpu.trace_start"() <{level = 10 : i32, message = "hqk,khd->qhd"}> : () -> ()
    %cst_23 = arith.constant dense<0.000000e+00> : vector<4x32x8xf32>
    %60 = tpu.matmul %44, %59, %cst_23 {dimension_numbers = #tpu.dot_dimension_numbers<[0], [2], [2], [1], [0, 1, 0, 2, 1, 1], [1], [0]>} : vector<8x4x32xbf16>, vector<4x8x8xbf16>, vector<4x32x8xf32> -> vector<4x32x8xf32>
    %61 = tpu.transpose %60, [2, 0, 1] : vector<4x32x8xf32> -> vector<8x4x32xf32>
    "tpu.trace_stop"() : () -> ()
    %62 = vector.shape_cast %61 : vector<8x4x32xf32> to vector<8x128xf32>
    %63 = arith.truncf %62 : vector<8x128xf32> to vector<8x128xbf16>
    %c0_24 = arith.constant 0 : index
    %c0_25 = arith.constant 0 : index
    %c0_26 = arith.constant 0 : index
    %64 = vector.load %arg7[%c0_24, %c0_25, %c0_26] : memref<2x128x128xbf16, #tpu.memory_space<vmem>>, vector<1x128x128xbf16>
    %65 = vector.shape_cast %64 : vector<1x128x128xbf16> to vector<128x128xbf16>
    %cst_27 = arith.constant dense<0.000000e+00> : vector<8x128xf32>
    %66 = tpu.matmul %63, %65, %cst_27 {dimension_numbers = #tpu.dot_dimension_numbers<[1], [0], [0], [1], [0, 0, 1, 1], [], []>} : vector<8x128xbf16>, vector<128x128xbf16>, vector<8x128xf32> -> vector<8x128xf32>
    %67 = arith.addf %25, %66 : vector<8x128xf32>
    %c0_28 = arith.constant 0 : index
    %c0_29 = arith.constant 0 : index
    %c0_30 = arith.constant 0 : index
    %68 = vector.load %arg8[%c0_28, %c0_29, %c0_30] : memref<2x1x128xf32, #tpu.memory_space<vmem>>, vector<1x1x128xf32>
    %69 = vector.shape_cast %68 : vector<1x1x128xf32> to vector<1x128xf32>
    %70 = vector.broadcast %69 : vector<1x128xf32> to vector<8x128xf32>
    %71 = arith.addf %67, %70 : vector<8x128xf32>
    %c0_31 = arith.constant 0 : index
    %c0_32 = arith.constant 0 : index
    %c0_33 = arith.constant 0 : index
    %72 = vector.load %arg9[%c0_31, %c0_32, %c0_33] : memref<2x1x128xf32, #tpu.memory_space<vmem>>, vector<1x1x128xf32>
    %73 = vector.shape_cast %72 : vector<1x1x128xf32> to vector<1x128xf32>
    %c0_34 = arith.constant 0 : index
    %c0_35 = arith.constant 0 : index
    %c0_36 = arith.constant 0 : index
    %74 = vector.load %arg10[%c0_34, %c0_35, %c0_36] : memref<2x1x128xf32, #tpu.memory_space<vmem>>, vector<1x1x128xf32>
    %75 = vector.shape_cast %74 : vector<1x1x128xf32> to vector<1x128xf32>
    %cst_37 = arith.constant dense<0.000000e+00> : vector<8xf32>
    %76 = vector.multi_reduction <add>, %71, %cst_37 [1] : vector<8x128xf32> to vector<8xf32>
    %77 = vector.shape_cast %76 : vector<8xf32> to vector<8x1xf32>
    %cst_38 = arith.constant 1.280000e+02 : f32
    %78 = vector.broadcast %cst_38 : f32 to vector<8x1xf32>
    %79 = arith.divf %77, %78 : vector<8x1xf32>
    %80 = vector.broadcast %79 : vector<8x1xf32> to vector<8x128xf32>
    %81 = arith.subf %71, %80 : vector<8x128xf32>
    %82 = arith.mulf %81, %81 : vector<8x128xf32>
    %cst_39 = arith.constant dense<0.000000e+00> : vector<8xf32>
    %83 = vector.multi_reduction <add>, %82, %cst_39 [1] : vector<8x128xf32> to vector<8xf32>
    %84 = vector.shape_cast %83 : vector<8xf32> to vector<8x1xf32>
    %cst_40 = arith.constant 1.280000e+02 : f32
    %85 = vector.broadcast %cst_40 : f32 to vector<8x1xf32>
    %86 = arith.divf %84, %85 : vector<8x1xf32>
    %87 = vector.broadcast %79 : vector<8x1xf32> to vector<8x128xf32>
    %88 = arith.subf %71, %87 : vector<8x128xf32>
    %cst_41 = arith.constant 9.99999996E-13 : f32
    %89 = vector.broadcast %cst_41 : f32 to vector<8x1xf32>
    %90 = arith.addf %86, %89 : vector<8x1xf32>
    %91 = math.rsqrt %90 : vector<8x1xf32>
    %92 = vector.broadcast %91 : vector<8x1xf32> to vector<8x128xf32>
    %93 = arith.mulf %88, %92 : vector<8x128xf32>
    %94 = vector.broadcast %73 : vector<1x128xf32> to vector<8x128xf32>
    %95 = arith.mulf %93, %94 : vector<8x128xf32>
    %96 = vector.broadcast %75 : vector<1x128xf32> to vector<8x128xf32>
    %97 = arith.addf %95, %96 : vector<8x128xf32>
    %98 = arith.truncf %97 : vector<8x128xf32> to vector<8x128xbf16>
    %c0_42 = arith.constant 0 : index
    %c0_43 = arith.constant 0 : index
    %c0_44 = arith.constant 0 : index
    %99 = vector.load %arg11[%c0_42, %c0_43, %c0_44] : memref<2x128x512xbf16, #tpu.memory_space<vmem>>, vector<1x128x512xbf16>
    %100 = vector.shape_cast %99 : vector<1x128x512xbf16> to vector<128x512xbf16>
    %cst_45 = arith.constant dense<0.000000e+00> : vector<8x512xf32>
    %101 = tpu.matmul %98, %100, %cst_45 {dimension_numbers = #tpu.dot_dimension_numbers<[1], [0], [0], [1], [0, 0, 1, 1], [], []>} : vector<8x128xbf16>, vector<128x512xbf16>, vector<8x512xf32> -> vector<8x512xf32>
    %c0_46 = arith.constant 0 : index
    %c0_47 = arith.constant 0 : index
    %c0_48 = arith.constant 0 : index
    %102 = vector.load %arg12[%c0_46, %c0_47, %c0_48] : memref<2x1x512xf32, #tpu.memory_space<vmem>>, vector<1x1x512xf32>
    %103 = vector.shape_cast %102 : vector<1x1x512xf32> to vector<1x512xf32>
    %104 = vector.broadcast %103 : vector<1x512xf32> to vector<8x512xf32>
    %105 = arith.addf %101, %104 : vector<8x512xf32>
    %106 = arith.mulf %105, %105 : vector<8x512xf32>
    %107 = arith.mulf %105, %106 : vector<8x512xf32>
    %cst_49 = arith.constant 4.471500e-02 : f32
    %108 = vector.broadcast %cst_49 : f32 to vector<8x512xf32>
    %109 = arith.mulf %108, %107 : vector<8x512xf32>
    %110 = arith.addf %105, %109 : vector<8x512xf32>
    %cst_50 = arith.constant 0.797884583 : f32
    %111 = vector.broadcast %cst_50 : f32 to vector<8x512xf32>
    %112 = arith.mulf %111, %110 : vector<8x512xf32>
    %113 = math.tanh %112 : vector<8x512xf32>
    %cst_51 = arith.constant 1.000000e+00 : f32
    %114 = vector.broadcast %cst_51 : f32 to vector<8x512xf32>
    %115 = arith.addf %114, %113 : vector<8x512xf32>
    %cst_52 = arith.constant 5.000000e-01 : f32
    %116 = vector.broadcast %cst_52 : f32 to vector<8x512xf32>
    %117 = arith.mulf %116, %115 : vector<8x512xf32>
    %118 = arith.mulf %105, %117 : vector<8x512xf32>
    %119 = arith.truncf %118 : vector<8x512xf32> to vector<8x512xbf16>
    %c0_53 = arith.constant 0 : index
    %c0_54 = arith.constant 0 : index
    %c0_55 = arith.constant 0 : index
    %120 = vector.load %arg13[%c0_53, %c0_54, %c0_55] : memref<2x512x128xbf16, #tpu.memory_space<vmem>>, vector<1x512x128xbf16>
    %121 = vector.shape_cast %120 : vector<1x512x128xbf16> to vector<512x128xbf16>
    %cst_56 = arith.constant dense<0.000000e+00> : vector<8x128xf32>
    %122 = tpu.matmul %119, %121, %cst_56 {dimension_numbers = #tpu.dot_dimension_numbers<[1], [0], [0], [1], [0, 0, 1, 1], [], []>} : vector<8x512xbf16>, vector<512x128xbf16>, vector<8x128xf32> -> vector<8x128xf32>
    %123 = arith.addf %97, %122 : vector<8x128xf32>
    %c0_57 = arith.constant 0 : index
    %c0_58 = arith.constant 0 : index
    %c0_59 = arith.constant 0 : index
    %124 = vector.load %arg14[%c0_57, %c0_58, %c0_59] : memref<2x1x128xf32, #tpu.memory_space<vmem>>, vector<1x1x128xf32>
    %125 = vector.shape_cast %124 : vector<1x1x128xf32> to vector<1x128xf32>
    %126 = vector.broadcast %125 : vector<1x128xf32> to vector<8x128xf32>
    %127 = arith.addf %123, %126 : vector<8x128xf32>
    %c0_60 = arith.constant 0 : index
    %c0_61 = arith.constant 0 : index
    %c0_62 = arith.constant 0 : index
    %128 = vector.load %arg15[%c0_60, %c0_61, %c0_62] : memref<2x1x128xf32, #tpu.memory_space<vmem>>, vector<1x1x128xf32>
    %129 = vector.shape_cast %128 : vector<1x1x128xf32> to vector<1x128xf32>
    %c0_63 = arith.constant 0 : index
    %c0_64 = arith.constant 0 : index
    %c0_65 = arith.constant 0 : index
    %130 = vector.load %arg16[%c0_63, %c0_64, %c0_65] : memref<2x1x128xf32, #tpu.memory_space<vmem>>, vector<1x1x128xf32>
    %131 = vector.shape_cast %130 : vector<1x1x128xf32> to vector<1x128xf32>
    %cst_66 = arith.constant dense<0.000000e+00> : vector<8xf32>
    %132 = vector.multi_reduction <add>, %127, %cst_66 [1] : vector<8x128xf32> to vector<8xf32>
    %133 = vector.shape_cast %132 : vector<8xf32> to vector<8x1xf32>
    %cst_67 = arith.constant 1.280000e+02 : f32
    %134 = vector.broadcast %cst_67 : f32 to vector<8x1xf32>
    %135 = arith.divf %133, %134 : vector<8x1xf32>
    %136 = vector.broadcast %135 : vector<8x1xf32> to vector<8x128xf32>
    %137 = arith.subf %127, %136 : vector<8x128xf32>
    %138 = arith.mulf %137, %137 : vector<8x128xf32>
    %cst_68 = arith.constant dense<0.000000e+00> : vector<8xf32>
    %139 = vector.multi_reduction <add>, %138, %cst_68 [1] : vector<8x128xf32> to vector<8xf32>
    %140 = vector.shape_cast %139 : vector<8xf32> to vector<8x1xf32>
    %cst_69 = arith.constant 1.280000e+02 : f32
    %141 = vector.broadcast %cst_69 : f32 to vector<8x1xf32>
    %142 = arith.divf %140, %141 : vector<8x1xf32>
    %143 = vector.broadcast %135 : vector<8x1xf32> to vector<8x128xf32>
    %144 = arith.subf %127, %143 : vector<8x128xf32>
    %cst_70 = arith.constant 9.99999996E-13 : f32
    %145 = vector.broadcast %cst_70 : f32 to vector<8x1xf32>
    %146 = arith.addf %142, %145 : vector<8x1xf32>
    %147 = math.rsqrt %146 : vector<8x1xf32>
    %148 = vector.broadcast %147 : vector<8x1xf32> to vector<8x128xf32>
    %149 = arith.mulf %144, %148 : vector<8x128xf32>
    %150 = vector.broadcast %129 : vector<1x128xf32> to vector<8x128xf32>
    %151 = arith.mulf %149, %150 : vector<8x128xf32>
    %152 = vector.broadcast %131 : vector<1x128xf32> to vector<8x128xf32>
    %153 = arith.addf %151, %152 : vector<8x128xf32>
    %154 = arith.truncf %153 : vector<8x128xf32> to vector<8x128xbf16>
    %c1 = arith.constant 1 : index
    %c0_71 = arith.constant 0 : index
    %c0_72 = arith.constant 0 : index
    %155 = vector.load %arg5[%c1, %c0_71, %c0_72] : memref<2x128x384xbf16, #tpu.memory_space<vmem>>, vector<1x128x384xbf16>
    %156 = vector.shape_cast %155 : vector<1x128x384xbf16> to vector<128x384xbf16>
    %cst_73 = arith.constant dense<0.000000e+00> : vector<8x384xf32>
    %157 = tpu.matmul %154, %156, %cst_73 {dimension_numbers = #tpu.dot_dimension_numbers<[1], [0], [0], [1], [0, 0, 1, 1], [], []>} : vector<8x128xbf16>, vector<128x384xbf16>, vector<8x384xf32> -> vector<8x384xf32>
    %c1_74 = arith.constant 1 : index
    %c0_75 = arith.constant 0 : index
    %c0_76 = arith.constant 0 : index
    %158 = vector.load %arg6[%c1_74, %c0_75, %c0_76] : memref<2x1x384xf32, #tpu.memory_space<vmem>>, vector<1x1x384xf32>
    %159 = vector.shape_cast %158 : vector<1x1x384xf32> to vector<1x384xf32>
    %160 = vector.broadcast %159 : vector<1x384xf32> to vector<8x384xf32>
    %161 = arith.addf %157, %160 : vector<8x384xf32>
    %162 = vector.extract_strided_slice %161 {offsets = [0, 0], sizes = [8, 128], strides = [1, 1]} : vector<8x384xf32> to vector<8x128xf32>
    %163 = arith.truncf %162 : vector<8x128xf32> to vector<8x128xbf16>
    %164 = vector.shape_cast %163 : vector<8x128xbf16> to vector<8x4x32xbf16>
    %165 = vector.extract_strided_slice %161 {offsets = [0, 128], sizes = [8, 128], strides = [1, 1]} : vector<8x384xf32> to vector<8x128xf32>
    %166 = arith.truncf %165 : vector<8x128xf32> to vector<8x128xbf16>
    %167 = vector.shape_cast %166 : vector<8x128xbf16> to vector<8x4x32xbf16>
    %168 = vector.extract_strided_slice %161 {offsets = [0, 256], sizes = [8, 128], strides = [1, 1]} : vector<8x384xf32> to vector<8x128xf32>
    %169 = arith.truncf %168 : vector<8x128xf32> to vector<8x128xbf16>
    %170 = vector.shape_cast %169 : vector<8x128xbf16> to vector<8x4x32xbf16>
    "tpu.trace_start"() <{level = 10 : i32, message = "qhd,khd->hqk"}> : () -> ()
    %cst_77 = arith.constant dense<0.000000e+00> : vector<4x8x8xf32>
    %171 = tpu.matmul %164, %167, %cst_77 {dimension_numbers = #tpu.dot_dimension_numbers<[2], [2], [0], [0], [0, 1, 0, 0, 1, 0], [1], [1]>} : vector<8x4x32xbf16>, vector<8x4x32xbf16>, vector<4x8x8xf32> -> vector<4x8x8xf32>
    "tpu.trace_stop"() : () -> ()
    %172 = vector.shape_cast %27 : vector<1x8xf32> to vector<1x1x8xf32>
    %173 = vector.broadcast %172 : vector<1x1x8xf32> to vector<4x8x8xf32>
    %174 = arith.addf %171, %173 : vector<4x8x8xf32>
    %cst_78 = arith.constant dense<0xFF800000> : vector<4x8xf32>
    %175 = vector.multi_reduction <maximumf>, %174, %cst_78 [2] : vector<4x8x8xf32> to vector<4x8xf32>
    %176 = vector.shape_cast %175 : vector<4x8xf32> to vector<4x8x1xf32>
    %177 = vector.broadcast %176 : vector<4x8x1xf32> to vector<4x8x8xf32>
    %178 = arith.subf %174, %177 : vector<4x8x8xf32>
    %179 = math.exp %178 : vector<4x8x8xf32>
    %cst_79 = arith.constant dense<0.000000e+00> : vector<4x8xf32>
    %180 = vector.multi_reduction <add>, %179, %cst_79 [2] : vector<4x8x8xf32> to vector<4x8xf32>
    %181 = vector.shape_cast %180 : vector<4x8xf32> to vector<4x8x1xf32>
    %182 = tpu.reciprocal %181 {approx = true} : vector<4x8x1xf32> -> vector<4x8x1xf32>
    %183 = vector.broadcast %182 : vector<4x8x1xf32> to vector<4x8x8xf32>
    %184 = arith.mulf %179, %183 : vector<4x8x8xf32>
    %185 = arith.truncf %184 : vector<4x8x8xf32> to vector<4x8x8xbf16>
    "tpu.trace_start"() <{level = 10 : i32, message = "hqk,khd->qhd"}> : () -> ()
    %cst_80 = arith.constant dense<0.000000e+00> : vector<4x32x8xf32>
    %186 = tpu.matmul %170, %185, %cst_80 {dimension_numbers = #tpu.dot_dimension_numbers<[0], [2], [2], [1], [0, 1, 0, 2, 1, 1], [1], [0]>} : vector<8x4x32xbf16>, vector<4x8x8xbf16>, vector<4x32x8xf32> -> vector<4x32x8xf32>
    %187 = tpu.transpose %186, [2, 0, 1] : vector<4x32x8xf32> -> vector<8x4x32xf32>
    "tpu.trace_stop"() : () -> ()
    %188 = vector.shape_cast %187 : vector<8x4x32xf32> to vector<8x128xf32>
    %189 = arith.truncf %188 : vector<8x128xf32> to vector<8x128xbf16>
    %c1_81 = arith.constant 1 : index
    %c0_82 = arith.constant 0 : index
    %c0_83 = arith.constant 0 : index
    %190 = vector.load %arg7[%c1_81, %c0_82, %c0_83] : memref<2x128x128xbf16, #tpu.memory_space<vmem>>, vector<1x128x128xbf16>
    %191 = vector.shape_cast %190 : vector<1x128x128xbf16> to vector<128x128xbf16>
    %cst_84 = arith.constant dense<0.000000e+00> : vector<8x128xf32>
    %192 = tpu.matmul %189, %191, %cst_84 {dimension_numbers = #tpu.dot_dimension_numbers<[1], [0], [0], [1], [0, 0, 1, 1], [], []>} : vector<8x128xbf16>, vector<128x128xbf16>, vector<8x128xf32> -> vector<8x128xf32>
    %193 = arith.addf %153, %192 : vector<8x128xf32>
    %c1_85 = arith.constant 1 : index
    %c0_86 = arith.constant 0 : index
    %c0_87 = arith.constant 0 : index
    %194 = vector.load %arg8[%c1_85, %c0_86, %c0_87] : memref<2x1x128xf32, #tpu.memory_space<vmem>>, vector<1x1x128xf32>
    %195 = vector.shape_cast %194 : vector<1x1x128xf32> to vector<1x128xf32>
    %196 = vector.broadcast %195 : vector<1x128xf32> to vector<8x128xf32>
    %197 = arith.addf %193, %196 : vector<8x128xf32>
    %c1_88 = arith.constant 1 : index
    %c0_89 = arith.constant 0 : index
    %c0_90 = arith.constant 0 : index
    %198 = vector.load %arg9[%c1_88, %c0_89, %c0_90] : memref<2x1x128xf32, #tpu.memory_space<vmem>>, vector<1x1x128xf32>
    %199 = vector.shape_cast %198 : vector<1x1x128xf32> to vector<1x128xf32>
    %c1_91 = arith.constant 1 : index
    %c0_92 = arith.constant 0 : index
    %c0_93 = arith.constant 0 : index
    %200 = vector.load %arg10[%c1_91, %c0_92, %c0_93] : memref<2x1x128xf32, #tpu.memory_space<vmem>>, vector<1x1x128xf32>
    %201 = vector.shape_cast %200 : vector<1x1x128xf32> to vector<1x128xf32>
    %cst_94 = arith.constant dense<0.000000e+00> : vector<8xf32>
    %202 = vector.multi_reduction <add>, %197, %cst_94 [1] : vector<8x128xf32> to vector<8xf32>
    %203 = vector.shape_cast %202 : vector<8xf32> to vector<8x1xf32>
    %cst_95 = arith.constant 1.280000e+02 : f32
    %204 = vector.broadcast %cst_95 : f32 to vector<8x1xf32>
    %205 = arith.divf %203, %204 : vector<8x1xf32>
    %206 = vector.broadcast %205 : vector<8x1xf32> to vector<8x128xf32>
    %207 = arith.subf %197, %206 : vector<8x128xf32>
    %208 = arith.mulf %207, %207 : vector<8x128xf32>
    %cst_96 = arith.constant dense<0.000000e+00> : vector<8xf32>
    %209 = vector.multi_reduction <add>, %208, %cst_96 [1] : vector<8x128xf32> to vector<8xf32>
    %210 = vector.shape_cast %209 : vector<8xf32> to vector<8x1xf32>
    %cst_97 = arith.constant 1.280000e+02 : f32
    %211 = vector.broadcast %cst_97 : f32 to vector<8x1xf32>
    %212 = arith.divf %210, %211 : vector<8x1xf32>
    %213 = vector.broadcast %205 : vector<8x1xf32> to vector<8x128xf32>
    %214 = arith.subf %197, %213 : vector<8x128xf32>
    %cst_98 = arith.constant 9.99999996E-13 : f32
    %215 = vector.broadcast %cst_98 : f32 to vector<8x1xf32>
    %216 = arith.addf %212, %215 : vector<8x1xf32>
    %217 = math.rsqrt %216 : vector<8x1xf32>
    %218 = vector.broadcast %217 : vector<8x1xf32> to vector<8x128xf32>
    %219 = arith.mulf %214, %218 : vector<8x128xf32>
    %220 = vector.broadcast %199 : vector<1x128xf32> to vector<8x128xf32>
    %221 = arith.mulf %219, %220 : vector<8x128xf32>
    %222 = vector.broadcast %201 : vector<1x128xf32> to vector<8x128xf32>
    %223 = arith.addf %221, %222 : vector<8x128xf32>
    %224 = arith.truncf %223 : vector<8x128xf32> to vector<8x128xbf16>
    %c1_99 = arith.constant 1 : index
    %c0_100 = arith.constant 0 : index
    %c0_101 = arith.constant 0 : index
    %225 = vector.load %arg11[%c1_99, %c0_100, %c0_101] : memref<2x128x512xbf16, #tpu.memory_space<vmem>>, vector<1x128x512xbf16>
    %226 = vector.shape_cast %225 : vector<1x128x512xbf16> to vector<128x512xbf16>
    %cst_102 = arith.constant dense<0.000000e+00> : vector<8x512xf32>
    %227 = tpu.matmul %224, %226, %cst_102 {dimension_numbers = #tpu.dot_dimension_numbers<[1], [0], [0], [1], [0, 0, 1, 1], [], []>} : vector<8x128xbf16>, vector<128x512xbf16>, vector<8x512xf32> -> vector<8x512xf32>
    %c1_103 = arith.constant 1 : index
    %c0_104 = arith.constant 0 : index
    %c0_105 = arith.constant 0 : index
    %228 = vector.load %arg12[%c1_103, %c0_104, %c0_105] : memref<2x1x512xf32, #tpu.memory_space<vmem>>, vector<1x1x512xf32>
    %229 = vector.shape_cast %228 : vector<1x1x512xf32> to vector<1x512xf32>
    %230 = vector.broadcast %229 : vector<1x512xf32> to vector<8x512xf32>
    %231 = arith.addf %227, %230 : vector<8x512xf32>
    %232 = arith.mulf %231, %231 : vector<8x512xf32>
    %233 = arith.mulf %231, %232 : vector<8x512xf32>
    %cst_106 = arith.constant 4.471500e-02 : f32
    %234 = vector.broadcast %cst_106 : f32 to vector<8x512xf32>
    %235 = arith.mulf %234, %233 : vector<8x512xf32>
    %236 = arith.addf %231, %235 : vector<8x512xf32>
    %cst_107 = arith.constant 0.797884583 : f32
    %237 = vector.broadcast %cst_107 : f32 to vector<8x512xf32>
    %238 = arith.mulf %237, %236 : vector<8x512xf32>
    %239 = math.tanh %238 : vector<8x512xf32>
    %cst_108 = arith.constant 1.000000e+00 : f32
    %240 = vector.broadcast %cst_108 : f32 to vector<8x512xf32>
    %241 = arith.addf %240, %239 : vector<8x512xf32>
    %cst_109 = arith.constant 5.000000e-01 : f32
    %242 = vector.broadcast %cst_109 : f32 to vector<8x512xf32>
    %243 = arith.mulf %242, %241 : vector<8x512xf32>
    %244 = arith.mulf %231, %243 : vector<8x512xf32>
    %245 = arith.truncf %244 : vector<8x512xf32> to vector<8x512xbf16>
    %c1_110 = arith.constant 1 : index
    %c0_111 = arith.constant 0 : index
    %c0_112 = arith.constant 0 : index
    %246 = vector.load %arg13[%c1_110, %c0_111, %c0_112] : memref<2x512x128xbf16, #tpu.memory_space<vmem>>, vector<1x512x128xbf16>
    %247 = vector.shape_cast %246 : vector<1x512x128xbf16> to vector<512x128xbf16>
    %cst_113 = arith.constant dense<0.000000e+00> : vector<8x128xf32>
    %248 = tpu.matmul %245, %247, %cst_113 {dimension_numbers = #tpu.dot_dimension_numbers<[1], [0], [0], [1], [0, 0, 1, 1], [], []>} : vector<8x512xbf16>, vector<512x128xbf16>, vector<8x128xf32> -> vector<8x128xf32>
    %249 = arith.addf %223, %248 : vector<8x128xf32>
    %c1_114 = arith.constant 1 : index
    %c0_115 = arith.constant 0 : index
    %c0_116 = arith.constant 0 : index
    %250 = vector.load %arg14[%c1_114, %c0_115, %c0_116] : memref<2x1x128xf32, #tpu.memory_space<vmem>>, vector<1x1x128xf32>
    %251 = vector.shape_cast %250 : vector<1x1x128xf32> to vector<1x128xf32>
    %252 = vector.broadcast %251 : vector<1x128xf32> to vector<8x128xf32>
    %253 = arith.addf %249, %252 : vector<8x128xf32>
    %c1_117 = arith.constant 1 : index
    %c0_118 = arith.constant 0 : index
    %c0_119 = arith.constant 0 : index
    %254 = vector.load %arg15[%c1_117, %c0_118, %c0_119] : memref<2x1x128xf32, #tpu.memory_space<vmem>>, vector<1x1x128xf32>
    %255 = vector.shape_cast %254 : vector<1x1x128xf32> to vector<1x128xf32>
    %c1_120 = arith.constant 1 : index
    %c0_121 = arith.constant 0 : index
    %c0_122 = arith.constant 0 : index
    %256 = vector.load %arg16[%c1_120, %c0_121, %c0_122] : memref<2x1x128xf32, #tpu.memory_space<vmem>>, vector<1x1x128xf32>
    %257 = vector.shape_cast %256 : vector<1x1x128xf32> to vector<1x128xf32>
    %cst_123 = arith.constant dense<0.000000e+00> : vector<8xf32>
    %258 = vector.multi_reduction <add>, %253, %cst_123 [1] : vector<8x128xf32> to vector<8xf32>
    %259 = vector.shape_cast %258 : vector<8xf32> to vector<8x1xf32>
    %cst_124 = arith.constant 1.280000e+02 : f32
    %260 = vector.broadcast %cst_124 : f32 to vector<8x1xf32>
    %261 = arith.divf %259, %260 : vector<8x1xf32>
    %262 = vector.broadcast %261 : vector<8x1xf32> to vector<8x128xf32>
    %263 = arith.subf %253, %262 : vector<8x128xf32>
    %264 = arith.mulf %263, %263 : vector<8x128xf32>
    %cst_125 = arith.constant dense<0.000000e+00> : vector<8xf32>
    %265 = vector.multi_reduction <add>, %264, %cst_125 [1] : vector<8x128xf32> to vector<8xf32>
    %266 = vector.shape_cast %265 : vector<8xf32> to vector<8x1xf32>
    %cst_126 = arith.constant 1.280000e+02 : f32
    %267 = vector.broadcast %cst_126 : f32 to vector<8x1xf32>
    %268 = arith.divf %266, %267 : vector<8x1xf32>
    %269 = vector.broadcast %261 : vector<8x1xf32> to vector<8x128xf32>
    %270 = arith.subf %253, %269 : vector<8x128xf32>
    %cst_127 = arith.constant 9.99999996E-13 : f32
    %271 = vector.broadcast %cst_127 : f32 to vector<8x1xf32>
    %272 = arith.addf %268, %271 : vector<8x1xf32>
    %273 = math.rsqrt %272 : vector<8x1xf32>
    %274 = vector.broadcast %273 : vector<8x1xf32> to vector<8x128xf32>
    %275 = arith.mulf %270, %274 : vector<8x128xf32>
    %276 = vector.broadcast %255 : vector<1x128xf32> to vector<8x128xf32>
    %277 = arith.mulf %275, %276 : vector<8x128xf32>
    %278 = vector.broadcast %257 : vector<1x128xf32> to vector<8x128xf32>
    %279 = arith.addf %277, %278 : vector<8x128xf32>
    %280 = vector.extract_strided_slice %279 {offsets = [0, 0], sizes = [1, 128], strides = [1, 1]} : vector<8x128xf32> to vector<1x128xf32>
    %281 = arith.truncf %280 : vector<1x128xf32> to vector<1x128xbf16>
    %c0_128 = arith.constant 0 : index
    %c0_129 = arith.constant 0 : index
    %282 = vector.load %arg17[%c0_128, %c0_129] : memref<128x128xbf16, #tpu.memory_space<vmem>>, vector<128x128xbf16>
    %cst_130 = arith.constant dense<0.000000e+00> : vector<1x128xf32>
    %283 = tpu.matmul %281, %282, %cst_130 {dimension_numbers = #tpu.dot_dimension_numbers<[1], [0], [0], [1], [0, 0, 1, 1], [], []>} : vector<1x128xbf16>, vector<128x128xbf16>, vector<1x128xf32> -> vector<1x128xf32>
    %c0_131 = arith.constant 0 : index
    %c0_132 = arith.constant 0 : index
    %284 = vector.load %arg18[%c0_131, %c0_132] : memref<1x128xf32, #tpu.memory_space<vmem>>, vector<1x128xf32>
    %285 = arith.addf %283, %284 : vector<1x128xf32>
    %286 = math.tanh %285 : vector<1x128xf32>
    %287 = arith.truncf %286 : vector<1x128xf32> to vector<1x128xbf16>
    %c0_133 = arith.constant 0 : index
    %c0_134 = arith.constant 0 : index
    %288 = vector.load %arg19[%c0_133, %c0_134] : memref<128x128xbf16, #tpu.memory_space<vmem>>, vector<128x128xbf16>
    %cst_135 = arith.constant dense<0.000000e+00> : vector<1x128xf32>
    %289 = tpu.matmul %287, %288, %cst_135 {dimension_numbers = #tpu.dot_dimension_numbers<[1], [0], [0], [1], [0, 0, 1, 1], [], []>} : vector<1x128xbf16>, vector<128x128xbf16>, vector<1x128xf32> -> vector<1x128xf32>
    %c0_136 = arith.constant 0 : index
    %c0_137 = arith.constant 0 : index
    %290 = vector.load %arg20[%c0_136, %c0_137] : memref<1x128xf32, #tpu.memory_space<vmem>>, vector<1x128xf32>
    %291 = arith.addf %289, %290 : vector<1x128xf32>
    %292 = arith.negf %291 : vector<1x128xf32>
    %293 = math.exp %292 : vector<1x128xf32>
    %cst_138 = arith.constant 1.000000e+00 : f32
    %294 = vector.broadcast %cst_138 : f32 to vector<1x128xf32>
    %295 = arith.addf %294, %293 : vector<1x128xf32>
    %296 = arith.divf %294, %295 : vector<1x128xf32>
    %c0_139 = arith.constant 0 : index
    %c0_140 = arith.constant 0 : index
    %c0_141 = arith.constant 0 : index
    %297 = vector.load %arg21[%c0_139, %c0_140, %c0_141] : memref<1x1x128xf32, #tpu.memory_space<vmem>>, vector<1x1x128xf32>
    %298 = vector.shape_cast %297 : vector<1x1x128xf32> to vector<1x128xf32>
    %299 = vector.shape_cast %296 : vector<1x128xf32> to vector<1x1x128xf32>
    tpu.vector_store %arg21[%c0_139, %c0_140, %c0_141], %299 {strides = array<i32>} : memref<1x1x128xf32, #tpu.memory_space<vmem>>, vector<1x1x128xf32>,
    return
  }
  func.func @transform_0(%arg0: i32) -> (i32, i32, i32) {
    %c0_i32 = arith.constant 0 : i32
    %c0_i32_0 = arith.constant 0 : i32
    %c0_i32_1 = arith.constant 0 : i32
    return %arg0, %c0_i32, %c0_i32_0 : i32, i32, i32
  }
  func.func @transform_1(%arg0: i32) -> (i32, i32, i32) {
    %c0_i32 = arith.constant 0 : i32
    %c0_i32_0 = arith.constant 0 : i32
    %c0_i32_1 = arith.constant 0 : i32
    return %arg0, %c0_i32, %c0_i32_0 : i32, i32, i32
  }
  func.func @transform_2(%arg0: i32) -> (i32, i32) {
    %c0_i32 = arith.constant 0 : i32
    %c0_i32_0 = arith.constant 0 : i32
    %c0_i32_1 = arith.constant 0 : i32
    return %c0_i32, %c0_i32_0 : i32, i32
  }
  func.func @transform_3(%arg0: i32) -> (i32, i32) {
    %c0_i32 = arith.constant 0 : i32
    %c0_i32_0 = arith.constant 0 : i32
    %c0_i32_1 = arith.constant 0 : i32
    return %c0_i32, %c0_i32_0 : i32, i32
  }
  func.func @transform_4(%arg0: i32) -> (i32, i32, i32) {
    %c0_i32 = arith.constant 0 : i32
    %c0_i32_0 = arith.constant 0 : i32
    %c0_i32_1 = arith.constant 0 : i32
    %c0_i32_2 = arith.constant 0 : i32
    return %c0_i32, %c0_i32_0, %c0_i32_1 : i32, i32, i32
  }
  func.func @transform_5(%arg0: i32) -> (i32, i32, i32) {
    %c0_i32 = arith.constant 0 : i32
    %c0_i32_0 = arith.constant 0 : i32
    %c0_i32_1 = arith.constant 0 : i32
    %c0_i32_2 = arith.constant 0 : i32
    return %c0_i32, %c0_i32_0, %c0_i32_1 : i32, i32, i32
  }
  func.func @transform_6(%arg0: i32) -> (i32, i32, i32) {
    %c0_i32 = arith.constant 0 : i32
    %c0_i32_0 = arith.constant 0 : i32
    %c0_i32_1 = arith.constant 0 : i32
    %c0_i32_2 = arith.constant 0 : i32
    return %c0_i32, %c0_i32_0, %c0_i32_1 : i32, i32, i32
  }
  func.func @transform_7(%arg0: i32) -> (i32, i32, i32) {
    %c0_i32 = arith.constant 0 : i32
    %c0_i32_0 = arith.constant 0 : i32
    %c0_i32_1 = arith.constant 0 : i32
    %c0_i32_2 = arith.constant 0 : i32
    return %c0_i32, %c0_i32_0, %c0_i32_1 : i32, i32, i32
  }
  func.func @transform_8(%arg0: i32) -> (i32, i32, i32) {
    %c0_i32 = arith.constant 0 : i32
    %c0_i32_0 = arith.constant 0 : i32
    %c0_i32_1 = arith.constant 0 : i32
    %c0_i32_2 = arith.constant 0 : i32
    return %c0_i32, %c0_i32_0, %c0_i32_1 : i32, i32, i32
  }
  func.func @transform_9(%arg0: i32) -> (i32, i32, i32) {
    %c0_i32 = arith.constant 0 : i32
    %c0_i32_0 = arith.constant 0 : i32
    %c0_i32_1 = arith.constant 0 : i32
    %c0_i32_2 = arith.constant 0 : i32
    return %c0_i32, %c0_i32_0, %c0_i32_1 : i32, i32, i32
  }
  func.func @transform_10(%arg0: i32) -> (i32, i32, i32) {
    %c0_i32 = arith.constant 0 : i32
    %c0_i32_0 = arith.constant 0 : i32
    %c0_i32_1 = arith.constant 0 : i32
    %c0_i32_2 = arith.constant 0 : i32
    return %c0_i32, %c0_i32_0, %c0_i32_1 : i32, i32, i32
  }
  func.func @transform_11(%arg0: i32) -> (i32, i32, i32) {
    %c0_i32 = arith.constant 0 : i32
    %c0_i32_0 = arith.constant 0 : i32
    %c0_i32_1 = arith.constant 0 : i32
    %c0_i32_2 = arith.constant 0 : i32
    return %c0_i32, %c0_i32_0, %c0_i32_1 : i32, i32, i32
  }
  func.func @transform_12(%arg0: i32) -> (i32, i32, i32) {
    %c0_i32 = arith.constant 0 : i32
    %c0_i32_0 = arith.constant 0 : i32
    %c0_i32_1 = arith.constant 0 : i32
    %c0_i32_2 = arith.constant 0 : i32
    return %c0_i32, %c0_i32_0, %c0_i32_1 : i32, i32, i32
  }
  func.func @transform_13(%arg0: i32) -> (i32, i32, i32) {
    %c0_i32 = arith.constant 0 : i32
    %c0_i32_0 = arith.constant 0 : i32
    %c0_i32_1 = arith.constant 0 : i32
    %c0_i32_2 = arith.constant 0 : i32
    return %c0_i32, %c0_i32_0, %c0_i32_1 : i32, i32, i32
  }
  func.func @transform_14(%arg0: i32) -> (i32, i32, i32) {
    %c0_i32 = arith.constant 0 : i32
    %c0_i32_0 = arith.constant 0 : i32
    %c0_i32_1 = arith.constant 0 : i32
    %c0_i32_2 = arith.constant 0 : i32
    return %c0_i32, %c0_i32_0, %c0_i32_1 : i32, i32, i32
  }
  func.func @transform_15(%arg0: i32) -> (i32, i32, i32) {
    %c0_i32 = arith.constant 0 : i32
    %c0_i32_0 = arith.constant 0 : i32
    %c0_i32_1 = arith.constant 0 : i32
    %c0_i32_2 = arith.constant 0 : i32
    return %c0_i32, %c0_i32_0, %c0_i32_1 : i32, i32, i32
  }
  func.func @transform_16(%arg0: i32) -> (i32, i32) {
    %c0_i32 = arith.constant 0 : i32
    %c0_i32_0 = arith.constant 0 : i32
    %c0_i32_1 = arith.constant 0 : i32
    return %c0_i32, %c0_i32_0 : i32, i32
  }
  func.func @transform_17(%arg0: i32) -> (i32, i32) {
    %c0_i32 = arith.constant 0 : i32
    %c0_i32_0 = arith.constant 0 : i32
    %c0_i32_1 = arith.constant 0 : i32
    return %c0_i32, %c0_i32_0 : i32, i32
  }
  func.func @transform_18(%arg0: i32) -> (i32, i32) {
    %c0_i32 = arith.constant 0 : i32
    %c0_i32_0 = arith.constant 0 : i32
    %c0_i32_1 = arith.constant 0 : i32
    return %c0_i32, %c0_i32_0 : i32, i32
  }
  func.func @transform_19(%arg0: i32) -> (i32, i32) {
    %c0_i32 = arith.constant 0 : i32
    %c0_i32_0 = arith.constant 0 : i32
    %c0_i32_1 = arith.constant 0 : i32
    return %c0_i32, %c0_i32_0 : i32, i32
  }
  func.func @transform_20(%arg0: i32) -> (i32, i32, i32) {
    %c0_i32 = arith.constant 0 : i32
    %c0_i32_0 = arith.constant 0 : i32
    %c0_i32_1 = arith.constant 0 : i32
    return %arg0, %c0_i32, %c0_i32_0 : i32, i32, i32
  }
}

</mosaic_0001>

<llo_original>
// kernel: tpu_custom_call.1
$region0: #{tpu_custom_call.1}
  #allocation0 [shape = 'u32[]', space=smem, size = 0x4, offset = 0x4, fixed_abs, tag = 'smem constant byte address 0x4 - core index']
  #allocation1 [shape = 'u32[144,128]{1,0:T(1,128)}', space=vmem, size = 0x12000, scoped, tag = 'internal scratch']
  %s0 = inlined_call_operand.hbm [shape: f32[2,8,128], index: 0, kind: input, shape index: {}]
  %s1 = inlined_call_operand.vmem [shape: f32[2,1,8], index: 1, kind: input, shape index: {}]
  %s2 = inlined_call_operand.hbm [shape: f32[1,128], index: 2, kind: input, shape index: {}]
  %s3 = inlined_call_operand.hbm [shape: f32[1,128], index: 3, kind: input, shape index: {}]
  %s4 = inlined_call_operand.hbm [shape: bf16[2,128,384], index: 4, kind: input, shape index: {}]
  %s5 = inlined_call_operand.hbm [shape: f32[2,1,384], index: 5, kind: input, shape index: {}]
  %s6 = inlined_call_operand.hbm [shape: bf16[2,128,128], index: 6, kind: input, shape index: {}]
  %s7 = inlined_call_operand.vmem [shape: f32[2,1,128], index: 7, kind: input, shape index: {}]
  %s8 = inlined_call_operand.hbm [shape: f32[2,1,128], index: 8, kind: input, shape index: {}]
  %s9 = inlined_call_operand.hbm [shape: f32[2,1,128], index: 9, kind: input, shape index: {}]
  %s10 = inlined_call_operand.hbm [shape: bf16[2,128,512], index: 10, kind: input, shape index: {}]
  %s11 = inlined_call_operand.hbm [shape: f32[2,1,512], index: 11, kind: input, shape index: {}]
  %s12 = inlined_call_operand.hbm [shape: bf16[2,512,128], index: 12, kind: input, shape index: {}]
  %s13 = inlined_call_operand.hbm [shape: f32[2,1,128], index: 13, kind: input, shape index: {}]
  %s14 = inlined_call_operand.hbm [shape: f32[2,1,128], index: 14, kind: input, shape index: {}]
  %s15 = inlined_call_operand.hbm [shape: f32[2,1,128], index: 15, kind: input, shape index: {}]
  %s16 = inlined_call_operand.hbm [shape: bf16[128,128], index: 16, kind: input, shape index: {}]
  %s17 = inlined_call_operand.hbm [shape: f32[1,128], index: 17, kind: input, shape index: {}]
  %s18 = inlined_call_operand.vmem [shape: bf16[128,128], index: 18, kind: input, shape index: {}]
  %s19 = inlined_call_operand.vmem [shape: f32[1,128], index: 19, kind: input, shape index: {}]
  %s20 = inlined_call_operand.hbm [shape: f32[2,1,128], index: 20, kind: output, shape index: {}]
  %s21 = sld [smem:[#allocation0]]
  $region177: #{tpu_custom_call.1} parent=0
    _
  %s23 = ssub.s32 1, %s21
  %s24 = scalar_select 0, %s23, %s21
  $region1: #{tpu_custom_call.1} parent=0
    #allocation2 [shape = 'u8[8192]{0}', space=vmem, size = 0x2000, scoped, tag = 'input window, operand 0']
    #allocation3 [shape = 's32[2]{0}', space=sflag, size = 0x8, scoped, tag = 'scoped memory for tpu_custom_call.1']
    #allocation4 [shape = 's32[2]{0}', space=sflag, size = 0x8, scoped, tag = 'scoped memory for tpu_custom_call.1']
    #allocation5 [shape = 'u8[512]{0}', space=vmem, size = 0x400, scoped, tag = 'input window, operand 2, single buffered']
    #allocation6 [shape = 's32[1]{0}', space=sflag, size = 0x4, scoped, tag = 'scoped memory for tpu_custom_call.1']
    #allocation7 [shape = 'u8[512]{0}', space=vmem, size = 0x400, scoped, tag = 'input window, operand 3, single buffered']
    #allocation8 [shape = 'u8[196608]{0}', space=vmem, size = 0x30000, scoped, tag = 'input window, operand 4, single buffered']
    #allocation9 [shape = 's32[1]{0}', space=sflag, size = 0x4, scoped, tag = 'scoped memory for tpu_custom_call.1']
    #allocation10 [shape = 'u8[3072]{0}', space=vmem, size = 0xc00, scoped, tag = 'input window, operand 5, single buffered']
    #allocation11 [shape = 'u8[65536]{0}', space=vmem, size = 0x10000, scoped, tag = 'input window, operand 6, single buffered']
    #allocation12 [shape = 's32[1]{0}', space=sflag, size = 0x4, scoped, tag = 'scoped memory for tpu_custom_call.1']
    #allocation13 [shape = 'u8[1024]{0}', space=vmem, size = 0x400, scoped, tag = 'input window, operand 8, single buffered']
    #allocation14 [shape = 'u8[1024]{0}', space=vmem, size = 0x400, scoped, tag = 'input window, operand 9, single buffered']
    #allocation15 [shape = 's32[1]{0}', space=sflag, size = 0x4, scoped, tag = 'scoped memory for tpu_custom_call.1']
    #allocation16 [shape = 'u8[262144]{0}', space=vmem, size = 0x40000, scoped, tag = 'input window, operand 10, single buffered']
    #allocation17 [shape = 'u8[4096]{0}', space=vmem, size = 0x1000, scoped, tag = 'input window, operand 11, single buffered']
    #allocation18 [shape = 's32[1]{0}', space=sflag, size = 0x4, scoped, tag = 'scoped memory for tpu_custom_call.1']
    #allocation19 [shape = 'u8[262144]{0}', space=vmem, size = 0x40000, scoped, tag = 'input window, operand 12, single buffered']
    #allocation20 [shape = 'u8[1024]{0}', space=vmem, size = 0x400, scoped, tag = 'input window, operand 13, single buffered']
    #allocation21 [shape = 's32[1]{0}', space=sflag, size = 0x4, scoped, tag = 'scoped memory for tpu_custom_call.1']
    #allocation22 [shape = 'u8[1024]{0}', space=vmem, size = 0x400, scoped, tag = 'input window, operand 14, single buffered']
    #allocation23 [shape = 'u8[1024]{0}', space=vmem, size = 0x400, scoped, tag = 'input window, operand 15, single buffered']
    #allocation24 [shape = 's32[1]{0}', space=sflag, size = 0x4, scoped, tag = 'scoped memory for tpu_custom_call.1']
    #allocation25 [shape = 'u8[32768]{0}', space=vmem, size = 0x8000, scoped, tag = 'input window, operand 16, single buffered']
    #allocation26 [shape = 'u8[512]{0}', space=vmem, size = 0x400, scoped, tag = 'input window, operand 17, single buffered']
    #allocation27 [shape = 's32[1]{0}', space=sflag, size = 0x4, scoped, tag = 'scoped memory for tpu_custom_call.1']
    #allocation28 [shape = 'u8[1024]{0}', space=vmem, size = 0x400, scoped, tag = 'output window, operand 0']
    %25 = vsyncpa [#allocation3], 0
    %s26 = scalar_lea.sflag [#allocation3], 1
    %27 = vsyncpa %s26, 0
    %28 = vsyncpa [#allocation6], 0
    %29 = vsyncpa [#allocation9], 0
    %30 = vsyncpa [#allocation12], 0
    %31 = vsyncpa [#allocation15], 0
    %32 = vsyncpa [#allocation18], 0
    %33 = vsyncpa [#allocation21], 0
    %34 = vsyncpa [#allocation24], 0
    %35 = vsyncpa [#allocation27], 0
    %36 = vsyncpa [#allocation4], 0
    %s37 = scalar_lea.sflag [#allocation4], 1
    %38 = vsyncpa %s37, 0
    loop: start=0, step=1, limit=4
    $region2: #{tpu_custom_call.1} parent=1 // loop_pre_header
      _
    $region3: #{tpu_custom_call.1} parent=1 // loop_header
      %s40 = sphi 0, %s44
      %p41 = scmp.ge.s32.totalorder %s40, 4
      %s50 = sphi 0, %s52
      %s53 = sphi 0, %s50
      %s54 = sphi 0, %s53
      %s70 = sphi 0, %s54
      %s76 = sphi 0, %s78
      %s79 = sphi 0, %s76
      %s80 = sphi 0, %s79
      %s96 = sphi 0, %s80
      %s100 = sphi 0, %s100
      %s102 = sphi 0, %s100
      %s103 = sphi 0, %s102
      %s117 = sphi 0, %s103
      %s121 = sphi 0, %s121
      %s123 = sphi 0, %s121
      %s124 = sphi 0, %s123
      %s138 = sphi 0, %s124
      %s142 = sphi 0, %s142
      %s144 = sphi 0, %s142
      %s145 = sphi 0, %s144
      %s159 = sphi 0, %s145
      %s163 = sphi 0, %s163
      %s165 = sphi 0, %s163
      %s166 = sphi 0, %s165
      %s180 = sphi 0, %s166
      %s184 = sphi 0, %s184
      %s186 = sphi 0, %s184
      %s187 = sphi 0, %s186
      %s201 = sphi 0, %s187
      %s205 = sphi 0, %s205
      %s207 = sphi 0, %s205
      %s208 = sphi 0, %s207
      %s222 = sphi 0, %s208
      %s226 = sphi 0, %s226
      %s228 = sphi 0, %s226
      %s229 = sphi 0, %s228
      %s243 = sphi 0, %s229
      %s247 = sphi 0, %s247
      %s249 = sphi 0, %s247
      %s250 = sphi 0, %s249
      %s264 = sphi 0, %s250
      %s268 = sphi 0, %s268
      %s270 = sphi 0, %s268
      %s271 = sphi 0, %s270
      %s285 = sphi 0, %s271
      %s289 = sphi 0, %s289
      %s291 = sphi 0, %s289
      %s292 = sphi 0, %s291
      %s306 = sphi 0, %s292
      %s310 = sphi 0, %s310
      %s312 = sphi 0, %s310
      %s313 = sphi 0, %s312
      %s327 = sphi 0, %s313
      %s331 = sphi 0, %s331
      %s333 = sphi 0, %s331
      %s334 = sphi 0, %s333
      %s348 = sphi 0, %s334
      %s352 = sphi 0, %s352
      %s354 = sphi 0, %s352
      %s355 = sphi 0, %s354
      %s369 = sphi 0, %s355
      %s373 = sphi 0, %s373
      %s375 = sphi 0, %s373
      %s376 = sphi 0, %s375
      %s390 = sphi 0, %s376
      %s394 = sphi 0, %s394
      %s396 = sphi 0, %s394
      %s397 = sphi 0, %s396
      %s411 = sphi 0, %s397
      %s415 = sphi 0, %s415
      %s417 = sphi 0, %s415
      %s418 = sphi 0, %s417
      %s432 = sphi 0, %s418
      %s436 = sphi 0, %s436
      %s438 = sphi 0, %s436
      %s439 = sphi 0, %s438
      %s453 = sphi 0, %s439
      %s457 = sphi 0, %s457
      %s459 = sphi 0, %s457
      %s460 = sphi 0, %s459
      %s474 = sphi 0, %s460
      %s480 = sphi 0, %s482
      %s483 = sphi 0, %s480
      %s484 = sphi 0, %s483
      %s500 = sphi 0, %s484
    $region4: #{tpu_custom_call.1} parent=1 // loop_header_branch
      %43 = sbr.rel (%p41) target = $region8
    $region5: #{tpu_custom_call.1} parent=1 // loop_body
      %s45 = ssub.s32 %s40, 1
      %s46 = ssub.s32 %s40, 2
      %s47 = sadd.s32 %s40, 1
      %s48 = ssub.s32 %s40, %s47
      %p49 = scmp.eq.s32.totalorder %s48, 0
      %s51 = sadd.s32 %s50, 1
      %s52 = scalar_select %p49, %s50, %s51
      %p55 = pneg %p49
      %p56 = scmp.eq.s32.totalorder %s40, 1
      %p57 = por %p55, %p56
      %p58 = scmp.ne.s32.totalorder %s50, %s53
      %p59 = scmp.eq.s32.totalorder %s40, 0
      %p60 = por %p58, %p59
      %p61 = scmp.ne.s32.totalorder %s50, %s53
      %p62 = scmp.eq.s32.totalorder %s45, 1
      %p63 = por %p61, %p62
      %p64 = scmp.ne.s32.totalorder %s53, %s54
      %p65 = scmp.eq.s32.totalorder %s45, 0
      %p66 = por %p64, %p65
      %p67 = scmp.ne.s32.totalorder %s53, %s54
      %p68 = scmp.eq.s32.totalorder %s46, 1
      %p69 = por %p67, %p68
      %p71 = scmp.ne.s32.totalorder %s54, %s70
      %p72 = scmp.eq.s32.totalorder %s46, 0
      %p73 = por %p71, %p72
      %s74 = ssub.s32 %s40, %s47
      %p75 = scmp.eq.s32.totalorder %s74, 0
      %s77 = sadd.s32 %s76, 1
      %s78 = scalar_select %p75, %s76, %s77
      %p81 = pneg %p75
      %p82 = scmp.eq.s32.totalorder %s40, 1
      %p83 = por %p81, %p82
      %p84 = scmp.ne.s32.totalorder %s76, %s79
      %p85 = scmp.eq.s32.totalorder %s40, 0
      %p86 = por %p84, %p85
      %p87 = scmp.ne.s32.totalorder %s76, %s79
      %p88 = scmp.eq.s32.totalorder %s45, 1
      %p89 = por %p87, %p88
      %p90 = scmp.ne.s32.totalorder %s79, %s80
      %p91 = scmp.eq.s32.totalorder %s45, 0
      %p92 = por %p90, %p91
      %p93 = scmp.ne.s32.totalorder %s79, %s80
      %p94 = scmp.eq.s32.totalorder %s46, 1
      %p95 = por %p93, %p94
      %p97 = scmp.ne.s32.totalorder %s80, %s96
      %p98 = scmp.eq.s32.totalorder %s46, 0
      %p99 = por %p97, %p98
      %s101 = sadd.s32 %s100, 1
      %p104 = scmp.eq.s32.totalorder %s40, 1
      %p105 = scmp.ne.s32.totalorder %s100, %s102
      %p106 = scmp.eq.s32.totalorder %s40, 0
      %p107 = por %p105, %p106
      %p108 = scmp.ne.s32.totalorder %s100, %s102
      %p109 = scmp.eq.s32.totalorder %s45, 1
      %p110 = por %p108, %p109
      %p111 = scmp.ne.s32.totalorder %s102, %s103
      %p112 = scmp.eq.s32.totalorder %s45, 0
      %p113 = por %p111, %p112
      %p114 = scmp.ne.s32.totalorder %s102, %s103
      %p115 = scmp.eq.s32.totalorder %s46, 1
      %p116 = por %p114, %p115
      %p118 = scmp.ne.s32.totalorder %s103, %s117
      %p119 = scmp.eq.s32.totalorder %s46, 0
      %p120 = por %p118, %p119
      %s122 = sadd.s32 %s121, 1
      %p125 = scmp.eq.s32.totalorder %s40, 1
      %p126 = scmp.ne.s32.totalorder %s121, %s123
      %p127 = scmp.eq.s32.totalorder %s40, 0
      %p128 = por %p126, %p127
      %p129 = scmp.ne.s32.totalorder %s121, %s123
      %p130 = scmp.eq.s32.totalorder %s45, 1
      %p131 = por %p129, %p130
      %p132 = scmp.ne.s32.totalorder %s123, %s124
      %p133 = scmp.eq.s32.totalorder %s45, 0
      %p134 = por %p132, %p133
      %p135 = scmp.ne.s32.totalorder %s123, %s124
      %p136 = scmp.eq.s32.totalorder %s46, 1
      %p137 = por %p135, %p136
      %p139 = scmp.ne.s32.totalorder %s124, %s138
      %p140 = scmp.eq.s32.totalorder %s46, 0
      %p141 = por %p139, %p140
      %s143 = sadd.s32 %s142, 1
      %p146 = scmp.eq.s32.totalorder %s40, 1
      %p147 = scmp.ne.s32.totalorder %s142, %s144
      %p148 = scmp.eq.s32.totalorder %s40, 0
      %p149 = por %p147, %p148
      %p150 = scmp.ne.s32.totalorder %s142, %s144
      %p151 = scmp.eq.s32.totalorder %s45, 1
      %p152 = por %p150, %p151
      %p153 = scmp.ne.s32.totalorder %s144, %s145
      %p154 = scmp.eq.s32.totalorder %s45, 0
      %p155 = por %p153, %p154
      %p156 = scmp.ne.s32.totalorder %s144, %s145
      %p157 = scmp.eq.s32.totalorder %s46, 1
      %p158 = por %p156, %p157
      %p160 = scmp.ne.s32.totalorder %s145, %s159
      %p161 = scmp.eq.s32.totalorder %s46, 0
      %p162 = por %p160, %p161
      %s164 = sadd.s32 %s163, 1
      %p167 = scmp.eq.s32.totalorder %s40, 1
      %p168 = scmp.ne.s32.totalorder %s163, %s165
      %p169 = scmp.eq.s32.totalorder %s40, 0
      %p170 = por %p168, %p169
      %p171 = scmp.ne.s32.totalorder %s163, %s165
      %p172 = scmp.eq.s32.totalorder %s45, 1
      %p173 = por %p171, %p172
      %p174 = scmp.ne.s32.totalorder %s165, %s166
      %p175 = scmp.eq.s32.totalorder %s45, 0
      %p176 = por %p174, %p175
      %p177 = scmp.ne.s32.totalorder %s165, %s166
      %p178 = scmp.eq.s32.totalorder %s46, 1
      %p179 = por %p177, %p178
      %p181 = scmp.ne.s32.totalorder %s166, %s180
      %p182 = scmp.eq.s32.totalorder %s46, 0
      %p183 = por %p181, %p182
      %s185 = sadd.s32 %s184, 1
      %p188 = scmp.eq.s32.totalorder %s40, 1
      %p189 = scmp.ne.s32.totalorder %s184, %s186
      %p190 = scmp.eq.s32.totalorder %s40, 0
      %p191 = por %p189, %p190
      %p192 = scmp.ne.s32.totalorder %s184, %s186
      %p193 = scmp.eq.s32.totalorder %s45, 1
      %p194 = por %p192, %p193
      %p195 = scmp.ne.s32.totalorder %s186, %s187
      %p196 = scmp.eq.s32.totalorder %s45, 0
      %p197 = por %p195, %p196
      %p198 = scmp.ne.s32.totalorder %s186, %s187
      %p199 = scmp.eq.s32.totalorder %s46, 1
      %p200 = por %p198, %p199
      %p202 = scmp.ne.s32.totalorder %s187, %s201
      %p203 = scmp.eq.s32.totalorder %s46, 0
      %p204 = por %p202, %p203
      %s206 = sadd.s32 %s205, 1
      %p209 = scmp.eq.s32.totalorder %s40, 1
      %p210 = scmp.ne.s32.totalorder %s205, %s207
      %p211 = scmp.eq.s32.totalorder %s40, 0
      %p212 = por %p210, %p211
      %p213 = scmp.ne.s32.totalorder %s205, %s207
      %p214 = scmp.eq.s32.totalorder %s45, 1
      %p215 = por %p213, %p214
      %p216 = scmp.ne.s32.totalorder %s207, %s208
      %p217 = scmp.eq.s32.totalorder %s45, 0
      %p218 = por %p216, %p217
      %p219 = scmp.ne.s32.totalorder %s207, %s208
      %p220 = scmp.eq.s32.totalorder %s46, 1
      %p221 = por %p219, %p220
      %p223 = scmp.ne.s32.totalorder %s208, %s222
      %p224 = scmp.eq.s32.totalorder %s46, 0
      %p225 = por %p223, %p224
      %s227 = sadd.s32 %s226, 1
      %p230 = scmp.eq.s32.totalorder %s40, 1
      %p231 = scmp.ne.s32.totalorder %s226, %s228
      %p232 = scmp.eq.s32.totalorder %s40, 0
      %p233 = por %p231, %p232
      %p234 = scmp.ne.s32.totalorder %s226, %s228
      %p235 = scmp.eq.s32.totalorder %s45, 1
      %p236 = por %p234, %p235
      %p237 = scmp.ne.s32.totalorder %s228, %s229
      %p238 = scmp.eq.s32.totalorder %s45, 0
      %p239 = por %p237, %p238
      %p240 = scmp.ne.s32.totalorder %s228, %s229
      %p241 = scmp.eq.s32.totalorder %s46, 1
      %p242 = por %p240, %p241
      %p244 = scmp.ne.s32.totalorder %s229, %s243
      %p245 = scmp.eq.s32.totalorder %s46, 0
      %p246 = por %p244, %p245
      %s248 = sadd.s32 %s247, 1
      %p251 = scmp.eq.s32.totalorder %s40, 1
      %p252 = scmp.ne.s32.totalorder %s247, %s249
      %p253 = scmp.eq.s32.totalorder %s40, 0
      %p254 = por %p252, %p253
      %p255 = scmp.ne.s32.totalorder %s247, %s249
      %p256 = scmp.eq.s32.totalorder %s45, 1
      %p257 = por %p255, %p256
      %p258 = scmp.ne.s32.totalorder %s249, %s250
      %p259 = scmp.eq.s32.totalorder %s45, 0
      %p260 = por %p258, %p259
      %p261 = scmp.ne.s32.totalorder %s249, %s250
      %p262 = scmp.eq.s32.totalorder %s46, 1
      %p263 = por %p261, %p262
      %p265 = scmp.ne.s32.totalorder %s250, %s264
      %p266 = scmp.eq.s32.totalorder %s46, 0
      %p267 = por %p265, %p266
      %s269 = sadd.s32 %s268, 1
      %p272 = scmp.eq.s32.totalorder %s40, 1
      %p273 = scmp.ne.s32.totalorder %s268, %s270
      %p274 = scmp.eq.s32.totalorder %s40, 0
      %p275 = por %p273, %p274
      %p276 = scmp.ne.s32.totalorder %s268, %s270
      %p277 = scmp.eq.s32.totalorder %s45, 1
      %p278 = por %p276, %p277
      %p279 = scmp.ne.s32.totalorder %s270, %s271
      %p280 = scmp.eq.s32.totalorder %s45, 0
      %p281 = por %p279, %p280
      %p282 = scmp.ne.s32.totalorder %s270, %s271
      %p283 = scmp.eq.s32.totalorder %s46, 1
      %p284 = por %p282, %p283
      %p286 = scmp.ne.s32.totalorder %s271, %s285
      %p287 = scmp.eq.s32.totalorder %s46, 0
      %p288 = por %p286, %p287
      %s290 = sadd.s32 %s289, 1
      %p293 = scmp.eq.s32.totalorder %s40, 1
      %p294 = scmp.ne.s32.totalorder %s289, %s291
      %p295 = scmp.eq.s32.totalorder %s40, 0
      %p296 = por %p294, %p295
      %p297 = scmp.ne.s32.totalorder %s289, %s291
      %p298 = scmp.eq.s32.totalorder %s45, 1
      %p299 = por %p297, %p298
      %p300 = scmp.ne.s32.totalorder %s291, %s292
      %p301 = scmp.eq.s32.totalorder %s45, 0
      %p302 = por %p300, %p301
      %p303 = scmp.ne.s32.totalorder %s291, %s292
      %p304 = scmp.eq.s32.totalorder %s46, 1
      %p305 = por %p303, %p304
      %p307 = scmp.ne.s32.totalorder %s292, %s306
      %p308 = scmp.eq.s32.totalorder %s46, 0
      %p309 = por %p307, %p308
      %s311 = sadd.s32 %s310, 1
      %p314 = scmp.eq.s32.totalorder %s40, 1
      %p315 = scmp.ne.s32.totalorder %s310, %s312
      %p316 = scmp.eq.s32.totalorder %s40, 0
      %p317 = por %p315, %p316
      %p318 = scmp.ne.s32.totalorder %s310, %s312
      %p319 = scmp.eq.s32.totalorder %s45, 1
      %p320 = por %p318, %p319
      %p321 = scmp.ne.s32.totalorder %s312, %s313
      %p322 = scmp.eq.s32.totalorder %s45, 0
      %p323 = por %p321, %p322
      %p324 = scmp.ne.s32.totalorder %s312, %s313
      %p325 = scmp.eq.s32.totalorder %s46, 1
      %p326 = por %p324, %p325
      %p328 = scmp.ne.s32.totalorder %s313, %s327
      %p329 = scmp.eq.s32.totalorder %s46, 0
      %p330 = por %p328, %p329
      %s332 = sadd.s32 %s331, 1
      %p335 = scmp.eq.s32.totalorder %s40, 1
      %p336 = scmp.ne.s32.totalorder %s331, %s333
      %p337 = scmp.eq.s32.totalorder %s40, 0
      %p338 = por %p336, %p337
      %p339 = scmp.ne.s32.totalorder %s331, %s333
      %p340 = scmp.eq.s32.totalorder %s45, 1
      %p341 = por %p339, %p340
      %p342 = scmp.ne.s32.totalorder %s333, %s334
      %p343 = scmp.eq.s32.totalorder %s45, 0
      %p344 = por %p342, %p343
      %p345 = scmp.ne.s32.totalorder %s333, %s334
      %p346 = scmp.eq.s32.totalorder %s46, 1
      %p347 = por %p345, %p346
      %p349 = scmp.ne.s32.totalorder %s334, %s348
      %p350 = scmp.eq.s32.totalorder %s46, 0
      %p351 = por %p349, %p350
      %s353 = sadd.s32 %s352, 1
      %p356 = scmp.eq.s32.totalorder %s40, 1
      %p357 = scmp.ne.s32.totalorder %s352, %s354
      %p358 = scmp.eq.s32.totalorder %s40, 0
      %p359 = por %p357, %p358
      %p360 = scmp.ne.s32.totalorder %s352, %s354
      %p361 = scmp.eq.s32.totalorder %s45, 1
      %p362 = por %p360, %p361
      %p363 = scmp.ne.s32.totalorder %s354, %s355
      %p364 = scmp.eq.s32.totalorder %s45, 0
      %p365 = por %p363, %p364
      %p366 = scmp.ne.s32.totalorder %s354, %s355
      %p367 = scmp.eq.s32.totalorder %s46, 1
      %p368 = por %p366, %p367
      %p370 = scmp.ne.s32.totalorder %s355, %s369
      %p371 = scmp.eq.s32.totalorder %s46, 0
      %p372 = por %p370, %p371
      %s374 = sadd.s32 %s373, 1
      %p377 = scmp.eq.s32.totalorder %s40, 1
      %p378 = scmp.ne.s32.totalorder %s373, %s375
      %p379 = scmp.eq.s32.totalorder %s40, 0
      %p380 = por %p378, %p379
      %p381 = scmp.ne.s32.totalorder %s373, %s375
      %p382 = scmp.eq.s32.totalorder %s45, 1
      %p383 = por %p381, %p382
      %p384 = scmp.ne.s32.totalorder %s375, %s376
      %p385 = scmp.eq.s32.totalorder %s45, 0
      %p386 = por %p384, %p385
      %p387 = scmp.ne.s32.totalorder %s375, %s376
      %p388 = scmp.eq.s32.totalorder %s46, 1
      %p389 = por %p387, %p388
      %p391 = scmp.ne.s32.totalorder %s376, %s390
      %p392 = scmp.eq.s32.totalorder %s46, 0
      %p393 = por %p391, %p392
      %s395 = sadd.s32 %s394, 1
      %p398 = scmp.eq.s32.totalorder %s40, 1
      %p399 = scmp.ne.s32.totalorder %s394, %s396
      %p400 = scmp.eq.s32.totalorder %s40, 0
      %p401 = por %p399, %p400
      %p402 = scmp.ne.s32.totalorder %s394, %s396
      %p403 = scmp.eq.s32.totalorder %s45, 1
      %p404 = por %p402, %p403
      %p405 = scmp.ne.s32.totalorder %s396, %s397
      %p406 = scmp.eq.s32.totalorder %s45, 0
      %p407 = por %p405, %p406
      %p408 = scmp.ne.s32.totalorder %s396, %s397
      %p409 = scmp.eq.s32.totalorder %s46, 1
      %p410 = por %p408, %p409
      %p412 = scmp.ne.s32.totalorder %s397, %s411
      %p413 = scmp.eq.s32.totalorder %s46, 0
      %p414 = por %p412, %p413
      %s416 = sadd.s32 %s415, 1
      %p419 = scmp.eq.s32.totalorder %s40, 1
      %p420 = scmp.ne.s32.totalorder %s415, %s417
      %p421 = scmp.eq.s32.totalorder %s40, 0
      %p422 = por %p420, %p421
      %p423 = scmp.ne.s32.totalorder %s415, %s417
      %p424 = scmp.eq.s32.totalorder %s45, 1
      %p425 = por %p423, %p424
      %p426 = scmp.ne.s32.totalorder %s417, %s418
      %p427 = scmp.eq.s32.totalorder %s45, 0
      %p428 = por %p426, %p427
      %p429 = scmp.ne.s32.totalorder %s417, %s418
      %p430 = scmp.eq.s32.totalorder %s46, 1
      %p431 = por %p429, %p430
      %p433 = scmp.ne.s32.totalorder %s418, %s432
      %p434 = scmp.eq.s32.totalorder %s46, 0
      %p435 = por %p433, %p434
      %s437 = sadd.s32 %s436, 1
      %p440 = scmp.eq.s32.totalorder %s40, 1
      %p441 = scmp.ne.s32.totalorder %s436, %s438
      %p442 = scmp.eq.s32.totalorder %s40, 0
      %p443 = por %p441, %p442
      %p444 = scmp.ne.s32.totalorder %s436, %s438
      %p445 = scmp.eq.s32.totalorder %s45, 1
      %p446 = por %p444, %p445
      %p447 = scmp.ne.s32.totalorder %s438, %s439
      %p448 = scmp.eq.s32.totalorder %s45, 0
      %p449 = por %p447, %p448
      %p450 = scmp.ne.s32.totalorder %s438, %s439
      %p451 = scmp.eq.s32.totalorder %s46, 1
      %p452 = por %p450, %p451
      %p454 = scmp.ne.s32.totalorder %s439, %s453
      %p455 = scmp.eq.s32.totalorder %s46, 0
      %p456 = por %p454, %p455
      %s458 = sadd.s32 %s457, 1
      %p461 = scmp.eq.s32.totalorder %s40, 1
      %p462 = scmp.ne.s32.totalorder %s457, %s459
      %p463 = scmp.eq.s32.totalorder %s40, 0
      %p464 = por %p462, %p463
      %p465 = scmp.ne.s32.totalorder %s457, %s459
      %p466 = scmp.eq.s32.totalorder %s45, 1
      %p467 = por %p465, %p466
      %p468 = scmp.ne.s32.totalorder %s459, %s460
      %p469 = scmp.eq.s32.totalorder %s45, 0
      %p470 = por %p468, %p469
      %p471 = scmp.ne.s32.totalorder %s459, %s460
      %p472 = scmp.eq.s32.totalorder %s46, 1
      %p473 = por %p471, %p472
      %p475 = scmp.ne.s32.totalorder %s460, %s474
      %p476 = scmp.eq.s32.totalorder %s46, 0
      %p477 = por %p475, %p476
      %s478 = ssub.s32 %s40, %s47
      %p479 = scmp.eq.s32.totalorder %s478, 0
      %s481 = sadd.s32 %s480, 1
      %s482 = scalar_select %p479, %s480, %s481
      %p485 = pneg %p479
      %p486 = scmp.eq.s32.totalorder %s40, 1
      %p487 = por %p485, %p486
      %p488 = scmp.ne.s32.totalorder %s480, %s483
      %p489 = scmp.eq.s32.totalorder %s40, 0
      %p490 = por %p488, %p489
      %p491 = scmp.ne.s32.totalorder %s480, %s483
      %p492 = scmp.eq.s32.totalorder %s45, 1
      %p493 = por %p491, %p492
      %p494 = scmp.ne.s32.totalorder %s483, %s484
      %p495 = scmp.eq.s32.totalorder %s45, 0
      %p496 = por %p494, %p495
      %p497 = scmp.ne.s32.totalorder %s483, %s484
      %p498 = scmp.eq.s32.totalorder %s46, 1
      %p499 = por %p497, %p498
      %p501 = scmp.ne.s32.totalorder %s484, %s500
      %p502 = scmp.eq.s32.totalorder %s46, 0
      %p503 = por %p501, %p502
      %p504 = scmp.le.s32.totalorder 1, %s40
      %p505 = scmp.lt.s32.totalorder %s40, 3
      %p506 = pnand %p504, %p505
      %p507 = pneg %p506
      // Predicated region
      $region9: #{tpu_custom_call.1} parent=5 // pred_check
        _
      $region10: #{tpu_custom_call.1} parent=5 // pred_check_branch
        %509 = sbr.rel (%p506) target = $region12
      $region11: #{tpu_custom_call.1} parent=5 // pred_region
        %s510 = ssub.s32 %s40, 1
        // Predicated region
        $region13: #{tpu_custom_call.1} parent=11 // pred_check
          %p511 = pneg %p113
        $region14: #{tpu_custom_call.1} parent=11 // pred_check_branch
          %513 = sbr.rel (%p511) target = $region16
        $region15: #{tpu_custom_call.1} parent=11 // pred_region
          %s515 = ssub.s32 16, 16
          %516 = vsyncadd [#allocation6], %s515
          %s518 = sshll.u32 [#allocation5], 4
          %s519 = int_to_ptr.vmem [resolvable:$true] %s518
          %521 = dma.hbm_to_vmem [thread:$0]  %s2, 16, %s519, [#allocation6]
        $region16: #{tpu_custom_call.1} parent=11 // pred_fallthru
          _
        // Predicated region
        $region17: #{tpu_custom_call.1} parent=11 // pred_check
          %p522 = pneg %p134
        $region18: #{tpu_custom_call.1} parent=11 // pred_check_branch
          %524 = sbr.rel (%p522) target = $region20
        $region19: #{tpu_custom_call.1} parent=11 // pred_region
          %s526 = ssub.s32 16, 16
          %527 = vsyncadd [#allocation6], %s526
          %s529 = sshll.u32 [#allocation7], 4
          %s530 = int_to_ptr.vmem [resolvable:$true] %s529
          %532 = dma.hbm_to_vmem [thread:$0]  %s3, 16, %s530, [#allocation6]
        $region20: #{tpu_custom_call.1} parent=11 // pred_fallthru
          _
        // Predicated region
        $region21: #{tpu_custom_call.1} parent=11 // pred_check
          %p533 = pneg %p155
        $region22: #{tpu_custom_call.1} parent=11 // pred_check_branch
          %535 = sbr.rel (%p533) target = $region24
        $region23: #{tpu_custom_call.1} parent=11 // pred_region
          %s537 = ssub.s32 6144, 6144
          %538 = vsyncadd [#allocation9], %s537
          %s539 = sshll.u32 [#allocation8], 4
          %s540 = int_to_ptr.vmem [resolvable:$true] %s539
          %545 = dma.hbm_to_vmem [thread:$0]  %s4, 6144, %s540, [#allocation9], 192, 192, 12
        $region24: #{tpu_custom_call.1} parent=11 // pred_fallthru
          _
        // Predicated region
        $region25: #{tpu_custom_call.1} parent=11 // pred_check
          %p546 = pneg %p176
        $region26: #{tpu_custom_call.1} parent=11 // pred_check_branch
          %548 = sbr.rel (%p546) target = $region28
        $region27: #{tpu_custom_call.1} parent=11 // pred_region
          %s550 = ssub.s32 96, 96
          %551 = vsyncadd [#allocation9], %s550
          %s552 = sshll.u32 [#allocation10], 4
          %s553 = int_to_ptr.vmem [resolvable:$true] %s552
          %558 = dma.hbm_to_vmem [thread:$0]  %s5, 96, %s553, [#allocation9], 48, 48, 3
        $region28: #{tpu_custom_call.1} parent=11 // pred_fallthru
          _
        // Predicated region
        $region29: #{tpu_custom_call.1} parent=11 // pred_check
          %p559 = pneg %p197
        $region30: #{tpu_custom_call.1} parent=11 // pred_check_branch
          %561 = sbr.rel (%p559) target = $region32
        $region31: #{tpu_custom_call.1} parent=11 // pred_region
          %s563 = ssub.s32 2048, 2048
          %564 = vsyncadd [#allocation12], %s563
          %s565 = sshll.u32 [#allocation11], 4
          %s566 = int_to_ptr.vmem [resolvable:$true] %s565
          %571 = dma.hbm_to_vmem [thread:$0]  %s6, 2048, %s566, [#allocation12], 64, 64, 4
        $region32: #{tpu_custom_call.1} parent=11 // pred_fallthru
          _
        // Predicated region
        $region33: #{tpu_custom_call.1} parent=11 // pred_check
          %p572 = pneg %p218
        $region34: #{tpu_custom_call.1} parent=11 // pred_check_branch
          %574 = sbr.rel (%p572) target = $region36
        $region35: #{tpu_custom_call.1} parent=11 // pred_region
          _
        $region36: #{tpu_custom_call.1} parent=11 // pred_fallthru
          _
        // Predicated region
        $region37: #{tpu_custom_call.1} parent=11 // pred_check
          %p575 = pneg %p239
        $region38: #{tpu_custom_call.1} parent=11 // pred_check_branch
          %577 = sbr.rel (%p575) target = $region40
        $region39: #{tpu_custom_call.1} parent=11 // pred_region
          %s579 = ssub.s32 32, 32
          %580 = vsyncadd [#allocation12], %s579
          %s581 = sshll.u32 [#allocation13], 4
          %s582 = int_to_ptr.vmem [resolvable:$true] %s581
          %587 = dma.hbm_to_vmem [thread:$0]  %s8, 32, %s582, [#allocation12], 16, 16, 1
        $region40: #{tpu_custom_call.1} parent=11 // pred_fallthru
          _
        // Predicated region
        $region41: #{tpu_custom_call.1} parent=11 // pred_check
          %p588 = pneg %p260
        $region42: #{tpu_custom_call.1} parent=11 // pred_check_branch
          %590 = sbr.rel (%p588) target = $region44
        $region43: #{tpu_custom_call.1} parent=11 // pred_region
          %s592 = ssub.s32 32, 32
          %593 = vsyncadd [#allocation15], %s592
          %s594 = sshll.u32 [#allocation14], 4
          %s595 = int_to_ptr.vmem [resolvable:$true] %s594
          %600 = dma.hbm_to_vmem [thread:$0]  %s9, 32, %s595, [#allocation15], 16, 16, 1
        $region44: #{tpu_custom_call.1} parent=11 // pred_fallthru
          _
        // Predicated region
        $region45: #{tpu_custom_call.1} parent=11 // pred_check
          %p601 = pneg %p281
        $region46: #{tpu_custom_call.1} parent=11 // pred_check_branch
          %603 = sbr.rel (%p601) target = $region48
        $region47: #{tpu_custom_call.1} parent=11 // pred_region
          %s605 = ssub.s32 8192, 8192
          %606 = vsyncadd [#allocation15], %s605
          %s607 = sshll.u32 [#allocation16], 4
          %s608 = int_to_ptr.vmem [resolvable:$true] %s607
          %613 = dma.hbm_to_vmem [thread:$0]  %s10, 8192, %s608, [#allocation15], 256, 256, 16
        $region48: #{tpu_custom_call.1} parent=11 // pred_fallthru
          _
        // Predicated region
        $region49: #{tpu_custom_call.1} parent=11 // pred_check
          %p614 = pneg %p302
        $region50: #{tpu_custom_call.1} parent=11 // pred_check_branch
          %616 = sbr.rel (%p614) target = $region52
        $region51: #{tpu_custom_call.1} parent=11 // pred_region
          %s618 = ssub.s32 128, 128
          %619 = vsyncadd [#allocation18], %s618
          %s620 = sshll.u32 [#allocation17], 4
          %s621 = int_to_ptr.vmem [resolvable:$true] %s620
          %626 = dma.hbm_to_vmem [thread:$0]  %s11, 128, %s621, [#allocation18], 64, 64, 4
        $region52: #{tpu_custom_call.1} parent=11 // pred_fallthru
          _
        // Predicated region
        $region53: #{tpu_custom_call.1} parent=11 // pred_check
          %p627 = pneg %p323
        $region54: #{tpu_custom_call.1} parent=11 // pred_check_branch
          %629 = sbr.rel (%p627) target = $region56
        $region55: #{tpu_custom_call.1} parent=11 // pred_region
          %s631 = ssub.s32 8192, 8192
          %632 = vsyncadd [#allocation18], %s631
          %s633 = sshll.u32 [#allocation19], 4
          %s634 = int_to_ptr.vmem [resolvable:$true] %s633
          %639 = dma.hbm_to_vmem [thread:$0]  %s12, 8192, %s634, [#allocation18], 64, 64, 4
        $region56: #{tpu_custom_call.1} parent=11 // pred_fallthru
          _
        // Predicated region
        $region57: #{tpu_custom_call.1} parent=11 // pred_check
          %p640 = pneg %p344
        $region58: #{tpu_custom_call.1} parent=11 // pred_check_branch
          %642 = sbr.rel (%p640) target = $region60
        $region59: #{tpu_custom_call.1} parent=11 // pred_region
          %s644 = ssub.s32 32, 32
          %645 = vsyncadd [#allocation21], %s644
          %s646 = sshll.u32 [#allocation20], 4
          %s647 = int_to_ptr.vmem [resolvable:$true] %s646
          %652 = dma.hbm_to_vmem [thread:$0]  %s13, 32, %s647, [#allocation21], 16, 16, 1
        $region60: #{tpu_custom_call.1} parent=11 // pred_fallthru
          _
        // Predicated region
        $region61: #{tpu_custom_call.1} parent=11 // pred_check
          %p653 = pneg %p365
        $region62: #{tpu_custom_call.1} parent=11 // pred_check_branch
          %655 = sbr.rel (%p653) target = $region64
        $region63: #{tpu_custom_call.1} parent=11 // pred_region
          %s657 = ssub.s32 32, 32
          %658 = vsyncadd [#allocation21], %s657
          %s659 = sshll.u32 [#allocation22], 4
          %s660 = int_to_ptr.vmem [resolvable:$true] %s659
          %665 = dma.hbm_to_vmem [thread:$0]  %s14, 32, %s660, [#allocation21], 16, 16, 1
        $region64: #{tpu_custom_call.1} parent=11 // pred_fallthru
          _
        // Predicated region
        $region65: #{tpu_custom_call.1} parent=11 // pred_check
          %p666 = pneg %p386
        $region66: #{tpu_custom_call.1} parent=11 // pred_check_branch
          %668 = sbr.rel (%p666) target = $region68
        $region67: #{tpu_custom_call.1} parent=11 // pred_region
          %s670 = ssub.s32 32, 32
          %671 = vsyncadd [#allocation24], %s670
          %s672 = sshll.u32 [#allocation23], 4
          %s673 = int_to_ptr.vmem [resolvable:$true] %s672
          %678 = dma.hbm_to_vmem [thread:$0]  %s15, 32, %s673, [#allocation24], 16, 16, 1
        $region68: #{tpu_custom_call.1} parent=11 // pred_fallthru
          _
        // Predicated region
        $region69: #{tpu_custom_call.1} parent=11 // pred_check
          %p679 = pneg %p407
        $region70: #{tpu_custom_call.1} parent=11 // pred_check_branch
          %681 = sbr.rel (%p679) target = $region72
        $region71: #{tpu_custom_call.1} parent=11 // pred_region
          %s683 = ssub.s32 1024, 1024
          %684 = vsyncadd [#allocation24], %s683
          %s685 = sshll.u32 [#allocation25], 4
          %s686 = int_to_ptr.vmem [resolvable:$true] %s685
          %691 = dma.hbm_to_vmem [thread:$0]  %s16, 1024, %s686, [#allocation24], 64, 64, 4
        $region72: #{tpu_custom_call.1} parent=11 // pred_fallthru
          _
        // Predicated region
        $region73: #{tpu_custom_call.1} parent=11 // pred_check
          %p692 = pneg %p428
        $region74: #{tpu_custom_call.1} parent=11 // pred_check_branch
          %694 = sbr.rel (%p692) target = $region76
        $region75: #{tpu_custom_call.1} parent=11 // pred_region
          %s696 = ssub.s32 16, 16
          %697 = vsyncadd [#allocation27], %s696
          %s699 = sshll.u32 [#allocation26], 4
          %s700 = int_to_ptr.vmem [resolvable:$true] %s699
          %702 = dma.hbm_to_vmem [thread:$0]  %s17, 16, %s700, [#allocation27]
        $region76: #{tpu_custom_call.1} parent=11 // pred_fallthru
          _
        // Predicated region
        $region77: #{tpu_custom_call.1} parent=11 // pred_check
          %p703 = pneg %p449
        $region78: #{tpu_custom_call.1} parent=11 // pred_check_branch
          %705 = sbr.rel (%p703) target = $region80
        $region79: #{tpu_custom_call.1} parent=11 // pred_region
          _
        $region80: #{tpu_custom_call.1} parent=11 // pred_fallthru
          _
        // Predicated region
        $region81: #{tpu_custom_call.1} parent=11 // pred_check
          %p706 = pneg %p470
        $region82: #{tpu_custom_call.1} parent=11 // pred_check_branch
          %708 = sbr.rel (%p706) target = $region84
        $region83: #{tpu_custom_call.1} parent=11 // pred_region
          _
        $region84: #{tpu_custom_call.1} parent=11 // pred_fallthru
          _
      $region12: #{tpu_custom_call.1} parent=5 // pred_fallthru
        _
      %p709 = scmp.lt.s32.totalorder %s40, 2
      // Predicated region
      $region85: #{tpu_custom_call.1} parent=5 // pred_check
        %p710 = pneg %p709
      $region86: #{tpu_custom_call.1} parent=5 // pred_check_branch
        %712 = sbr.rel (%p710) target = $region88
      $region87: #{tpu_custom_call.1} parent=5 // pred_region
        // Predicated region
        $region89: #{tpu_custom_call.1} parent=87 // pred_check
          %p713 = pneg %p60
        $region90: #{tpu_custom_call.1} parent=87 // pred_check_branch
          %715 = sbr.rel (%p713) target = $region92
        $region91: #{tpu_custom_call.1} parent=87 // pred_region
          %s716 = sand.u32 %s50, 1
          %s717 = scalar_lea.sflag [#allocation3], %s716
          %s718 = sand.u32 %s50, 1
          %s719 = smul.addr %s718, 8
          %s720 = scalar_lea.vmem [#allocation2], %s719
          %s722 = ssub.s32 128, 128
          %723 = vsyncadd %s717, %s722
          %s724 = smul.addr %s40, 128
          %s725 = scalar_lea.hbm %s0, %s724
          %s727 = sshll.u32 %s720, 4
          %s728 = int_to_ptr.vmem [resolvable:$true] %s727
          %730 = dma.hbm_to_vmem [thread:$0]  %s725, 128, %s728, %s717
        $region92: #{tpu_custom_call.1} parent=87 // pred_fallthru
          _
        // Predicated region
        $region93: #{tpu_custom_call.1} parent=87 // pred_check
          %p731 = pneg %p86
        $region94: #{tpu_custom_call.1} parent=87 // pred_check_branch
          %733 = sbr.rel (%p731) target = $region96
        $region95: #{tpu_custom_call.1} parent=87 // pred_region
          %p734 = scmp.lt.s32.totalorder %s40, 1
          %s735 = scalar_select %p734, %s40, 1
          %s736 = scalar_lea.vmem %s1, %s735
        $region96: #{tpu_custom_call.1} parent=87 // pred_fallthru
          _
      $region88: #{tpu_custom_call.1} parent=5 // pred_fallthru
        _
      %p737 = scmp.le.s32.totalorder 1, %s40
      %p738 = scmp.lt.s32.totalorder %s40, 3
      %p739 = pnand %p737, %p738
      %p740 = pneg %p739
      // Predicated region
      $region97: #{tpu_custom_call.1} parent=5 // pred_check
        _
      $region98: #{tpu_custom_call.1} parent=5 // pred_check_branch
        %742 = sbr.rel (%p739) target = $region100
      $region99: #{tpu_custom_call.1} parent=5 // pred_region
        %s743 = ssub.s32 %s40, 1
        %s744 = sand.u32 %s53, 1
        %s745 = scalar_lea.sflag [#allocation3], %s744
        %s746 = sand.u32 %s53, 1
        %s747 = smul.addr %s746, 8
        %s748 = scalar_lea.vmem [#allocation2], %s747
        // Predicated region
        $region101: #{tpu_custom_call.1} parent=99 // pred_check
          %p749 = pneg %p66
        $region102: #{tpu_custom_call.1} parent=99 // pred_check_branch
          %751 = sbr.rel (%p749) target = $region104
        $region103: #{tpu_custom_call.1} parent=99 // pred_region
          %752 = dma.done %s745, 128
        $region104: #{tpu_custom_call.1} parent=99 // pred_fallthru
          _
        // Predicated region
        $region105: #{tpu_custom_call.1} parent=99 // pred_check
          %p753 = pneg %p113
        $region106: #{tpu_custom_call.1} parent=99 // pred_check_branch
          %755 = sbr.rel (%p753) target = $region108
        $region107: #{tpu_custom_call.1} parent=99 // pred_region
          %756 = dma.done [#allocation6], 16
        $region108: #{tpu_custom_call.1} parent=99 // pred_fallthru
          _
        // Predicated region
        $region109: #{tpu_custom_call.1} parent=99 // pred_check
          %p757 = pneg %p134
        $region110: #{tpu_custom_call.1} parent=99 // pred_check_branch
          %759 = sbr.rel (%p757) target = $region112
        $region111: #{tpu_custom_call.1} parent=99 // pred_region
          %760 = dma.done [#allocation6], 16
        $region112: #{tpu_custom_call.1} parent=99 // pred_fallthru
          _
        // Predicated region
        $region113: #{tpu_custom_call.1} parent=99 // pred_check
          %p761 = pneg %p155
        $region114: #{tpu_custom_call.1} parent=99 // pred_check_branch
          %763 = sbr.rel (%p761) target = $region116
        $region115: #{tpu_custom_call.1} parent=99 // pred_region
          %764 = dma.done [#allocation9], 6144
        $region116: #{tpu_custom_call.1} parent=99 // pred_fallthru
          _
        // Predicated region
        $region117: #{tpu_custom_call.1} parent=99 // pred_check
          %p765 = pneg %p176
        $region118: #{tpu_custom_call.1} parent=99 // pred_check_branch
          %767 = sbr.rel (%p765) target = $region120
        $region119: #{tpu_custom_call.1} parent=99 // pred_region
          %768 = dma.done [#allocation9], 96
        $region120: #{tpu_custom_call.1} parent=99 // pred_fallthru
          _
        // Predicated region
        $region121: #{tpu_custom_call.1} parent=99 // pred_check
          %p769 = pneg %p197
        $region122: #{tpu_custom_call.1} parent=99 // pred_check_branch
          %771 = sbr.rel (%p769) target = $region124
        $region123: #{tpu_custom_call.1} parent=99 // pred_region
          %772 = dma.done [#allocation12], 2048
        $region124: #{tpu_custom_call.1} parent=99 // pred_fallthru
          _
        // Predicated region
        $region125: #{tpu_custom_call.1} parent=99 // pred_check
          %p773 = pneg %p239
        $region126: #{tpu_custom_call.1} parent=99 // pred_check_branch
          %775 = sbr.rel (%p773) target = $region128
        $region127: #{tpu_custom_call.1} parent=99 // pred_region
          %776 = dma.done [#allocation12], 32
        $region128: #{tpu_custom_call.1} parent=99 // pred_fallthru
          _
        // Predicated region
        $region129: #{tpu_custom_call.1} parent=99 // pred_check
          %p777 = pneg %p260
        $region130: #{tpu_custom_call.1} parent=99 // pred_check_branch
          %779 = sbr.rel (%p777) target = $region132
        $region131: #{tpu_custom_call.1} parent=99 // pred_region
          %780 = dma.done [#allocation15], 32
        $region132: #{tpu_custom_call.1} parent=99 // pred_fallthru
          _
        // Predicated region
        $region133: #{tpu_custom_call.1} parent=99 // pred_check
          %p781 = pneg %p281
        $region134: #{tpu_custom_call.1} parent=99 // pred_check_branch
          %783 = sbr.rel (%p781) target = $region136
        $region135: #{tpu_custom_call.1} parent=99 // pred_region
          %784 = dma.done [#allocation15], 8192
        $region136: #{tpu_custom_call.1} parent=99 // pred_fallthru
          _
        // Predicated region
        $region137: #{tpu_custom_call.1} parent=99 // pred_check
          %p785 = pneg %p302
        $region138: #{tpu_custom_call.1} parent=99 // pred_check_branch
          %787 = sbr.rel (%p785) target = $region140
        $region139: #{tpu_custom_call.1} parent=99 // pred_region
          %788 = dma.done [#allocation18], 128
        $region140: #{tpu_custom_call.1} parent=99 // pred_fallthru
          _
        // Predicated region
        $region141: #{tpu_custom_call.1} parent=99 // pred_check
          %p789 = pneg %p323
        $region142: #{tpu_custom_call.1} parent=99 // pred_check_branch
          %791 = sbr.rel (%p789) target = $region144
        $region143: #{tpu_custom_call.1} parent=99 // pred_region
          %792 = dma.done [#allocation18], 8192
        $region144: #{tpu_custom_call.1} parent=99 // pred_fallthru
          _
        // Predicated region
        $region145: #{tpu_custom_call.1} parent=99 // pred_check
          %p793 = pneg %p344
        $region146: #{tpu_custom_call.1} parent=99 // pred_check_branch
          %795 = sbr.rel (%p793) target = $region148
        $region147: #{tpu_custom_call.1} parent=99 // pred_region
          %796 = dma.done [#allocation21], 32
        $region148: #{tpu_custom_call.1} parent=99 // pred_fallthru
          _
        // Predicated region
        $region149: #{tpu_custom_call.1} parent=99 // pred_check
          %p797 = pneg %p365
        $region150: #{tpu_custom_call.1} parent=99 // pred_check_branch
          %799 = sbr.rel (%p797) target = $region152
        $region151: #{tpu_custom_call.1} parent=99 // pred_region
          %800 = dma.done [#allocation21], 32
        $region152: #{tpu_custom_call.1} parent=99 // pred_fallthru
          _
        // Predicated region
        $region153: #{tpu_custom_call.1} parent=99 // pred_check
          %p801 = pneg %p386
        $region154: #{tpu_custom_call.1} parent=99 // pred_check_branch
          %803 = sbr.rel (%p801) target = $region156
        $region155: #{tpu_custom_call.1} parent=99 // pred_region
          %804 = dma.done [#allocation24], 32
        $region156: #{tpu_custom_call.1} parent=99 // pred_fallthru
          _
        // Predicated region
        $region157: #{tpu_custom_call.1} parent=99 // pred_check
          %p805 = pneg %p407
        $region158: #{tpu_custom_call.1} parent=99 // pred_check_branch
          %807 = sbr.rel (%p805) target = $region160
        $region159: #{tpu_custom_call.1} parent=99 // pred_region
          %808 = dma.done [#allocation24], 1024
        $region160: #{tpu_custom_call.1} parent=99 // pred_fallthru
          _
        // Predicated region
        $region161: #{tpu_custom_call.1} parent=99 // pred_check
          %p809 = pneg %p428
        $region162: #{tpu_custom_call.1} parent=99 // pred_check_branch
          %811 = sbr.rel (%p809) target = $region164
        $region163: #{tpu_custom_call.1} parent=99 // pred_region
          %812 = dma.done [#allocation27], 16
        $region164: #{tpu_custom_call.1} parent=99 // pred_fallthru
          _
        %s813 = sand.u32 %s53, 1
        %s814 = scalar_lea.sflag [#allocation3], %s813
        %s815 = sand.u32 %s53, 1
        %s816 = smul.addr %s815, 8
        %s817 = scalar_lea.vmem [#allocation2], %s816
        %p818 = pneg %p66
        %p819 = pneg %p63
        %p820 = scmp.lt.s32.totalorder %s45, 1
        %s821 = scalar_select %p820, %s45, 1
        %s822 = scalar_lea.vmem %s1, %s821
        %p823 = pneg %p92
        %p824 = pneg %p89
        %p825 = pneg %p113
        %p826 = pneg %p110
        %p827 = pneg %p134
        %p828 = pneg %p131
        %p829 = pneg %p155
        %p830 = pneg %p152
        %p831 = pneg %p176
        %p832 = pneg %p173
        %p833 = pneg %p197
        %p834 = pneg %p194
        %p835 = pneg %p218
        %p836 = pneg %p215
        %p837 = pneg %p239
        %p838 = pneg %p236
        %p839 = pneg %p260
        %p840 = pneg %p257
        %p841 = pneg %p281
        %p842 = pneg %p278
        %p843 = pneg %p302
        %p844 = pneg %p299
        %p845 = pneg %p323
        %p846 = pneg %p320
        %p847 = pneg %p344
        %p848 = pneg %p341
        %p849 = pneg %p365
        %p850 = pneg %p362
        %p851 = pneg %p386
        %p852 = pneg %p383
        %p853 = pneg %p407
        %p854 = pneg %p404
        %p855 = pneg %p428
        %p856 = pneg %p425
        %p857 = pneg %p449
        %p858 = pneg %p446
        %p859 = pneg %p470
        %p860 = pneg %p467
        %p861 = pneg %p496
        %p862 = pneg %p493
        %s863 = sand.u32 %s483, 1
        %s864 = scalar_lea.sflag [#allocation4], %s863
        %s865 = sand.u32 %s483, 1
        %s866 = scalar_lea.vmem [#allocation28], %s865
        %p867 = scmp.lt.s32.totalorder %s45, 1
        %s868 = scalar_select %p867, %s45, 1
        %s869 = scalar_lea.vmem %s1, %s868
        %v871 = vld [vmem:[%s748] sm:$0xff]
        %v872 = vld [vmem:[#allocation5] sm:$0x1]
        %v873 = vld [vmem:[#allocation7] sm:$0x1]
        %874 = vadd.xlane.f32.xlu0 %v871
        %v875 = vpop.xlane.xlu0 %874
        %v876 = vrcp.pop 128.0
        %v877 = vmul.f32 %v875, %v876
        %v878 = vsub.f32 %v871, %v877
        %v879 = vmul.f32 %v878, %v878
        %880 = vadd.xlane.f32.xlu0 %v879
        %v881 = vpop.xlane.xlu0 %880
        %v882 = vmul.f32 %v881, %v876
        %v883 = vadd.f32 %v882, 1e-12
        %v884 = vrsqrt.pop %v883
        %v885 = vmul.f32 %v878, %v884
        %v887 = vlaneseq
        %v888 = vshrl.u32 %v887, 7
        %v889 = vsub.s32 0, %v888
        %v890 = vrot.slane %v872, %v889
        %v892 = vmul.f32 %v885, %v890
        %v894 = vlaneseq
        %v895 = vshrl.u32 %v894, 7
        %v896 = vsub.s32 0, %v895
        %v897 = vrot.slane %v873, %v896
        %v899 = vadd.f32 %v892, %v897
        %v900 = vld [vmem:[%s869] sm:$0x1]
        %v901 = vpack.c.bf16 %v899, %v899
        %v902 = vld [vmem:[#allocation8] sm:$0xff]
        %v903 = vld [vmem:[#allocation8 + $0x8] sm:$0xf]
        %v904 = vld [vmem:[#allocation8 + $0xc] sm:$0xff]
        %v905 = vld [vmem:[#allocation8 + $0x14] sm:$0xf]
        %v906 = vld [vmem:[#allocation8 + $0x18] sm:$0xff]
        %v907 = vld [vmem:[#allocation8 + $0x20] sm:$0xf]
        %v908 = vld [vmem:[#allocation8 + $0x24] sm:$0xff]
        %v909 = vld [vmem:[#allocation8 + $0x2c] sm:$0xf]
        %v910 = vld [vmem:[#allocation8 + $0x30] sm:$0xff]
        %v911 = vld [vmem:[#allocation8 + $0x38] sm:$0xf]
        %v912 = vld [vmem:[#allocation8 + $0x3c] sm:$0xff]
        %v913 = vld [vmem:[#allocation8 + $0x44] sm:$0xf]
        %v914 = vld [vmem:[#allocation8 + $0x48] sm:$0xff]
        %v915 = vld [vmem:[#allocation8 + $0x50] sm:$0xf]
        %v916 = vld [vmem:[#allocation8 + $0x54] sm:$0xff]
        %v917 = vld [vmem:[#allocation8 + $0x5c] sm:$0xf]
        %v918 = vld [vmem:[#allocation8 + $0x60] sm:$0xff]
        %v919 = vld [vmem:[#allocation8 + $0x68] sm:$0xf]
        %v920 = vld [vmem:[#allocation8 + $0x6c] sm:$0xff]
        %v921 = vld [vmem:[#allocation8 + $0x74] sm:$0xf]
        %v922 = vld [vmem:[#allocation8 + $0x78] sm:$0xff]
        %v923 = vld [vmem:[#allocation8 + $0x80] sm:$0xf]
        %v924 = vld [vmem:[#allocation8 + $0x84] sm:$0xff]
        %v925 = vld [vmem:[#allocation8 + $0x8c] sm:$0xf]
        %v926 = vld [vmem:[#allocation8 + $0x90] sm:$0xff]
        %v927 = vld [vmem:[#allocation8 + $0x98] sm:$0xf]
        %v928 = vld [vmem:[#allocation8 + $0x9c] sm:$0xff]
        %v929 = vld [vmem:[#allocation8 + $0xa4] sm:$0xf]
        %v930 = vld [vmem:[#allocation8 + $0xa8] sm:$0xff]
        %v931 = vld [vmem:[#allocation8 + $0xb0] sm:$0xf]
        %v932 = vld [vmem:[#allocation8 + $0xb4] sm:$0xff]
        %v933 = vld [vmem:[#allocation8 + $0xbc] sm:$0xf]
        %v934 = vld [vmem:[#allocation10] sm:$0x7]
        %v936 = vlaneseq
        %v937 = vshrl.u32 %v936, 7
        %v938 = vsub.s32 0, %v937
        %v939 = vrot.slane %v934, %v938
        %v940 = vlaneseq
        %v941 = vshrl.u32 %v940, 7
        %v942 = vsub.s32 1, %v941
        %v943 = vrot.slane %v934, %v942
        %v944 = vlaneseq
        %v945 = vshrl.u32 %v944, 7
        %v946 = vsub.s32 2, %v945
        %v947 = vrot.slane %v934, %v946
        %v983 = vunpack.c.l.b16 %v902
        %v984 = vunpack.c.h.b16 %v902
        %v985 = vunpack.c.l.b16 %v903
        %v986 = vunpack.c.l.b16 %v904
        %v987 = vunpack.c.h.b16 %v904
        %v988 = vunpack.c.l.b16 %v905
        %v989 = vunpack.c.l.b16 %v906
        %v990 = vunpack.c.h.b16 %v906
        %v991 = vunpack.c.l.b16 %v907
        %v992 = vunpack.c.l.b16 %v908
        %v993 = vunpack.c.h.b16 %v908
        %v994 = vunpack.c.l.b16 %v909
        %v995 = vunpack.c.l.b16 %v910
        %v996 = vunpack.c.h.b16 %v910
        %v997 = vunpack.c.l.b16 %v911
        %v998 = vunpack.c.l.b16 %v912
        %v999 = vunpack.c.h.b16 %v912
        %v1000 = vunpack.c.l.b16 %v913
        %v1001 = vunpack.c.l.b16 %v914
        %v1002 = vunpack.c.h.b16 %v914
        %v1003 = vunpack.c.l.b16 %v915
        %v1004 = vunpack.c.l.b16 %v916
        %v1005 = vunpack.c.h.b16 %v916
        %v1006 = vunpack.c.l.b16 %v917
        %v1007 = vunpack.c.l.b16 %v918
        %v1008 = vunpack.c.h.b16 %v918
        %v1009 = vunpack.c.l.b16 %v919
        %v1010 = vunpack.c.l.b16 %v920
        %v1011 = vunpack.c.h.b16 %v920
        %v1012 = vunpack.c.l.b16 %v921
        %v1013 = vunpack.c.l.b16 %v922
        %v1014 = vunpack.c.h.b16 %v922
        %v1015 = vunpack.c.l.b16 %v923
        %v1016 = vunpack.c.l.b16 %v924
        %v1017 = vunpack.c.h.b16 %v924
        %v1018 = vunpack.c.l.b16 %v925
        %v1019 = vunpack.c.l.b16 %v926
        %v1020 = vunpack.c.h.b16 %v926
        %v1021 = vunpack.c.l.b16 %v927
        %v1022 = vunpack.c.l.b16 %v928
        %v1023 = vunpack.c.h.b16 %v928
        %v1024 = vunpack.c.l.b16 %v929
        %v1025 = vunpack.c.l.b16 %v930
        %v1026 = vunpack.c.h.b16 %v930
        %v1027 = vunpack.c.l.b16 %v931
        %v1028 = vunpack.c.l.b16 %v932
        %v1029 = vunpack.c.h.b16 %v932
        %v1030 = vunpack.c.l.b16 %v933
        %v1031 = vpack.c.b16 %v986, %v983
        %v1032 = vpack.c.b16 %v987, %v984
        %v1033 = vpack.c.b16 %v988, %v985
        %v1034 = vpack.c.b16 %v992, %v989
        %v1035 = vpack.c.b16 %v993, %v990
        %v1036 = vpack.c.b16 %v994, %v991
        %v1037 = vpack.c.b16 %v998, %v995
        %v1038 = vpack.c.b16 %v999, %v996
        %v1039 = vpack.c.b16 %v1000, %v997
        %v1040 = vpack.c.b16 %v1004, %v1001
        %v1041 = vpack.c.b16 %v1005, %v1002
        %v1042 = vpack.c.b16 %v1006, %v1003
        %v1043 = vpack.c.b16 %v1010, %v1007
        %v1044 = vpack.c.b16 %v1011, %v1008
        %v1045 = vpack.c.b16 %v1012, %v1009
        %v1046 = vpack.c.b16 %v1016, %v1013
        %v1047 = vpack.c.b16 %v1017, %v1014
        %v1048 = vpack.c.b16 %v1018, %v1015
        %v1049 = vpack.c.b16 %v1022, %v1019
        %v1050 = vpack.c.b16 %v1023, %v1020
        %v1051 = vpack.c.b16 %v1024, %v1021
        %v1052 = vpack.c.b16 %v1028, %v1025
        %v1053 = vpack.c.b16 %v1029, %v1026
        %v1054 = vpack.c.b16 %v1030, %v1027
        %1079 = vmatprep.subr.bf16.mxu0 %v1032
        %1080 = vmatpush1.bf16.msra.mxu0 %v1031
        %1081 = vmatprep.subr.bf16.mxu0 %v1035
        %1082 = vmatpush1.bf16.msra.mxu0 %v1034
        %1083 = vmatprep.subr.bf16.mxu0 %v1038
        %1084 = vmatpush1.bf16.msra.mxu0 %v1037
        %1085 = vmatprep.subr.bf16.mxu0 %v1041
        %1086 = vmatpush1.bf16.msra.mxu0 %v1040
        %1087 = vmatprep.subr.bf16.mxu0 %v1044
        %1088 = vmatpush1.bf16.msra.mxu0 %v1043
        %1089 = vmatprep.subr.bf16.mxu0 %v1047
        %1090 = vmatpush1.bf16.msra.mxu0 %v1046
        %1091 = vmatprep.subr.bf16.mxu0 %v1050
        %1092 = vmatpush1.bf16.msra.mxu0 %v1049
        %1093 = vmatprep.subr.bf16.mxu0 %v1053
        %1094 = vmatpush1.bf16.msra.mxu0 %v1052
        %1095 = vmatprep.subr.bf16.mxu0 0
        %1096 = vmatpush1.bf16.msra.mxu0 0
        %1097 = vmatprep.subr.bf16.mxu0 0
        %1098 = vmatpush1.bf16.msra.mxu0 0
        %1099 = vmatprep.subr.bf16.mxu0 0
        %1100 = vmatpush1.bf16.msra.mxu0 0
        %1101 = vmatprep.subr.bf16.mxu0 0
        %1102 = vmatpush1.bf16.msra.mxu0 0
        %1103 = vmatprep.subr.bf16.mxu0 0
        %1104 = vmatpush1.bf16.msra.mxu0 0
        %1105 = vmatprep.subr.bf16.mxu0 0
        %1106 = vmatpush1.bf16.msra.mxu0 0
        %1107 = vmatprep.subr.bf16.mxu0 0
        %1108 = vmatpush1.bf16.msra.mxu0 0
        %1109 = vmatprep.subr.bf16.mxu0 0
        %1110 = vmatpush1.bf16.msra.mxu0 0
        %1111 = vmatprep.mubr.bf16.mxu0 0
        %1112 = vmatmul.mubr.bf16.gmra.mrb[0].mxu0 %v901
        %v1113 = vpop.f32.mrb[0].mxu0
        %v1114 = vadd.f32 %v939, %v1113
        %v1115 = vpop.f32.mrb[0].mxu0
        %v1116 = vadd.f32 %v943, %v1115
        %v1117 = vpop.f32.mrb[0].mxu0
        %v1118 = vpop.f32.mrb[0].mxu0
        %1119 = vdwg.mxu0
        %1120 = vmatprep.subr.bf16.mxu0 0
        %1121 = vmatpush1.bf16.msra.mxu0 %v1033
        %1122 = vmatprep.subr.bf16.mxu0 0
        %1123 = vmatpush1.bf16.msra.mxu0 %v1036
        %1124 = vmatprep.subr.bf16.mxu0 0
        %1125 = vmatpush1.bf16.msra.mxu0 %v1039
        %1126 = vmatprep.subr.bf16.mxu0 0
        %1127 = vmatpush1.bf16.msra.mxu0 %v1042
        %1128 = vmatprep.subr.bf16.mxu0 0
        %1129 = vmatpush1.bf16.msra.mxu0 %v1045
        %1130 = vmatprep.subr.bf16.mxu0 0
        %1131 = vmatpush1.bf16.msra.mxu0 %v1048
        %1132 = vmatprep.subr.bf16.mxu0 0
        %1133 = vmatpush1.bf16.msra.mxu0 %v1051
        %1134 = vmatprep.subr.bf16.mxu0 0
        %1135 = vmatpush1.bf16.msra.mxu0 %v1054
        %1136 = vmatprep.subr.bf16.mxu0 0
        %1137 = vmatpush1.bf16.msra.mxu0 0
        %1138 = vmatprep.subr.bf16.mxu0 0
        %1139 = vmatpush1.bf16.msra.mxu0 0
        %1140 = vmatprep.subr.bf16.mxu0 0
        %1141 = vmatpush1.bf16.msra.mxu0 0
        %1142 = vmatprep.subr.bf16.mxu0 0
        %1143 = vmatpush1.bf16.msra.mxu0 0
        %1144 = vmatprep.subr.bf16.mxu0 0
        %1145 = vmatpush1.bf16.msra.mxu0 0
        %1146 = vmatprep.subr.bf16.mxu0 0
        %1147 = vmatpush1.bf16.msra.mxu0 0
        %1148 = vmatprep.subr.bf16.mxu0 0
        %1149 = vmatpush1.bf16.msra.mxu0 0
        %1150 = vmatprep.subr.bf16.mxu0 0
        %1151 = vmatpush1.bf16.msra.mxu0 0
        %1152 = vmatprep.mubr.bf16.mxu0 0
        %1153 = vmatmul.mubr.bf16.gmra.mrb[0].mxu0 %v901
        %v1154 = vpop.f32.mrb[0].mxu0
        %v1155 = vadd.f32 %v947, %v1154
        %v1156 = vpop.f32.mrb[0].mxu0
        %v1157 = vpop.f32.mrb[0].mxu0
        %v1158 = vpop.f32.mrb[0].mxu0
        %1159 = vdwg.mxu0
        %v1160 = vpack.c.bf16 %v1114, %v1114
        %1162 = vrot.lane.b32.xlu0 %v1160, 96
        %v1163 = vpop.permute.xlu0 %1162
        %1164 = vrot.lane.b32.xlu0 %v1160, 64
        %v1165 = vpop.permute.xlu0 %1164
        %1166 = vrot.lane.b32.xlu0 %v1160, 32
        %v1167 = vpop.permute.xlu0 %1166
        %v1168 = vpack.c.bf16 %v1116, %v1116
        %1170 = vrot.lane.b32.xlu0 %v1168, 96
        %v1171 = vpop.permute.xlu0 %1170
        %1173 = vrot.lane.b32.xlu0 %v1168, 64
        %v1174 = vpop.permute.xlu0 %1173
        %1176 = vrot.lane.b32.xlu0 %v1168, 32
        %v1177 = vpop.permute.xlu0 %1176
        %v1179 = vpack.c.bf16 %v1155, %v1155
        %1181 = vrot.lane.b32.xlu0 %v1179, 96
        %v1182 = vpop.permute.xlu0 %1181
        %1184 = vrot.lane.b32.xlu0 %v1179, 64
        %v1185 = vpop.permute.xlu0 %1184
        %1187 = vrot.lane.b32.xlu0 %v1179, 32
        %v1188 = vpop.permute.xlu0 %1187
        %v1191 = vlaneseq
        %v1192 = vshrl.u32 %v1191, 7
        %v1193 = vsub.s32 0, %v1192
        %v1194 = vrot.slane %v900, %v1193
        %1196 = vxpose.xlu0.c.b16.start [1/8] %v1168, 128
        %1197 = vxpose.xlu0.c.b16.cont [2/8] 0, 128
        %1198 = vxpose.xlu0.c.b16.cont [3/8] 0, 128
        %1199 = vxpose.xlu0.c.b16.cont [4/8] 0, 128
        %1200 = vxpose.xlu0.c.b16.cont [5/8] 0, 128
        %1201 = vxpose.xlu0.c.b16.cont [6/8] 0, 128
        %1202 = vxpose.xlu0.c.b16.cont [7/8] 0, 128
        %1203 = vxpose.xlu0.c.b16.end [8/8] 0, 128
        %v1204 = vpop.trf.xlu0
        %v1205 = vpop.trf.xlu0
        %v1206 = vpop.trf.xlu0
        %v1207 = vpop.trf.xlu0
        %v1208 = vpop.trf.xlu0
        %v1209 = vpop.trf.xlu0
        %v1210 = vpop.trf.xlu0
        %v1211 = vpop.trf.xlu0
        %1212 = vxpose.xlu0.c.b16.start [1/8] %v1171, 128
        %1213 = vxpose.xlu0.c.b16.cont [2/8] 0, 128
        %1214 = vxpose.xlu0.c.b16.cont [3/8] 0, 128
        %1215 = vxpose.xlu0.c.b16.cont [4/8] 0, 128
        %1216 = vxpose.xlu0.c.b16.cont [5/8] 0, 128
        %1217 = vxpose.xlu0.c.b16.cont [6/8] 0, 128
        %1218 = vxpose.xlu0.c.b16.cont [7/8] 0, 128
        %1219 = vxpose.xlu0.c.b16.end [8/8] 0, 128
        %v1220 = vpop.trf.xlu0
        %v1221 = vpop.trf.xlu0
        %v1222 = vpop.trf.xlu0
        %v1223 = vpop.trf.xlu0
        %v1224 = vpop.trf.xlu0
        %v1225 = vpop.trf.xlu0
        %v1226 = vpop.trf.xlu0
        %v1227 = vpop.trf.xlu0
        %1228 = vxpose.xlu0.c.b16.start [1/8] %v1174, 128
        %1229 = vxpose.xlu0.c.b16.cont [2/8] 0, 128
        %1230 = vxpose.xlu0.c.b16.cont [3/8] 0, 128
        %1231 = vxpose.xlu0.c.b16.cont [4/8] 0, 128
        %1232 = vxpose.xlu0.c.b16.cont [5/8] 0, 128
        %1233 = vxpose.xlu0.c.b16.cont [6/8] 0, 128
        %1234 = vxpose.xlu0.c.b16.cont [7/8] 0, 128
        %1235 = vxpose.xlu0.c.b16.end [8/8] 0, 128
        %v1236 = vpop.trf.xlu0
        %v1237 = vpop.trf.xlu0
        %v1238 = vpop.trf.xlu0
        %v1239 = vpop.trf.xlu0
        %v1240 = vpop.trf.xlu0
        %v1241 = vpop.trf.xlu0
        %v1242 = vpop.trf.xlu0
        %v1243 = vpop.trf.xlu0
        %1244 = vxpose.xlu0.c.b16.start [1/8] %v1177, 128
        %1245 = vxpose.xlu0.c.b16.cont [2/8] 0, 128
        %1246 = vxpose.xlu0.c.b16.cont [3/8] 0, 128
        %1247 = vxpose.xlu0.c.b16.cont [4/8] 0, 128
        %1248 = vxpose.xlu0.c.b16.cont [5/8] 0, 128
        %1249 = vxpose.xlu0.c.b16.cont [6/8] 0, 128
        %1250 = vxpose.xlu0.c.b16.cont [7/8] 0, 128
        %1251 = vxpose.xlu0.c.b16.end [8/8] 0, 128
        %v1252 = vpop.trf.xlu0
        %v1253 = vpop.trf.xlu0
        %v1254 = vpop.trf.xlu0
        %v1255 = vpop.trf.xlu0
        %v1256 = vpop.trf.xlu0
        %v1257 = vpop.trf.xlu0
        %v1258 = vpop.trf.xlu0
        %v1259 = vpop.trf.xlu0
        %vm1260 = vcmask 261120
        %v1262 = vsel %vm1260, %v1160, 0
        %1264 = vmatprep.subr.bf16.mxu0 0
        %1265 = vmatpush1.bf16.msra.mxu0 %v1204
        %1266 = vmatprep.subr.bf16.mxu0 0
        %1267 = vmatpush1.bf16.msra.mxu0 %v1205
        %1268 = vmatprep.subr.bf16.mxu0 0
        %1269 = vmatpush1.bf16.msra.mxu0 0
        %1270 = vmatprep.subr.bf16.mxu0 0
        %1271 = vmatpush1.bf16.msra.mxu0 0
        %1272 = vmatprep.subr.bf16.mxu0 0
        %1273 = vmatpush1.bf16.msra.mxu0 0
        %1274 = vmatprep.subr.bf16.mxu0 0
        %1275 = vmatpush1.bf16.msra.mxu0 0
        %1276 = vmatprep.subr.bf16.mxu0 0
        %1277 = vmatpush1.bf16.msra.mxu0 0
        %1278 = vmatprep.subr.bf16.mxu0 0
        %1279 = vmatpush1.bf16.msra.mxu0 0
        %1280 = vmatprep.subr.bf16.mxu0 0
        %1281 = vmatpush1.bf16.msra.mxu0 0
        %1282 = vmatprep.subr.bf16.mxu0 0
        %1283 = vmatpush1.bf16.msra.mxu0 0
        %1284 = vmatprep.subr.bf16.mxu0 0
        %1285 = vmatpush1.bf16.msra.mxu0 0
        %1286 = vmatprep.subr.bf16.mxu0 0
        %1287 = vmatpush1.bf16.msra.mxu0 0
        %1288 = vmatprep.subr.bf16.mxu0 0
        %1289 = vmatpush1.bf16.msra.mxu0 0
        %1290 = vmatprep.subr.bf16.mxu0 0
        %1291 = vmatpush1.bf16.msra.mxu0 0
        %1292 = vmatprep.subr.bf16.mxu0 0
        %1293 = vmatpush1.bf16.msra.mxu0 0
        %1294 = vmatprep.subr.bf16.mxu0 0
        %1295 = vmatpush1.bf16.msra.mxu0 0
        %1296 = vmatprep.mubr.bf16.mxu0 0
        %1297 = vmatmul.mubr.bf16.gmra.mrb[0].mxu0 %v1262
        %v1298 = vpop.f32.mrb[0].mxu0
        %v1299 = vadd.f32 %v1194, %v1298
        %v1300 = vpop.f32.mrb[0].mxu0
        %v1301 = vpop.f32.mrb[0].mxu0
        %v1302 = vpop.f32.mrb[0].mxu0
        %1303 = vdwg.mxu0
        %v1305 = vsel %vm1260, %v1163, 0
        %1307 = vmatprep.subr.bf16.mxu0 0
        %1308 = vmatpush1.bf16.msra.mxu0 %v1220
        %1309 = vmatprep.subr.bf16.mxu0 0
        %1310 = vmatpush1.bf16.msra.mxu0 %v1221
        %1311 = vmatprep.subr.bf16.mxu0 0
        %1312 = vmatpush1.bf16.msra.mxu0 0
        %1313 = vmatprep.subr.bf16.mxu0 0
        %1314 = vmatpush1.bf16.msra.mxu0 0
        %1315 = vmatprep.subr.bf16.mxu0 0
        %1316 = vmatpush1.bf16.msra.mxu0 0
        %1317 = vmatprep.subr.bf16.mxu0 0
        %1318 = vmatpush1.bf16.msra.mxu0 0
        %1319 = vmatprep.subr.bf16.mxu0 0
        %1320 = vmatpush1.bf16.msra.mxu0 0
        %1321 = vmatprep.subr.bf16.mxu0 0
        %1322 = vmatpush1.bf16.msra.mxu0 0
        %1323 = vmatprep.subr.bf16.mxu0 0
        %1324 = vmatpush1.bf16.msra.mxu0 0
        %1325 = vmatprep.subr.bf16.mxu0 0
        %1326 = vmatpush1.bf16.msra.mxu0 0
        %1327 = vmatprep.subr.bf16.mxu0 0
        %1328 = vmatpush1.bf16.msra.mxu0 0
        %1329 = vmatprep.subr.bf16.mxu0 0
        %1330 = vmatpush1.bf16.msra.mxu0 0
        %1331 = vmatprep.subr.bf16.mxu0 0
        %1332 = vmatpush1.bf16.msra.mxu0 0
        %1333 = vmatprep.subr.bf16.mxu0 0
        %1334 = vmatpush1.bf16.msra.mxu0 0
        %1335 = vmatprep.subr.bf16.mxu0 0
        %1336 = vmatpush1.bf16.msra.mxu0 0
        %1337 = vmatprep.subr.bf16.mxu0 0
        %1338 = vmatpush1.bf16.msra.mxu0 0
        %1339 = vmatprep.mubr.bf16.mxu0 0
        %1340 = vmatmul.mubr.bf16.gmra.mrb[0].mxu0 %v1305
        %v1341 = vpop.f32.mrb[0].mxu0
        %v1342 = vadd.f32 %v1194, %v1341
        %v1343 = vpop.f32.mrb[0].mxu0
        %v1344 = vpop.f32.mrb[0].mxu0
        %v1345 = vpop.f32.mrb[0].mxu0
        %1346 = vdwg.mxu0
        %v1348 = vsel %vm1260, %v1165, 0
        %1350 = vmatprep.subr.bf16.mxu0 0
        %1351 = vmatpush1.bf16.msra.mxu0 %v1236
        %1352 = vmatprep.subr.bf16.mxu0 0
        %1353 = vmatpush1.bf16.msra.mxu0 %v1237
        %1354 = vmatprep.subr.bf16.mxu0 0
        %1355 = vmatpush1.bf16.msra.mxu0 0
        %1356 = vmatprep.subr.bf16.mxu0 0
        %1357 = vmatpush1.bf16.msra.mxu0 0
        %1358 = vmatprep.subr.bf16.mxu0 0
        %1359 = vmatpush1.bf16.msra.mxu0 0
        %1360 = vmatprep.subr.bf16.mxu0 0
        %1361 = vmatpush1.bf16.msra.mxu0 0
        %1362 = vmatprep.subr.bf16.mxu0 0
        %1363 = vmatpush1.bf16.msra.mxu0 0
        %1364 = vmatprep.subr.bf16.mxu0 0
        %1365 = vmatpush1.bf16.msra.mxu0 0
        %1366 = vmatprep.subr.bf16.mxu0 0
        %1367 = vmatpush1.bf16.msra.mxu0 0
        %1368 = vmatprep.subr.bf16.mxu0 0
        %1369 = vmatpush1.bf16.msra.mxu0 0
        %1370 = vmatprep.subr.bf16.mxu0 0
        %1371 = vmatpush1.bf16.msra.mxu0 0
        %1372 = vmatprep.subr.bf16.mxu0 0
        %1373 = vmatpush1.bf16.msra.mxu0 0
        %1374 = vmatprep.subr.bf16.mxu0 0
        %1375 = vmatpush1.bf16.msra.mxu0 0
        %1376 = vmatprep.subr.bf16.mxu0 0
        %1377 = vmatpush1.bf16.msra.mxu0 0
        %1378 = vmatprep.subr.bf16.mxu0 0
        %1379 = vmatpush1.bf16.msra.mxu0 0
        %1380 = vmatprep.subr.bf16.mxu0 0
        %1381 = vmatpush1.bf16.msra.mxu0 0
        %1382 = vmatprep.mubr.bf16.mxu0 0
        %1383 = vmatmul.mubr.bf16.gmra.mrb[0].mxu0 %v1348
        %v1384 = vpop.f32.mrb[0].mxu0
        %v1385 = vadd.f32 %v1194, %v1384
        %v1386 = vpop.f32.mrb[0].mxu0
        %v1387 = vpop.f32.mrb[0].mxu0
        %v1388 = vpop.f32.mrb[0].mxu0
        %1389 = vdwg.mxu0
        %v1391 = vsel %vm1260, %v1167, 0
        %1393 = vmatprep.subr.bf16.mxu0 0
        %1394 = vmatpush1.bf16.msra.mxu0 %v1252
        %1395 = vmatprep.subr.bf16.mxu0 0
        %1396 = vmatpush1.bf16.msra.mxu0 %v1253
        %1397 = vmatprep.subr.bf16.mxu0 0
        %1398 = vmatpush1.bf16.msra.mxu0 0
        %1399 = vmatprep.subr.bf16.mxu0 0
        %1400 = vmatpush1.bf16.msra.mxu0 0
        %1401 = vmatprep.subr.bf16.mxu0 0
        %1402 = vmatpush1.bf16.msra.mxu0 0
        %1403 = vmatprep.subr.bf16.mxu0 0
        %1404 = vmatpush1.bf16.msra.mxu0 0
        %1405 = vmatprep.subr.bf16.mxu0 0
        %1406 = vmatpush1.bf16.msra.mxu0 0
        %1407 = vmatprep.subr.bf16.mxu0 0
        %1408 = vmatpush1.bf16.msra.mxu0 0
        %1409 = vmatprep.subr.bf16.mxu0 0
        %1410 = vmatpush1.bf16.msra.mxu0 0
        %1411 = vmatprep.subr.bf16.mxu0 0
        %1412 = vmatpush1.bf16.msra.mxu0 0
        %1413 = vmatprep.subr.bf16.mxu0 0
        %1414 = vmatpush1.bf16.msra.mxu0 0
        %1415 = vmatprep.subr.bf16.mxu0 0
        %1416 = vmatpush1.bf16.msra.mxu0 0
        %1417 = vmatprep.subr.bf16.mxu0 0
        %1418 = vmatpush1.bf16.msra.mxu0 0
        %1419 = vmatprep.subr.bf16.mxu0 0
        %1420 = vmatpush1.bf16.msra.mxu0 0
        %1421 = vmatprep.subr.bf16.mxu0 0
        %1422 = vmatpush1.bf16.msra.mxu0 0
        %1423 = vmatprep.subr.bf16.mxu0 0
        %1424 = vmatpush1.bf16.msra.mxu0 0
        %1425 = vmatprep.mubr.bf16.mxu0 0
        %1426 = vmatmul.mubr.bf16.gmra.mrb[0].mxu0 %v1391
        %v1427 = vpop.f32.mrb[0].mxu0
        %v1428 = vadd.f32 %v1194, %v1427
        %v1429 = vpop.f32.mrb[0].mxu0
        %v1430 = vpop.f32.mrb[0].mxu0
        %v1431 = vpop.f32.mrb[0].mxu0
        %1432 = vdwg.mxu0
        %vm1433 = vcmask 64512
        %v1434 = vsel %vm1433, %v1299, -inf
        %1435 = vmax.xlane.f32.xlu0 %v1434
        %v1436 = vpop.xlane.xlu0 %1435
        %v1437 = vsel %vm1433, %v1342, -inf
        %1438 = vmax.xlane.f32.xlu0 %v1437
        %v1439 = vpop.xlane.xlu0 %1438
        %v1440 = vsel %vm1433, %v1385, -inf
        %1441 = vmax.xlane.f32.xlu0 %v1440
        %v1442 = vpop.xlane.xlu0 %1441
        %v1443 = vsel %vm1433, %v1428, -inf
        %1444 = vmax.xlane.f32.xlu0 %v1443
        %v1445 = vpop.xlane.xlu0 %1444
        %v1446 = vsub.f32 %v1299, %v1436
        %v1447 = vsub.f32 %v1342, %v1439
        %v1448 = vsub.f32 %v1385, %v1442
        %v1449 = vsub.f32 %v1428, %v1445
        %v1450 = vmul.f32 %v1446, 1.442695
        %v1451 = vpow.pop %v1450
        %v1452 = vmul.f32 %v1447, 1.442695
        %v1453 = vpow.pop %v1452
        %v1454 = vmul.f32 %v1448, 1.442695
        %v1455 = vpow.pop %v1454
        %v1456 = vmul.f32 %v1449, 1.442695
        %v1457 = vpow.pop %v1456
        %v1458 = vsel %vm1433, %v1451, 0.0
        %1459 = vadd.xlane.f32.xlu0 %v1458
        %v1460 = vpop.xlane.xlu0 %1459
        %v1461 = vsel %vm1433, %v1453, 0.0
        %1462 = vadd.xlane.f32.xlu0 %v1461
        %v1463 = vpop.xlane.xlu0 %1462
        %v1464 = vsel %vm1433, %v1455, 0.0
        %1465 = vadd.xlane.f32.xlu0 %v1464
        %v1466 = vpop.xlane.xlu0 %1465
        %v1467 = vsel %vm1433, %v1457, 0.0
        %1468 = vadd.xlane.f32.xlu0 %v1467
        %v1469 = vpop.xlane.xlu0 %1468
        %v1470 = vrcp.pop %v1460
        %v1471 = vrcp.pop %v1463
        %v1472 = vrcp.pop %v1466
        %v1473 = vrcp.pop %v1469
        %v1474 = vmul.f32 %v1451, %v1470
        %v1475 = vmul.f32 %v1453, %v1471
        %v1476 = vmul.f32 %v1455, %v1472
        %v1477 = vmul.f32 %v1457, %v1473
        %v1478 = vpack.c.bf16 %v1474, %v1474
        %v1479 = vpack.c.bf16 %v1475, %v1475
        %v1480 = vpack.c.bf16 %v1476, %v1476
        %v1481 = vpack.c.bf16 %v1477, %v1477
        %1482 = vxpose.xlu0.c.b16.start [1/8] %v1179, 128
        %1483 = vxpose.xlu0.c.b16.cont [2/8] 0, 128
        %1484 = vxpose.xlu0.c.b16.cont [3/8] 0, 128
        %1485 = vxpose.xlu0.c.b16.cont [4/8] 0, 128
        %1486 = vxpose.xlu0.c.b16.cont [5/8] 0, 128
        %1487 = vxpose.xlu0.c.b16.cont [6/8] 0, 128
        %1488 = vxpose.xlu0.c.b16.cont [7/8] 0, 128
        %1489 = vxpose.xlu0.c.b16.end [8/8] 0, 128
        %v1490 = vpop.trf.xlu0
        %v1491 = vpop.trf.xlu0
        %v1492 = vpop.trf.xlu0
        %v1493 = vpop.trf.xlu0
        %v1494 = vpop.trf.xlu0
        %v1495 = vpop.trf.xlu0
        %v1496 = vpop.trf.xlu0
        %v1497 = vpop.trf.xlu0
        %1498 = vxpose.xlu0.c.b16.start [1/8] %v1182, 128
        %1499 = vxpose.xlu0.c.b16.cont [2/8] 0, 128
        %1500 = vxpose.xlu0.c.b16.cont [3/8] 0, 128
        %1501 = vxpose.xlu0.c.b16.cont [4/8] 0, 128
        %1502 = vxpose.xlu0.c.b16.cont [5/8] 0, 128
        %1503 = vxpose.xlu0.c.b16.cont [6/8] 0, 128
        %1504 = vxpose.xlu0.c.b16.cont [7/8] 0, 128
        %1505 = vxpose.xlu0.c.b16.end [8/8] 0, 128
        %v1506 = vpop.trf.xlu0
        %v1507 = vpop.trf.xlu0
        %v1508 = vpop.trf.xlu0
        %v1509 = vpop.trf.xlu0
        %v1510 = vpop.trf.xlu0
        %v1511 = vpop.trf.xlu0
        %v1512 = vpop.trf.xlu0
        %v1513 = vpop.trf.xlu0
        %1514 = vxpose.xlu0.c.b16.start [1/8] %v1185, 128
        %1515 = vxpose.xlu0.c.b16.cont [2/8] 0, 128
        %1516 = vxpose.xlu0.c.b16.cont [3/8] 0, 128
        %1517 = vxpose.xlu0.c.b16.cont [4/8] 0, 128
        %1518 = vxpose.xlu0.c.b16.cont [5/8] 0, 128
        %1519 = vxpose.xlu0.c.b16.cont [6/8] 0, 128
        %1520 = vxpose.xlu0.c.b16.cont [7/8] 0, 128
        %1521 = vxpose.xlu0.c.b16.end [8/8] 0, 128
        %v1522 = vpop.trf.xlu0
        %v1523 = vpop.trf.xlu0
        %v1524 = vpop.trf.xlu0
        %v1525 = vpop.trf.xlu0
        %v1526 = vpop.trf.xlu0
        %v1527 = vpop.trf.xlu0
        %v1528 = vpop.trf.xlu0
        %v1529 = vpop.trf.xlu0
        %1530 = vxpose.xlu0.c.b16.start [1/8] %v1188, 128
        %1531 = vxpose.xlu0.c.b16.cont [2/8] 0, 128
        %1532 = vxpose.xlu0.c.b16.cont [3/8] 0, 128
        %1533 = vxpose.xlu0.c.b16.cont [4/8] 0, 128
        %1534 = vxpose.xlu0.c.b16.cont [5/8] 0, 128
        %1535 = vxpose.xlu0.c.b16.cont [6/8] 0, 128
        %1536 = vxpose.xlu0.c.b16.cont [7/8] 0, 128
        %1537 = vxpose.xlu0.c.b16.end [8/8] 0, 128
        %v1538 = vpop.trf.xlu0
        %v1539 = vpop.trf.xlu0
        %v1540 = vpop.trf.xlu0
        %v1541 = vpop.trf.xlu0
        %v1542 = vpop.trf.xlu0
        %v1543 = vpop.trf.xlu0
        %v1544 = vpop.trf.xlu0
        %v1545 = vpop.trf.xlu0
        %v1547 = vsel %vm1433, %v1490, 0
        %v1550 = vsel %vm1433, %v1491, 0
        %v1553 = vsel %vm1433, %v1478, 0
        %1555 = vmatprep.subr.bf16.mxu0 0
        %1556 = vmatpush1.bf16.xpose.msra.mxu0 %v1553
        %1557 = vmatprep.subr.bf16.mxu0 0
        %1558 = vmatpush1.bf16.xpose.msra.mxu0 0
        %1559 = vmatprep.subr.bf16.mxu0 0
        %1560 = vmatpush1.bf16.xpose.msra.mxu0 0
        %1561 = vmatprep.subr.bf16.mxu0 0
        %1562 = vmatpush1.bf16.xpose.msra.mxu0 0
        %1563 = vmatprep.subr.bf16.mxu0 0
        %1564 = vmatpush1.bf16.xpose.msra.mxu0 0
        %1565 = vmatprep.subr.bf16.mxu0 0
        %1566 = vmatpush1.bf16.xpose.msra.mxu0 0
        %1567 = vmatprep.subr.bf16.mxu0 0
        %1568 = vmatpush1.bf16.xpose.msra.mxu0 0
        %1569 = vmatprep.subr.bf16.mxu0 0
        %1570 = vmatpush1.bf16.xpose.msra.mxu0 0
        %1571 = vmatprep.subr.bf16.mxu0 0
        %1572 = vmatpush1.bf16.xpose.msra.mxu0 0
        %1573 = vmatprep.subr.bf16.mxu0 0
        %1574 = vmatpush1.bf16.xpose.msra.mxu0 0
        %1575 = vmatprep.subr.bf16.mxu0 0
        %1576 = vmatpush1.bf16.xpose.msra.mxu0 0
        %1577 = vmatprep.subr.bf16.mxu0 0
        %1578 = vmatpush1.bf16.xpose.msra.mxu0 0
        %1579 = vmatprep.subr.bf16.mxu0 0
        %1580 = vmatpush1.bf16.xpose.msra.mxu0 0
        %1581 = vmatprep.subr.bf16.mxu0 0
        %1582 = vmatpush1.bf16.xpose.msra.mxu0 0
        %1583 = vmatprep.subr.bf16.mxu0 0
        %1584 = vmatpush1.bf16.xpose.msra.mxu0 0
        %1585 = vmatprep.subr.bf16.mxu0 0
        %1586 = vmatpush1.bf16.xpose.msra.mxu0 0
        %1587 = vmatprep.mubr.bf16.mxu0 0
        %1588 = vmatmul.mubr.bf16.gmra.mrb[0].mxu0 %v1547
        %v1589 = vpop.f32.mrb[0].mxu0
        %v1590 = vadd.f32 0.0, %v1589
        %v1591 = vpop.f32.mrb[0].mxu0
        %v1592 = vpop.f32.mrb[0].mxu0
        %v1593 = vadd.f32 0.0, %v1592
        %v1594 = vpop.f32.mrb[0].mxu0
        %1595 = vmatprep.mubr.bf16.mxu0 0
        %1596 = vmatmul.mubr.bf16.gmra.mrb[0].mxu0 %v1550
        %v1597 = vpop.f32.mrb[0].mxu0
        %v1598 = vadd.f32 0.0, %v1597
        %v1599 = vpop.f32.mrb[0].mxu0
        %v1600 = vpop.f32.mrb[0].mxu0
        %v1601 = vadd.f32 0.0, %v1600
        %v1602 = vpop.f32.mrb[0].mxu0
        %1603 = vdwg.mxu0
        %v1605 = vsel %vm1433, %v1506, 0
        %v1608 = vsel %vm1433, %v1507, 0
        %v1611 = vsel %vm1433, %v1479, 0
        %1613 = vmatprep.subr.bf16.mxu0 0
        %1614 = vmatpush1.bf16.xpose.msra.mxu0 %v1611
        %1615 = vmatprep.subr.bf16.mxu0 0
        %1616 = vmatpush1.bf16.xpose.msra.mxu0 0
        %1617 = vmatprep.subr.bf16.mxu0 0
        %1618 = vmatpush1.bf16.xpose.msra.mxu0 0
        %1619 = vmatprep.subr.bf16.mxu0 0
        %1620 = vmatpush1.bf16.xpose.msra.mxu0 0
        %1621 = vmatprep.subr.bf16.mxu0 0
        %1622 = vmatpush1.bf16.xpose.msra.mxu0 0
        %1623 = vmatprep.subr.bf16.mxu0 0
        %1624 = vmatpush1.bf16.xpose.msra.mxu0 0
        %1625 = vmatprep.subr.bf16.mxu0 0
        %1626 = vmatpush1.bf16.xpose.msra.mxu0 0
        %1627 = vmatprep.subr.bf16.mxu0 0
        %1628 = vmatpush1.bf16.xpose.msra.mxu0 0
        %1629 = vmatprep.subr.bf16.mxu0 0
        %1630 = vmatpush1.bf16.xpose.msra.mxu0 0
        %1631 = vmatprep.subr.bf16.mxu0 0
        %1632 = vmatpush1.bf16.xpose.msra.mxu0 0
        %1633 = vmatprep.subr.bf16.mxu0 0
        %1634 = vmatpush1.bf16.xpose.msra.mxu0 0
        %1635 = vmatprep.subr.bf16.mxu0 0
        %1636 = vmatpush1.bf16.xpose.msra.mxu0 0
        %1637 = vmatprep.subr.bf16.mxu0 0
        %1638 = vmatpush1.bf16.xpose.msra.mxu0 0
        %1639 = vmatprep.subr.bf16.mxu0 0
        %1640 = vmatpush1.bf16.xpose.msra.mxu0 0
        %1641 = vmatprep.subr.bf16.mxu0 0
        %1642 = vmatpush1.bf16.xpose.msra.mxu0 0
        %1643 = vmatprep.subr.bf16.mxu0 0
        %1644 = vmatpush1.bf16.xpose.msra.mxu0 0
        %1645 = vmatprep.mubr.bf16.mxu0 0
        %1646 = vmatmul.mubr.bf16.gmra.mrb[0].mxu0 %v1605
        %v1647 = vpop.f32.mrb[0].mxu0
        %v1648 = vadd.f32 0.0, %v1647
        %v1649 = vpop.f32.mrb[0].mxu0
        %v1650 = vpop.f32.mrb[0].mxu0
        %v1651 = vadd.f32 0.0, %v1650
        %v1652 = vpop.f32.mrb[0].mxu0
        %1653 = vmatprep.mubr.bf16.mxu0 0
        %1654 = vmatmul.mubr.bf16.gmra.mrb[0].mxu0 %v1608
        %v1655 = vpop.f32.mrb[0].mxu0
        %v1656 = vadd.f32 0.0, %v1655
        %v1657 = vpop.f32.mrb[0].mxu0
        %v1658 = vpop.f32.mrb[0].mxu0
        %v1659 = vadd.f32 0.0, %v1658
        %v1660 = vpop.f32.mrb[0].mxu0
        %1661 = vdwg.mxu0
        %v1663 = vsel %vm1433, %v1522, 0
        %v1666 = vsel %vm1433, %v1523, 0
        %v1669 = vsel %vm1433, %v1480, 0
        %1671 = vmatprep.subr.bf16.mxu0 0
        %1672 = vmatpush1.bf16.xpose.msra.mxu0 %v1669
        %1673 = vmatprep.subr.bf16.mxu0 0
        %1674 = vmatpush1.bf16.xpose.msra.mxu0 0
        %1675 = vmatprep.subr.bf16.mxu0 0
        %1676 = vmatpush1.bf16.xpose.msra.mxu0 0
        %1677 = vmatprep.subr.bf16.mxu0 0
        %1678 = vmatpush1.bf16.xpose.msra.mxu0 0
        %1679 = vmatprep.subr.bf16.mxu0 0
        %1680 = vmatpush1.bf16.xpose.msra.mxu0 0
        %1681 = vmatprep.subr.bf16.mxu0 0
        %1682 = vmatpush1.bf16.xpose.msra.mxu0 0
        %1683 = vmatprep.subr.bf16.mxu0 0
        %1684 = vmatpush1.bf16.xpose.msra.mxu0 0
        %1685 = vmatprep.subr.bf16.mxu0 0
        %1686 = vmatpush1.bf16.xpose.msra.mxu0 0
        %1687 = vmatprep.subr.bf16.mxu0 0
        %1688 = vmatpush1.bf16.xpose.msra.mxu0 0
        %1689 = vmatprep.subr.bf16.mxu0 0
        %1690 = vmatpush1.bf16.xpose.msra.mxu0 0
        %1691 = vmatprep.subr.bf16.mxu0 0
        %1692 = vmatpush1.bf16.xpose.msra.mxu0 0
        %1693 = vmatprep.subr.bf16.mxu0 0
        %1694 = vmatpush1.bf16.xpose.msra.mxu0 0
        %1695 = vmatprep.subr.bf16.mxu0 0
        %1696 = vmatpush1.bf16.xpose.msra.mxu0 0
        %1697 = vmatprep.subr.bf16.mxu0 0
        %1698 = vmatpush1.bf16.xpose.msra.mxu0 0
        %1699 = vmatprep.subr.bf16.mxu0 0
        %1700 = vmatpush1.bf16.xpose.msra.mxu0 0
        %1701 = vmatprep.subr.bf16.mxu0 0
        %1702 = vmatpush1.bf16.xpose.msra.mxu0 0
        %1703 = vmatprep.mubr.bf16.mxu0 0
        %1704 = vmatmul.mubr.bf16.gmra.mrb[0].mxu0 %v1663
        %v1705 = vpop.f32.mrb[0].mxu0
        %v1706 = vadd.f32 0.0, %v1705
        %v1707 = vpop.f32.mrb[0].mxu0
        %v1708 = vpop.f32.mrb[0].mxu0
        %v1709 = vadd.f32 0.0, %v1708
        %v1710 = vpop.f32.mrb[0].mxu0
        %1711 = vmatprep.mubr.bf16.mxu0 0
        %1712 = vmatmul.mubr.bf16.gmra.mrb[0].mxu0 %v1666
        %v1713 = vpop.f32.mrb[0].mxu0
        %v1714 = vadd.f32 0.0, %v1713
        %v1715 = vpop.f32.mrb[0].mxu0
        %v1716 = vpop.f32.mrb[0].mxu0
        %v1717 = vadd.f32 0.0, %v1716
        %v1718 = vpop.f32.mrb[0].mxu0
        %1719 = vdwg.mxu0
        %v1721 = vsel %vm1433, %v1538, 0
        %v1724 = vsel %vm1433, %v1539, 0
        %v1727 = vsel %vm1433, %v1481, 0
        %1729 = vmatprep.subr.bf16.mxu0 0
        %1730 = vmatpush1.bf16.xpose.msra.mxu0 %v1727
        %1731 = vmatprep.subr.bf16.mxu0 0
        %1732 = vmatpush1.bf16.xpose.msra.mxu0 0
        %1733 = vmatprep.subr.bf16.mxu0 0
        %1734 = vmatpush1.bf16.xpose.msra.mxu0 0
        %1735 = vmatprep.subr.bf16.mxu0 0
        %1736 = vmatpush1.bf16.xpose.msra.mxu0 0
        %1737 = vmatprep.subr.bf16.mxu0 0
        %1738 = vmatpush1.bf16.xpose.msra.mxu0 0
        %1739 = vmatprep.subr.bf16.mxu0 0
        %1740 = vmatpush1.bf16.xpose.msra.mxu0 0
        %1741 = vmatprep.subr.bf16.mxu0 0
        %1742 = vmatpush1.bf16.xpose.msra.mxu0 0
        %1743 = vmatprep.subr.bf16.mxu0 0
        %1744 = vmatpush1.bf16.xpose.msra.mxu0 0
        %1745 = vmatprep.subr.bf16.mxu0 0
        %1746 = vmatpush1.bf16.xpose.msra.mxu0 0
        %1747 = vmatprep.subr.bf16.mxu0 0
        %1748 = vmatpush1.bf16.xpose.msra.mxu0 0
        %1749 = vmatprep.subr.bf16.mxu0 0
        %1750 = vmatpush1.bf16.xpose.msra.mxu0 0
        %1751 = vmatprep.subr.bf16.mxu0 0
        %1752 = vmatpush1.bf16.xpose.msra.mxu0 0
        %1753 = vmatprep.subr.bf16.mxu0 0
        %1754 = vmatpush1.bf16.xpose.msra.mxu0 0
        %1755 = vmatprep.subr.bf16.mxu0 0
        %1756 = vmatpush1.bf16.xpose.msra.mxu0 0
        %1757 = vmatprep.subr.bf16.mxu0 0
        %1758 = vmatpush1.bf16.xpose.msra.mxu0 0
        %1759 = vmatprep.subr.bf16.mxu0 0
        %1760 = vmatpush1.bf16.xpose.msra.mxu0 0
        %1761 = vmatprep.mubr.bf16.mxu0 0
        %1762 = vmatmul.mubr.bf16.gmra.mrb[0].mxu0 %v1721
        %v1763 = vpop.f32.mrb[0].mxu0
        %v1764 = vadd.f32 0.0, %v1763
        %v1765 = vpop.f32.mrb[0].mxu0
        %v1766 = vpop.f32.mrb[0].mxu0
        %v1767 = vadd.f32 0.0, %v1766
        %v1768 = vpop.f32.mrb[0].mxu0
        %1769 = vmatprep.mubr.bf16.mxu0 0
        %1770 = vmatmul.mubr.bf16.gmra.mrb[0].mxu0 %v1724
        %v1771 = vpop.f32.mrb[0].mxu0
        %v1772 = vadd.f32 0.0, %v1771
        %v1773 = vpop.f32.mrb[0].mxu0
        %v1774 = vpop.f32.mrb[0].mxu0
        %v1775 = vadd.f32 0.0, %v1774
        %v1776 = vpop.f32.mrb[0].mxu0
        %1777 = vdwg.mxu0
        %1778 = vxpose.xlu0.b32.start [1/16] %v1590, 128
        %1779 = vxpose.xlu0.b32.cont [2/16] %v1593, 128
        %1780 = vxpose.xlu0.b32.cont [3/16] %v1598, 128
        %1781 = vxpose.xlu0.b32.cont [4/16] %v1601, 128
        %1782 = vxpose.xlu0.b32.cont [5/16] 0.0, 128
        %1783 = vxpose.xlu0.b32.cont [6/16] 0.0, 128
        %1784 = vxpose.xlu0.b32.cont [7/16] 0.0, 128
        %1785 = vxpose.xlu0.b32.cont [8/16] 0.0, 128
        %1786 = vxpose.xlu0.b32.cont [9/16] 0.0, 128
        %1787 = vxpose.xlu0.b32.cont [10/16] 0.0, 128
        %1788 = vxpose.xlu0.b32.cont [11/16] 0.0, 128
        %1789 = vxpose.xlu0.b32.cont [12/16] 0.0, 128
        %1790 = vxpose.xlu0.b32.cont [13/16] 0.0, 128
        %1791 = vxpose.xlu0.b32.cont [14/16] 0.0, 128
        %1792 = vxpose.xlu0.b32.cont [15/16] 0.0, 128
        %1793 = vxpose.xlu0.b32.end [16/16] 0.0, 128
        %v1794 = vpop.trf.xlu0
        %v1795 = vpop.trf.xlu0
        %v1796 = vpop.trf.xlu0
        %v1797 = vpop.trf.xlu0
        %v1798 = vpop.trf.xlu0
        %v1799 = vpop.trf.xlu0
        %v1800 = vpop.trf.xlu0
        %v1801 = vpop.trf.xlu0
        %v1802 = vpop.trf.xlu0
        %v1803 = vpop.trf.xlu0
        %v1804 = vpop.trf.xlu0
        %v1805 = vpop.trf.xlu0
        %v1806 = vpop.trf.xlu0
        %v1807 = vpop.trf.xlu0
        %v1808 = vpop.trf.xlu0
        %v1809 = vpop.trf.xlu0
        %1810 = vxpose.xlu0.b32.start [1/16] %v1648, 128
        %1811 = vxpose.xlu0.b32.cont [2/16] %v1651, 128
        %1812 = vxpose.xlu0.b32.cont [3/16] %v1656, 128
        %1813 = vxpose.xlu0.b32.cont [4/16] %v1659, 128
        %1814 = vxpose.xlu0.b32.cont [5/16] 0.0, 128
        %1815 = vxpose.xlu0.b32.cont [6/16] 0.0, 128
        %1816 = vxpose.xlu0.b32.cont [7/16] 0.0, 128
        %1817 = vxpose.xlu0.b32.cont [8/16] 0.0, 128
        %1818 = vxpose.xlu0.b32.cont [9/16] 0.0, 128
        %1819 = vxpose.xlu0.b32.cont [10/16] 0.0, 128
        %1820 = vxpose.xlu0.b32.cont [11/16] 0.0, 128
        %1821 = vxpose.xlu0.b32.cont [12/16] 0.0, 128
        %1822 = vxpose.xlu0.b32.cont [13/16] 0.0, 128
        %1823 = vxpose.xlu0.b32.cont [14/16] 0.0, 128
        %1824 = vxpose.xlu0.b32.cont [15/16] 0.0, 128
        %1825 = vxpose.xlu0.b32.end [16/16] 0.0, 128
        %v1826 = vpop.trf.xlu0
        %v1827 = vpop.trf.xlu0
        %v1828 = vpop.trf.xlu0
        %v1829 = vpop.trf.xlu0
        %v1830 = vpop.trf.xlu0
        %v1831 = vpop.trf.xlu0
        %v1832 = vpop.trf.xlu0
        %v1833 = vpop.trf.xlu0
        %v1834 = vpop.trf.xlu0
        %v1835 = vpop.trf.xlu0
        %v1836 = vpop.trf.xlu0
        %v1837 = vpop.trf.xlu0
        %v1838 = vpop.trf.xlu0
        %v1839 = vpop.trf.xlu0
        %v1840 = vpop.trf.xlu0
        %v1841 = vpop.trf.xlu0
        %1842 = vxpose.xlu0.b32.start [1/16] %v1706, 128
        %1843 = vxpose.xlu0.b32.cont [2/16] %v1709, 128
        %1844 = vxpose.xlu0.b32.cont [3/16] %v1714, 128
        %1845 = vxpose.xlu0.b32.cont [4/16] %v1717, 128
        %1846 = vxpose.xlu0.b32.cont [5/16] 0.0, 128
        %1847 = vxpose.xlu0.b32.cont [6/16] 0.0, 128
        %1848 = vxpose.xlu0.b32.cont [7/16] 0.0, 128
        %1849 = vxpose.xlu0.b32.cont [8/16] 0.0, 128
        %1850 = vxpose.xlu0.b32.cont [9/16] 0.0, 128
        %1851 = vxpose.xlu0.b32.cont [10/16] 0.0, 128
        %1852 = vxpose.xlu0.b32.cont [11/16] 0.0, 128
        %1853 = vxpose.xlu0.b32.cont [12/16] 0.0, 128
        %1854 = vxpose.xlu0.b32.cont [13/16] 0.0, 128
        %1855 = vxpose.xlu0.b32.cont [14/16] 0.0, 128
        %1856 = vxpose.xlu0.b32.cont [15/16] 0.0, 128
        %1857 = vxpose.xlu0.b32.end [16/16] 0.0, 128
        %v1858 = vpop.trf.xlu0
        %v1859 = vpop.trf.xlu0
        %v1860 = vpop.trf.xlu0
        %v1861 = vpop.trf.xlu0
        %v1862 = vpop.trf.xlu0
        %v1863 = vpop.trf.xlu0
        %v1864 = vpop.trf.xlu0
        %v1865 = vpop.trf.xlu0
        %v1866 = vpop.trf.xlu0
        %v1867 = vpop.trf.xlu0
        %v1868 = vpop.trf.xlu0
        %v1869 = vpop.trf.xlu0
        %v1870 = vpop.trf.xlu0
        %v1871 = vpop.trf.xlu0
        %v1872 = vpop.trf.xlu0
        %v1873 = vpop.trf.xlu0
        %1874 = vxpose.xlu0.b32.start [1/16] %v1764, 128
        %1875 = vxpose.xlu0.b32.cont [2/16] %v1767, 128
        %1876 = vxpose.xlu0.b32.cont [3/16] %v1772, 128
        %1877 = vxpose.xlu0.b32.cont [4/16] %v1775, 128
        %1878 = vxpose.xlu0.b32.cont [5/16] 0.0, 128
        %1879 = vxpose.xlu0.b32.cont [6/16] 0.0, 128
        %1880 = vxpose.xlu0.b32.cont [7/16] 0.0, 128
        %1881 = vxpose.xlu0.b32.cont [8/16] 0.0, 128
        %1882 = vxpose.xlu0.b32.cont [9/16] 0.0, 128
        %1883 = vxpose.xlu0.b32.cont [10/16] 0.0, 128
        %1884 = vxpose.xlu0.b32.cont [11/16] 0.0, 128
        %1885 = vxpose.xlu0.b32.cont [12/16] 0.0, 128
        %1886 = vxpose.xlu0.b32.cont [13/16] 0.0, 128
        %1887 = vxpose.xlu0.b32.cont [14/16] 0.0, 128
        %1888 = vxpose.xlu0.b32.cont [15/16] 0.0, 128
        %1889 = vxpose.xlu0.b32.end [16/16] 0.0, 128
        %v1890 = vpop.trf.xlu0
        %v1891 = vpop.trf.xlu0
        %v1892 = vpop.trf.xlu0
        %v1893 = vpop.trf.xlu0
        %v1894 = vpop.trf.xlu0
        %v1895 = vpop.trf.xlu0
        %v1896 = vpop.trf.xlu0
        %v1897 = vpop.trf.xlu0
        %v1898 = vpop.trf.xlu0
        %v1899 = vpop.trf.xlu0
        %v1900 = vpop.trf.xlu0
        %v1901 = vpop.trf.xlu0
        %v1902 = vpop.trf.xlu0
        %v1903 = vpop.trf.xlu0
        %v1904 = vpop.trf.xlu0
        %v1905 = vpop.trf.xlu0
        %v1906 = vcombine.low %v1794, %v1858
        %v1907 = vcombine.high %v1794, %v1858
        %v1909 = vunpack.c.l.s4 1983009808
        %v1910 = vunpack.c.0.s8 %v1909
        %v1911 = vlaneseq
        %v1912 = vshrl.u32 %v1911, 7
        %v1913 = vsub.s32 %v1910, %v1912
        %v1914 = vrot.slane %v1906, %v1913
        %v1916 = vunpack.c.l.s4 1983009808
        %v1917 = vunpack.c.0.s8 %v1916
        %v1918 = vlaneseq
        %v1919 = vshrl.u32 %v1918, 7
        %v1920 = vsub.s32 %v1917, %v1919
        %v1921 = vrot.slane %v1907, %v1920
        %v1922 = vcombine.low %v1826, %v1890
        %v1923 = vcombine.high %v1826, %v1890
        %v1925 = vunpack.c.l.s4 1983009808
        %v1926 = vunpack.c.0.s8 %v1925
        %v1927 = vlaneseq
        %v1928 = vshrl.u32 %v1927, 7
        %v1929 = vsub.s32 %v1926, %v1928
        %v1930 = vrot.slane %v1922, %v1929
        %v1932 = vunpack.c.l.s4 1983009808
        %v1933 = vunpack.c.0.s8 %v1932
        %v1934 = vlaneseq
        %v1935 = vshrl.u32 %v1934, 7
        %v1936 = vsub.s32 %v1933, %v1935
        %v1937 = vrot.slane %v1923, %v1936
        %v1938 = vcombine.low %v1914, %v1930
        %v1939 = vcombine.high %v1914, %v1930
        %v1941 = vunpack.c.l.s4 1934713408
        %v1942 = vunpack.c.0.s8 %v1941
        %v1943 = vlaneseq
        %v1944 = vshrl.u32 %v1943, 7
        %v1945 = vsub.s32 %v1942, %v1944
        %v1946 = vrot.slane %v1938, %v1945
        %v1948 = vunpack.c.l.s4 1934713408
        %v1949 = vunpack.c.0.s8 %v1948
        %v1950 = vlaneseq
        %v1951 = vshrl.u32 %v1950, 7
        %v1952 = vsub.s32 %v1949, %v1951
        %v1953 = vrot.slane %v1939, %v1952
        %v1954 = vcombine.low %v1921, %v1937
        %v1955 = vcombine.high %v1921, %v1937
        %v1957 = vunpack.c.l.s4 1934713408
        %v1958 = vunpack.c.0.s8 %v1957
        %v1959 = vlaneseq
        %v1960 = vshrl.u32 %v1959, 7
        %v1961 = vsub.s32 %v1958, %v1960
        %v1962 = vrot.slane %v1954, %v1961
        %v1964 = vunpack.c.l.s4 1934713408
        %v1965 = vunpack.c.0.s8 %v1964
        %v1966 = vlaneseq
        %v1967 = vshrl.u32 %v1966, 7
        %v1968 = vsub.s32 %v1965, %v1967
        %v1969 = vrot.slane %v1955, %v1968
        %v1970 = vcombine.high %v1946, 0.0
        %v1971 = vcombine.high %v1953, 0.0
        %v1972 = vcombine.high %v1962, 0.0
        %v1973 = vcombine.high %v1969, 0.0
        %v1974 = vcombine.low %v1946, %v1953
        %v1976 = vunpack.c.l.s4 1983009808
        %v1977 = vunpack.c.0.s8 %v1976
        %v1978 = vlaneseq
        %v1979 = vshrl.u32 %v1978, 7
        %v1980 = vsub.s32 %v1977, %v1979
        %v1981 = vrot.slane %v1974, %v1980
        %v1982 = vcombine.low %v1970, %v1971
        %v1984 = vunpack.c.l.s4 1983009808
        %v1985 = vunpack.c.0.s8 %v1984
        %v1986 = vlaneseq
        %v1987 = vshrl.u32 %v1986, 7
        %v1988 = vsub.s32 %v1985, %v1987
        %v1989 = vrot.slane %v1982, %v1988
        %v1990 = vcombine.low %v1962, %v1969
        %v1992 = vunpack.c.l.s4 1983009808
        %v1993 = vunpack.c.0.s8 %v1992
        %v1994 = vlaneseq
        %v1995 = vshrl.u32 %v1994, 7
        %v1996 = vsub.s32 %v1993, %v1995
        %v1997 = vrot.slane %v1990, %v1996
        %v1998 = vcombine.low %v1972, %v1973
        %v2000 = vunpack.c.l.s4 1983009808
        %v2001 = vunpack.c.0.s8 %v2000
        %v2002 = vlaneseq
        %v2003 = vshrl.u32 %v2002, 7
        %v2004 = vsub.s32 %v2001, %v2003
        %v2005 = vrot.slane %v1998, %v2004
        %v2006 = vcombine.low %v1981, %v1989
        %v2007 = vcombine.high %v1981, %v1989
        %v2009 = vunpack.c.l.s4 1934713408
        %v2010 = vunpack.c.0.s8 %v2009
        %v2011 = vlaneseq
        %v2012 = vshrl.u32 %v2011, 7
        %v2013 = vsub.s32 %v2010, %v2012
        %v2014 = vrot.slane %v2006, %v2013
        %v2016 = vunpack.c.l.s4 1934713408
        %v2017 = vunpack.c.0.s8 %v2016
        %v2018 = vlaneseq
        %v2019 = vshrl.u32 %v2018, 7
        %v2020 = vsub.s32 %v2017, %v2019
        %v2021 = vrot.slane %v2007, %v2020
        %v2022 = vcombine.low %v1997, %v2005
        %v2023 = vcombine.high %v1997, %v2005
        %v2025 = vunpack.c.l.s4 1934713408
        %v2026 = vunpack.c.0.s8 %v2025
        %v2027 = vlaneseq
        %v2028 = vshrl.u32 %v2027, 7
        %v2029 = vsub.s32 %v2026, %v2028
        %v2030 = vrot.slane %v2022, %v2029
        %v2032 = vunpack.c.l.s4 1934713408
        %v2033 = vunpack.c.0.s8 %v2032
        %v2034 = vlaneseq
        %v2035 = vshrl.u32 %v2034, 7
        %v2036 = vsub.s32 %v2033, %v2035
        %v2037 = vrot.slane %v2023, %v2036
        %v2038 = vcombine.low %v2014, %v2030
        %v2039 = vcombine.high %v2014, %v2030
        %v2040 = vcombine.low %v2021, %v2037
        %v2041 = vcombine.high %v2021, %v2037
        %2043 = vrot.lane.b32.xlu0 %v2039, 32
        %v2044 = vpop.permute.xlu0 %2043
        %2047 = vrot.lane.b32.xlu0 %v2040, 64
        %v2048 = vpop.permute.xlu0 %2047
        %2051 = vrot.lane.b32.xlu0 %v2041, 96
        %v2052 = vpop.permute.xlu0 %2051
        %v2054 = vsel %vm1260, %v2038, %v2044
        %vm2055 = vcmask 523264
        %v2056 = vsel %vm2055, %v2054, %v2048
        %vm2057 = vcmask 785408
        %v2058 = vsel %vm2057, %v2056, %v2052
        %v2059 = vpack.c.bf16 %v2058, %v2058
        %v2060 = vld [vmem:[#allocation11] sm:$0xf]
        %v2061 = vld [vmem:[#allocation11 + $0x4] sm:$0xf]
        %v2062 = vld [vmem:[#allocation11 + $0x8] sm:$0xf]
        %v2063 = vld [vmem:[#allocation11 + $0xc] sm:$0xf]
        %v2064 = vld [vmem:[#allocation11 + $0x10] sm:$0xf]
        %v2065 = vld [vmem:[#allocation11 + $0x14] sm:$0xf]
        %v2066 = vld [vmem:[#allocation11 + $0x18] sm:$0xf]
        %v2067 = vld [vmem:[#allocation11 + $0x1c] sm:$0xf]
        %v2068 = vld [vmem:[#allocation11 + $0x20] sm:$0xf]
        %v2069 = vld [vmem:[#allocation11 + $0x24] sm:$0xf]
        %v2070 = vld [vmem:[#allocation11 + $0x28] sm:$0xf]
        %v2071 = vld [vmem:[#allocation11 + $0x2c] sm:$0xf]
        %v2072 = vld [vmem:[#allocation11 + $0x30] sm:$0xf]
        %v2073 = vld [vmem:[#allocation11 + $0x34] sm:$0xf]
        %v2074 = vld [vmem:[#allocation11 + $0x38] sm:$0xf]
        %v2075 = vld [vmem:[#allocation11 + $0x3c] sm:$0xf]
        %v2092 = vunpack.c.l.b16 %v2060
        %v2093 = vunpack.c.l.b16 %v2061
        %v2094 = vunpack.c.l.b16 %v2062
        %v2095 = vunpack.c.l.b16 %v2063
        %v2096 = vunpack.c.l.b16 %v2064
        %v2097 = vunpack.c.l.b16 %v2065
        %v2098 = vunpack.c.l.b16 %v2066
        %v2099 = vunpack.c.l.b16 %v2067
        %v2100 = vunpack.c.l.b16 %v2068
        %v2101 = vunpack.c.l.b16 %v2069
        %v2102 = vunpack.c.l.b16 %v2070
        %v2103 = vunpack.c.l.b16 %v2071
        %v2104 = vunpack.c.l.b16 %v2072
        %v2105 = vunpack.c.l.b16 %v2073
        %v2106 = vunpack.c.l.b16 %v2074
        %v2107 = vunpack.c.l.b16 %v2075
        %v2108 = vpack.c.b16 %v2093, %v2092
        %v2109 = vpack.c.b16 %v2095, %v2094
        %v2110 = vpack.c.b16 %v2097, %v2096
        %v2111 = vpack.c.b16 %v2099, %v2098
        %v2112 = vpack.c.b16 %v2101, %v2100
        %v2113 = vpack.c.b16 %v2103, %v2102
        %v2114 = vpack.c.b16 %v2105, %v2104
        %v2115 = vpack.c.b16 %v2107, %v2106
        %2124 = vmatprep.subr.bf16.mxu0 0
        %2125 = vmatpush1.bf16.msra.mxu0 %v2108
        %2126 = vmatprep.subr.bf16.mxu0 0
        %2127 = vmatpush1.bf16.msra.mxu0 %v2109
        %2128 = vmatprep.subr.bf16.mxu0 0
        %2129 = vmatpush1.bf16.msra.mxu0 %v2110
        %2130 = vmatprep.subr.bf16.mxu0 0
        %2131 = vmatpush1.bf16.msra.mxu0 %v2111
        %2132 = vmatprep.subr.bf16.mxu0 0
        %2133 = vmatpush1.bf16.msra.mxu0 %v2112
        %2134 = vmatprep.subr.bf16.mxu0 0
        %2135 = vmatpush1.bf16.msra.mxu0 %v2113
        %2136 = vmatprep.subr.bf16.mxu0 0
        %2137 = vmatpush1.bf16.msra.mxu0 %v2114
        %2138 = vmatprep.subr.bf16.mxu0 0
        %2139 = vmatpush1.bf16.msra.mxu0 %v2115
        %2140 = vmatprep.subr.bf16.mxu0 0
        %2141 = vmatpush1.bf16.msra.mxu0 0
        %2142 = vmatprep.subr.bf16.mxu0 0
        %2143 = vmatpush1.bf16.msra.mxu0 0
        %2144 = vmatprep.subr.bf16.mxu0 0
        %2145 = vmatpush1.bf16.msra.mxu0 0
        %2146 = vmatprep.subr.bf16.mxu0 0
        %2147 = vmatpush1.bf16.msra.mxu0 0
        %2148 = vmatprep.subr.bf16.mxu0 0
        %2149 = vmatpush1.bf16.msra.mxu0 0
        %2150 = vmatprep.subr.bf16.mxu0 0
        %2151 = vmatpush1.bf16.msra.mxu0 0
        %2152 = vmatprep.subr.bf16.mxu0 0
        %2153 = vmatpush1.bf16.msra.mxu0 0
        %2154 = vmatprep.subr.bf16.mxu0 0
        %2155 = vmatpush1.bf16.msra.mxu0 0
        %2156 = vmatprep.mubr.bf16.mxu0 0
        %2157 = vmatmul.mubr.bf16.gmra.mrb[0].mxu0 %v2059
        %v2158 = vpop.f32.mrb[0].mxu0
        %v2159 = vadd.f32 0.0, %v2158
        %v2160 = vpop.f32.mrb[0].mxu0
        %v2161 = vpop.f32.mrb[0].mxu0
        %v2162 = vpop.f32.mrb[0].mxu0
        %2163 = vdwg.mxu0
        %v2164 = vadd.f32 %v899, %v2159
        %v2165 = vld [vmem:[%s7] sm:$0x1]
        %v2167 = vlaneseq
        %v2168 = vshrl.u32 %v2167, 7
        %v2169 = vsub.s32 0, %v2168
        %v2170 = vrot.slane %v2165, %v2169
        %v2172 = vadd.f32 %v2164, %v2170
        %v2173 = vld [vmem:[#allocation13] sm:$0x1]
        %v2174 = vld [vmem:[#allocation14] sm:$0x1]
        %2175 = vadd.xlane.f32.xlu0 %v2172
        %v2176 = vpop.xlane.xlu0 %2175
        %v2177 = vmul.f32 %v2176, %v876
        %v2178 = vsub.f32 %v2172, %v2177
        %v2179 = vmul.f32 %v2178, %v2178
        %2180 = vadd.xlane.f32.xlu0 %v2179
        %v2181 = vpop.xlane.xlu0 %2180
        %v2182 = vmul.f32 %v2181, %v876
        %v2183 = vadd.f32 %v2182, 1e-12
        %v2184 = vrsqrt.pop %v2183
        %v2185 = vmul.f32 %v2178, %v2184
        %v2187 = vlaneseq
        %v2188 = vshrl.u32 %v2187, 7
        %v2189 = vsub.s32 0, %v2188
        %v2190 = vrot.slane %v2173, %v2189
        %v2192 = vmul.f32 %v2185, %v2190
        %v2194 = vlaneseq
        %v2195 = vshrl.u32 %v2194, 7
        %v2196 = vsub.s32 0, %v2195
        %v2197 = vrot.slane %v2174, %v2196
        %v2199 = vadd.f32 %v2192, %v2197
        %v2200 = vpack.c.bf16 %v2199, %v2199
        %v2201 = vld [vmem:[#allocation16] sm:$0xff]
        %v2202 = vld [vmem:[#allocation16 + $0x8] sm:$0xff]
        %v2203 = vld [vmem:[#allocation16 + $0x10] sm:$0xff]
        %v2204 = vld [vmem:[#allocation16 + $0x18] sm:$0xff]
        %v2205 = vld [vmem:[#allocation16 + $0x20] sm:$0xff]
        %v2206 = vld [vmem:[#allocation16 + $0x28] sm:$0xff]
        %v2207 = vld [vmem:[#allocation16 + $0x30] sm:$0xff]
        %v2208 = vld [vmem:[#allocation16 + $0x38] sm:$0xff]
        %v2209 = vld [vmem:[#allocation16 + $0x40] sm:$0xff]
        %v2210 = vld [vmem:[#allocation16 + $0x48] sm:$0xff]
        %v2211 = vld [vmem:[#allocation16 + $0x50] sm:$0xff]
        %v2212 = vld [vmem:[#allocation16 + $0x58] sm:$0xff]
        %v2213 = vld [vmem:[#allocation16 + $0x60] sm:$0xff]
        %v2214 = vld [vmem:[#allocation16 + $0x68] sm:$0xff]
        %v2215 = vld [vmem:[#allocation16 + $0x70] sm:$0xff]
        %v2216 = vld [vmem:[#allocation16 + $0x78] sm:$0xff]
        %v2217 = vld [vmem:[#allocation16 + $0x80] sm:$0xff]
        %v2218 = vld [vmem:[#allocation16 + $0x88] sm:$0xff]
        %v2219 = vld [vmem:[#allocation16 + $0x90] sm:$0xff]
        %v2220 = vld [vmem:[#allocation16 + $0x98] sm:$0xff]
        %v2221 = vld [vmem:[#allocation16 + $0xa0] sm:$0xff]
        %v2222 = vld [vmem:[#allocation16 + $0xa8] sm:$0xff]
        %v2223 = vld [vmem:[#allocation16 + $0xb0] sm:$0xff]
        %v2224 = vld [vmem:[#allocation16 + $0xb8] sm:$0xff]
        %v2225 = vld [vmem:[#allocation16 + $0xc0] sm:$0xff]
        %v2226 = vld [vmem:[#allocation16 + $0xc8] sm:$0xff]
        %v2227 = vld [vmem:[#allocation16 + $0xd0] sm:$0xff]
        %v2228 = vld [vmem:[#allocation16 + $0xd8] sm:$0xff]
        %v2229 = vld [vmem:[#allocation16 + $0xe0] sm:$0xff]
        %v2230 = vld [vmem:[#allocation16 + $0xe8] sm:$0xff]
        %v2231 = vld [vmem:[#allocation16 + $0xf0] sm:$0xff]
        %v2232 = vld [vmem:[#allocation16 + $0xf8] sm:$0xff]
        %v2233 = vld [vmem:[#allocation17] sm:$0xf]
        %v2235 = vlaneseq
        %v2236 = vshrl.u32 %v2235, 7
        %v2237 = vsub.s32 0, %v2236
        %v2238 = vrot.slane %v2233, %v2237
        %v2239 = vlaneseq
        %v2240 = vshrl.u32 %v2239, 7
        %v2241 = vsub.s32 1, %v2240
        %v2242 = vrot.slane %v2233, %v2241
        %v2243 = vlaneseq
        %v2244 = vshrl.u32 %v2243, 7
        %v2245 = vsub.s32 2, %v2244
        %v2246 = vrot.slane %v2233, %v2245
        %v2247 = vlaneseq
        %v2248 = vshrl.u32 %v2247, 7
        %v2249 = vsub.s32 3, %v2248
        %v2250 = vrot.slane %v2233, %v2249
        %v2287 = vunpack.c.l.b16 %v2201
        %v2288 = vunpack.c.h.b16 %v2201
        %v2289 = vunpack.c.l.b16 %v2202
        %v2290 = vunpack.c.h.b16 %v2202
        %v2291 = vunpack.c.l.b16 %v2203
        %v2292 = vunpack.c.h.b16 %v2203
        %v2293 = vunpack.c.l.b16 %v2204
        %v2294 = vunpack.c.h.b16 %v2204
        %v2295 = vunpack.c.l.b16 %v2205
        %v2296 = vunpack.c.h.b16 %v2205
        %v2297 = vunpack.c.l.b16 %v2206
        %v2298 = vunpack.c.h.b16 %v2206
        %v2299 = vunpack.c.l.b16 %v2207
        %v2300 = vunpack.c.h.b16 %v2207
        %v2301 = vunpack.c.l.b16 %v2208
        %v2302 = vunpack.c.h.b16 %v2208
        %v2303 = vunpack.c.l.b16 %v2209
        %v2304 = vunpack.c.h.b16 %v2209
        %v2305 = vunpack.c.l.b16 %v2210
        %v2306 = vunpack.c.h.b16 %v2210
        %v2307 = vunpack.c.l.b16 %v2211
        %v2308 = vunpack.c.h.b16 %v2211
        %v2309 = vunpack.c.l.b16 %v2212
        %v2310 = vunpack.c.h.b16 %v2212
        %v2311 = vunpack.c.l.b16 %v2213
        %v2312 = vunpack.c.h.b16 %v2213
        %v2313 = vunpack.c.l.b16 %v2214
        %v2314 = vunpack.c.h.b16 %v2214
        %v2315 = vunpack.c.l.b16 %v2215
        %v2316 = vunpack.c.h.b16 %v2215
        %v2317 = vunpack.c.l.b16 %v2216
        %v2318 = vunpack.c.h.b16 %v2216
        %v2319 = vunpack.c.l.b16 %v2217
        %v2320 = vunpack.c.h.b16 %v2217
        %v2321 = vunpack.c.l.b16 %v2218
        %v2322 = vunpack.c.h.b16 %v2218
        %v2323 = vunpack.c.l.b16 %v2219
        %v2324 = vunpack.c.h.b16 %v2219
        %v2325 = vunpack.c.l.b16 %v2220
        %v2326 = vunpack.c.h.b16 %v2220
        %v2327 = vunpack.c.l.b16 %v2221
        %v2328 = vunpack.c.h.b16 %v2221
        %v2329 = vunpack.c.l.b16 %v2222
        %v2330 = vunpack.c.h.b16 %v2222
        %v2331 = vunpack.c.l.b16 %v2223
        %v2332 = vunpack.c.h.b16 %v2223
        %v2333 = vunpack.c.l.b16 %v2224
        %v2334 = vunpack.c.h.b16 %v2224
        %v2335 = vunpack.c.l.b16 %v2225
        %v2336 = vunpack.c.h.b16 %v2225
        %v2337 = vunpack.c.l.b16 %v2226
        %v2338 = vunpack.c.h.b16 %v2226
        %v2339 = vunpack.c.l.b16 %v2227
        %v2340 = vunpack.c.h.b16 %v2227
        %v2341 = vunpack.c.l.b16 %v2228
        %v2342 = vunpack.c.h.b16 %v2228
        %v2343 = vunpack.c.l.b16 %v2229
        %v2344 = vunpack.c.h.b16 %v2229
        %v2345 = vunpack.c.l.b16 %v2230
        %v2346 = vunpack.c.h.b16 %v2230
        %v2347 = vunpack.c.l.b16 %v2231
        %v2348 = vunpack.c.h.b16 %v2231
        %v2349 = vunpack.c.l.b16 %v2232
        %v2350 = vunpack.c.h.b16 %v2232
        %v2351 = vpack.c.b16 %v2291, %v2287
        %v2352 = vpack.c.b16 %v2292, %v2288
        %v2353 = vpack.c.b16 %v2293, %v2289
        %v2354 = vpack.c.b16 %v2294, %v2290
        %v2355 = vpack.c.b16 %v2299, %v2295
        %v2356 = vpack.c.b16 %v2300, %v2296
        %v2357 = vpack.c.b16 %v2301, %v2297
        %v2358 = vpack.c.b16 %v2302, %v2298
        %v2359 = vpack.c.b16 %v2307, %v2303
        %v2360 = vpack.c.b16 %v2308, %v2304
        %v2361 = vpack.c.b16 %v2309, %v2305
        %v2362 = vpack.c.b16 %v2310, %v2306
        %v2363 = vpack.c.b16 %v2315, %v2311
        %v2364 = vpack.c.b16 %v2316, %v2312
        %v2365 = vpack.c.b16 %v2317, %v2313
        %v2366 = vpack.c.b16 %v2318, %v2314
        %v2367 = vpack.c.b16 %v2323, %v2319
        %v2368 = vpack.c.b16 %v2324, %v2320
        %v2369 = vpack.c.b16 %v2325, %v2321
        %v2370 = vpack.c.b16 %v2326, %v2322
        %v2371 = vpack.c.b16 %v2331, %v2327
        %v2372 = vpack.c.b16 %v2332, %v2328
        %v2373 = vpack.c.b16 %v2333, %v2329
        %v2374 = vpack.c.b16 %v2334, %v2330
        %v2375 = vpack.c.b16 %v2339, %v2335
        %v2376 = vpack.c.b16 %v2340, %v2336
        %v2377 = vpack.c.b16 %v2341, %v2337
        %v2378 = vpack.c.b16 %v2342, %v2338
        %v2379 = vpack.c.b16 %v2347, %v2343
        %v2380 = vpack.c.b16 %v2348, %v2344
        %v2381 = vpack.c.b16 %v2349, %v2345
        %v2382 = vpack.c.b16 %v2350, %v2346
        %2415 = vmatprep.subr.bf16.mxu0 %v2352
        %2416 = vmatpush1.bf16.msra.mxu0 %v2351
        %2417 = vmatprep.subr.bf16.mxu0 %v2356
        %2418 = vmatpush1.bf16.msra.mxu0 %v2355
        %2419 = vmatprep.subr.bf16.mxu0 %v2360
        %2420 = vmatpush1.bf16.msra.mxu0 %v2359
        %2421 = vmatprep.subr.bf16.mxu0 %v2364
        %2422 = vmatpush1.bf16.msra.mxu0 %v2363
        %2423 = vmatprep.subr.bf16.mxu0 %v2368
        %2424 = vmatpush1.bf16.msra.mxu0 %v2367
        %2425 = vmatprep.subr.bf16.mxu0 %v2372
        %2426 = vmatpush1.bf16.msra.mxu0 %v2371
        %2427 = vmatprep.subr.bf16.mxu0 %v2376
        %2428 = vmatpush1.bf16.msra.mxu0 %v2375
        %2429 = vmatprep.subr.bf16.mxu0 %v2380
        %2430 = vmatpush1.bf16.msra.mxu0 %v2379
        %2431 = vmatprep.subr.bf16.mxu0 0
        %2432 = vmatpush1.bf16.msra.mxu0 0
        %2433 = vmatprep.subr.bf16.mxu0 0
        %2434 = vmatpush1.bf16.msra.mxu0 0
        %2435 = vmatprep.subr.bf16.mxu0 0
        %2436 = vmatpush1.bf16.msra.mxu0 0
        %2437 = vmatprep.subr.bf16.mxu0 0
        %2438 = vmatpush1.bf16.msra.mxu0 0
        %2439 = vmatprep.subr.bf16.mxu0 0
        %2440 = vmatpush1.bf16.msra.mxu0 0
        %2441 = vmatprep.subr.bf16.mxu0 0
        %2442 = vmatpush1.bf16.msra.mxu0 0
        %2443 = vmatprep.subr.bf16.mxu0 0
        %2444 = vmatpush1.bf16.msra.mxu0 0
        %2445 = vmatprep.subr.bf16.mxu0 0
        %2446 = vmatpush1.bf16.msra.mxu0 0
        %2447 = vmatprep.mubr.bf16.mxu0 0
        %2448 = vmatmul.mubr.bf16.gmra.mrb[0].mxu0 %v2200
        %v2449 = vpop.f32.mrb[0].mxu0
        %v2450 = vadd.f32 %v2238, %v2449
        %v2451 = vpop.f32.mrb[0].mxu0
        %v2452 = vadd.f32 %v2242, %v2451
        %v2453 = vpop.f32.mrb[0].mxu0
        %v2454 = vpop.f32.mrb[0].mxu0
        %2455 = vdwg.mxu0
        %2456 = vmatprep.subr.bf16.mxu0 %v2354
        %2457 = vmatpush1.bf16.msra.mxu0 %v2353
        %2458 = vmatprep.subr.bf16.mxu0 %v2358
        %2459 = vmatpush1.bf16.msra.mxu0 %v2357
        %2460 = vmatprep.subr.bf16.mxu0 %v2362
        %2461 = vmatpush1.bf16.msra.mxu0 %v2361
        %2462 = vmatprep.subr.bf16.mxu0 %v2366
        %2463 = vmatpush1.bf16.msra.mxu0 %v2365
        %2464 = vmatprep.subr.bf16.mxu0 %v2370
        %2465 = vmatpush1.bf16.msra.mxu0 %v2369
        %2466 = vmatprep.subr.bf16.mxu0 %v2374
        %2467 = vmatpush1.bf16.msra.mxu0 %v2373
        %2468 = vmatprep.subr.bf16.mxu0 %v2378
        %2469 = vmatpush1.bf16.msra.mxu0 %v2377
        %2470 = vmatprep.subr.bf16.mxu0 %v2382
        %2471 = vmatpush1.bf16.msra.mxu0 %v2381
        %2472 = vmatprep.subr.bf16.mxu0 0
        %2473 = vmatpush1.bf16.msra.mxu0 0
        %2474 = vmatprep.subr.bf16.mxu0 0
        %2475 = vmatpush1.bf16.msra.mxu0 0
        %2476 = vmatprep.subr.bf16.mxu0 0
        %2477 = vmatpush1.bf16.msra.mxu0 0
        %2478 = vmatprep.subr.bf16.mxu0 0
        %2479 = vmatpush1.bf16.msra.mxu0 0
        %2480 = vmatprep.subr.bf16.mxu0 0
        %2481 = vmatpush1.bf16.msra.mxu0 0
        %2482 = vmatprep.subr.bf16.mxu0 0
        %2483 = vmatpush1.bf16.msra.mxu0 0
        %2484 = vmatprep.subr.bf16.mxu0 0
        %2485 = vmatpush1.bf16.msra.mxu0 0
        %2486 = vmatprep.subr.bf16.mxu0 0
        %2487 = vmatpush1.bf16.msra.mxu0 0
        %2488 = vmatprep.mubr.bf16.mxu0 0
        %2489 = vmatmul.mubr.bf16.gmra.mrb[0].mxu0 %v2200
        %v2490 = vpop.f32.mrb[0].mxu0
        %v2491 = vadd.f32 %v2246, %v2490
        %v2492 = vpop.f32.mrb[0].mxu0
        %v2493 = vadd.f32 %v2250, %v2492
        %v2494 = vpop.f32.mrb[0].mxu0
        %v2495 = vpop.f32.mrb[0].mxu0
        %2496 = vdwg.mxu0
        %v2497 = vmul.f32 %v2450, %v2450
        %v2498 = vmul.f32 %v2452, %v2452
        %v2499 = vmul.f32 %v2491, %v2491
        %v2500 = vmul.f32 %v2493, %v2493
        %v2501 = vmul.f32 %v2450, %v2497
        %v2502 = vmul.f32 %v2452, %v2498
        %v2503 = vmul.f32 %v2491, %v2499
        %v2504 = vmul.f32 %v2493, %v2500
        %v2505 = vmul.f32 %v2501, 0.044715
        %v2506 = vmul.f32 %v2502, 0.044715
        %v2507 = vmul.f32 %v2503, 0.044715
        %v2508 = vmul.f32 %v2504, 0.044715
        %v2509 = vadd.f32 %v2450, %v2505
        %v2510 = vadd.f32 %v2452, %v2506
        %v2511 = vadd.f32 %v2491, %v2507
        %v2512 = vadd.f32 %v2493, %v2508
        %v2513 = vmul.f32 %v2509, 0.7978846
        %v2514 = vmul.f32 %v2510, 0.7978846
        %v2515 = vmul.f32 %v2511, 0.7978846
        %v2516 = vmul.f32 %v2512, 0.7978846
        %v2517 = vtanh.pop %v2513
        %v2518 = vtanh.pop %v2514
        %v2519 = vtanh.pop %v2515
        %v2520 = vtanh.pop %v2516
        %v2521 = vadd.f32 %v2517, 1.0
        %v2522 = vadd.f32 %v2518, 1.0
        %v2523 = vadd.f32 %v2519, 1.0
        %v2524 = vadd.f32 %v2520, 1.0
        %v2525 = vmul.f32 %v2521, 0.5
        %v2526 = vmul.f32 %v2522, 0.5
        %v2527 = vmul.f32 %v2523, 0.5
        %v2528 = vmul.f32 %v2524, 0.5
        %v2529 = vmul.f32 %v2450, %v2525
        %v2530 = vmul.f32 %v2452, %v2526
        %v2531 = vmul.f32 %v2491, %v2527
        %v2532 = vmul.f32 %v2493, %v2528
        %v2533 = vpack.c.bf16 %v2529, %v2529
        %v2534 = vpack.c.bf16 %v2530, %v2530
        %v2535 = vpack.c.bf16 %v2531, %v2531
        %v2536 = vpack.c.bf16 %v2532, %v2532
        %v2537 = vld [vmem:[#allocation19] sm:$0xf]
        %v2538 = vld [vmem:[#allocation19 + $0x4] sm:$0xf]
        %v2539 = vld [vmem:[#allocation19 + $0x8] sm:$0xf]
        %v2540 = vld [vmem:[#allocation19 + $0xc] sm:$0xf]
        %v2541 = vld [vmem:[#allocation19 + $0x10] sm:$0xf]
        %v2542 = vld [vmem:[#allocation19 + $0x14] sm:$0xf]
        %v2543 = vld [vmem:[#allocation19 + $0x18] sm:$0xf]
        %v2544 = vld [vmem:[#allocation19 + $0x1c] sm:$0xf]
        %v2545 = vld [vmem:[#allocation19 + $0x20] sm:$0xf]
        %v2546 = vld [vmem:[#allocation19 + $0x24] sm:$0xf]
        %v2547 = vld [vmem:[#allocation19 + $0x28] sm:$0xf]
        %v2548 = vld [vmem:[#allocation19 + $0x2c] sm:$0xf]
        %v2549 = vld [vmem:[#allocation19 + $0x30] sm:$0xf]
        %v2550 = vld [vmem:[#allocation19 + $0x34] sm:$0xf]
        %v2551 = vld [vmem:[#allocation19 + $0x38] sm:$0xf]
        %v2552 = vld [vmem:[#allocation19 + $0x3c] sm:$0xf]
        %v2553 = vld [vmem:[#allocation19 + $0x40] sm:$0xf]
        %v2554 = vld [vmem:[#allocation19 + $0x44] sm:$0xf]
        %v2555 = vld [vmem:[#allocation19 + $0x48] sm:$0xf]
        %v2556 = vld [vmem:[#allocation19 + $0x4c] sm:$0xf]
        %v2557 = vld [vmem:[#allocation19 + $0x50] sm:$0xf]
        %v2558 = vld [vmem:[#allocation19 + $0x54] sm:$0xf]
        %v2559 = vld [vmem:[#allocation19 + $0x58] sm:$0xf]
        %v2560 = vld [vmem:[#allocation19 + $0x5c] sm:$0xf]
        %v2561 = vld [vmem:[#allocation19 + $0x60] sm:$0xf]
        %v2562 = vld [vmem:[#allocation19 + $0x64] sm:$0xf]
        %v2563 = vld [vmem:[#allocation19 + $0x68] sm:$0xf]
        %v2564 = vld [vmem:[#allocation19 + $0x6c] sm:$0xf]
        %v2565 = vld [vmem:[#allocation19 + $0x70] sm:$0xf]
        %v2566 = vld [vmem:[#allocation19 + $0x74] sm:$0xf]
        %v2567 = vld [vmem:[#allocation19 + $0x78] sm:$0xf]
        %v2568 = vld [vmem:[#allocation19 + $0x7c] sm:$0xf]
        %v2569 = vld [vmem:[#allocation19 + $0x80] sm:$0xf]
        %v2570 = vld [vmem:[#allocation19 + $0x84] sm:$0xf]
        %v2571 = vld [vmem:[#allocation19 + $0x88] sm:$0xf]
        %v2572 = vld [vmem:[#allocation19 + $0x8c] sm:$0xf]
        %v2573 = vld [vmem:[#allocation19 + $0x90] sm:$0xf]
        %v2574 = vld [vmem:[#allocation19 + $0x94] sm:$0xf]
        %v2575 = vld [vmem:[#allocation19 + $0x98] sm:$0xf]
        %v2576 = vld [vmem:[#allocation19 + $0x9c] sm:$0xf]
        %v2577 = vld [vmem:[#allocation19 + $0xa0] sm:$0xf]
        %v2578 = vld [vmem:[#allocation19 + $0xa4] sm:$0xf]
        %v2579 = vld [vmem:[#allocation19 + $0xa8] sm:$0xf]
        %v2580 = vld [vmem:[#allocation19 + $0xac] sm:$0xf]
        %v2581 = vld [vmem:[#allocation19 + $0xb0] sm:$0xf]
        %v2582 = vld [vmem:[#allocation19 + $0xb4] sm:$0xf]
        %v2583 = vld [vmem:[#allocation19 + $0xb8] sm:$0xf]
        %v2584 = vld [vmem:[#allocation19 + $0xbc] sm:$0xf]
        %v2585 = vld [vmem:[#allocation19 + $0xc0] sm:$0xf]
        %v2586 = vld [vmem:[#allocation19 + $0xc4] sm:$0xf]
        %v2587 = vld [vmem:[#allocation19 + $0xc8] sm:$0xf]
        %v2588 = vld [vmem:[#allocation19 + $0xcc] sm:$0xf]
        %v2589 = vld [vmem:[#allocation19 + $0xd0] sm:$0xf]
        %v2590 = vld [vmem:[#allocation19 + $0xd4] sm:$0xf]
        %v2591 = vld [vmem:[#allocation19 + $0xd8] sm:$0xf]
        %v2592 = vld [vmem:[#allocation19 + $0xdc] sm:$0xf]
        %v2593 = vld [vmem:[#allocation19 + $0xe0] sm:$0xf]
        %v2594 = vld [vmem:[#allocation19 + $0xe4] sm:$0xf]
        %v2595 = vld [vmem:[#allocation19 + $0xe8] sm:$0xf]
        %v2596 = vld [vmem:[#allocation19 + $0xec] sm:$0xf]
        %v2597 = vld [vmem:[#allocation19 + $0xf0] sm:$0xf]
        %v2598 = vld [vmem:[#allocation19 + $0xf4] sm:$0xf]
        %v2599 = vld [vmem:[#allocation19 + $0xf8] sm:$0xf]
        %v2600 = vld [vmem:[#allocation19 + $0xfc] sm:$0xf]
        %v2665 = vunpack.c.l.b16 %v2537
        %v2666 = vunpack.c.l.b16 %v2538
        %v2667 = vunpack.c.l.b16 %v2539
        %v2668 = vunpack.c.l.b16 %v2540
        %v2669 = vunpack.c.l.b16 %v2541
        %v2670 = vunpack.c.l.b16 %v2542
        %v2671 = vunpack.c.l.b16 %v2543
        %v2672 = vunpack.c.l.b16 %v2544
        %v2673 = vunpack.c.l.b16 %v2545
        %v2674 = vunpack.c.l.b16 %v2546
        %v2675 = vunpack.c.l.b16 %v2547
        %v2676 = vunpack.c.l.b16 %v2548
        %v2677 = vunpack.c.l.b16 %v2549
        %v2678 = vunpack.c.l.b16 %v2550
        %v2679 = vunpack.c.l.b16 %v2551
        %v2680 = vunpack.c.l.b16 %v2552
        %v2681 = vunpack.c.l.b16 %v2553
        %v2682 = vunpack.c.l.b16 %v2554
        %v2683 = vunpack.c.l.b16 %v2555
        %v2684 = vunpack.c.l.b16 %v2556
        %v2685 = vunpack.c.l.b16 %v2557
        %v2686 = vunpack.c.l.b16 %v2558
        %v2687 = vunpack.c.l.b16 %v2559
        %v2688 = vunpack.c.l.b16 %v2560
        %v2689 = vunpack.c.l.b16 %v2561
        %v2690 = vunpack.c.l.b16 %v2562
        %v2691 = vunpack.c.l.b16 %v2563
        %v2692 = vunpack.c.l.b16 %v2564
        %v2693 = vunpack.c.l.b16 %v2565
        %v2694 = vunpack.c.l.b16 %v2566
        %v2695 = vunpack.c.l.b16 %v2567
        %v2696 = vunpack.c.l.b16 %v2568
        %v2697 = vunpack.c.l.b16 %v2569
        %v2698 = vunpack.c.l.b16 %v2570
        %v2699 = vunpack.c.l.b16 %v2571
        %v2700 = vunpack.c.l.b16 %v2572
        %v2701 = vunpack.c.l.b16 %v2573
        %v2702 = vunpack.c.l.b16 %v2574
        %v2703 = vunpack.c.l.b16 %v2575
        %v2704 = vunpack.c.l.b16 %v2576
        %v2705 = vunpack.c.l.b16 %v2577
        %v2706 = vunpack.c.l.b16 %v2578
        %v2707 = vunpack.c.l.b16 %v2579
        %v2708 = vunpack.c.l.b16 %v2580
        %v2709 = vunpack.c.l.b16 %v2581
        %v2710 = vunpack.c.l.b16 %v2582
        %v2711 = vunpack.c.l.b16 %v2583
        %v2712 = vunpack.c.l.b16 %v2584
        %v2713 = vunpack.c.l.b16 %v2585
        %v2714 = vunpack.c.l.b16 %v2586
        %v2715 = vunpack.c.l.b16 %v2587
        %v2716 = vunpack.c.l.b16 %v2588
        %v2717 = vunpack.c.l.b16 %v2589
        %v2718 = vunpack.c.l.b16 %v2590
        %v2719 = vunpack.c.l.b16 %v2591
        %v2720 = vunpack.c.l.b16 %v2592
        %v2721 = vunpack.c.l.b16 %v2593
        %v2722 = vunpack.c.l.b16 %v2594
        %v2723 = vunpack.c.l.b16 %v2595
        %v2724 = vunpack.c.l.b16 %v2596
        %v2725 = vunpack.c.l.b16 %v2597
        %v2726 = vunpack.c.l.b16 %v2598
        %v2727 = vunpack.c.l.b16 %v2599
        %v2728 = vunpack.c.l.b16 %v2600
        %v2729 = vpack.c.b16 %v2666, %v2665
        %v2730 = vpack.c.b16 %v2668, %v2667
        %v2731 = vpack.c.b16 %v2670, %v2669
        %v2732 = vpack.c.b16 %v2672, %v2671
        %v2733 = vpack.c.b16 %v2674, %v2673
        %v2734 = vpack.c.b16 %v2676, %v2675
        %v2735 = vpack.c.b16 %v2678, %v2677
        %v2736 = vpack.c.b16 %v2680, %v2679
        %v2737 = vpack.c.b16 %v2682, %v2681
        %v2738 = vpack.c.b16 %v2684, %v2683
        %v2739 = vpack.c.b16 %v2686, %v2685
        %v2740 = vpack.c.b16 %v2688, %v2687
        %v2741 = vpack.c.b16 %v2690, %v2689
        %v2742 = vpack.c.b16 %v2692, %v2691
        %v2743 = vpack.c.b16 %v2694, %v2693
        %v2744 = vpack.c.b16 %v2696, %v2695
        %v2745 = vpack.c.b16 %v2698, %v2697
        %v2746 = vpack.c.b16 %v2700, %v2699
        %v2747 = vpack.c.b16 %v2702, %v2701
        %v2748 = vpack.c.b16 %v2704, %v2703
        %v2749 = vpack.c.b16 %v2706, %v2705
        %v2750 = vpack.c.b16 %v2708, %v2707
        %v2751 = vpack.c.b16 %v2710, %v2709
        %v2752 = vpack.c.b16 %v2712, %v2711
        %v2753 = vpack.c.b16 %v2714, %v2713
        %v2754 = vpack.c.b16 %v2716, %v2715
        %v2755 = vpack.c.b16 %v2718, %v2717
        %v2756 = vpack.c.b16 %v2720, %v2719
        %v2757 = vpack.c.b16 %v2722, %v2721
        %v2758 = vpack.c.b16 %v2724, %v2723
        %v2759 = vpack.c.b16 %v2726, %v2725
        %v2760 = vpack.c.b16 %v2728, %v2727
        %2793 = vmatprep.subr.bf16.mxu0 0
        %2794 = vmatpush1.bf16.msra.mxu0 %v2729
        %2795 = vmatprep.subr.bf16.mxu0 0
        %2796 = vmatpush1.bf16.msra.mxu0 %v2730
        %2797 = vmatprep.subr.bf16.mxu0 0
        %2798 = vmatpush1.bf16.msra.mxu0 %v2731
        %2799 = vmatprep.subr.bf16.mxu0 0
        %2800 = vmatpush1.bf16.msra.mxu0 %v2732
        %2801 = vmatprep.subr.bf16.mxu0 0
        %2802 = vmatpush1.bf16.msra.mxu0 %v2733
        %2803 = vmatprep.subr.bf16.mxu0 0
        %2804 = vmatpush1.bf16.msra.mxu0 %v2734
        %2805 = vmatprep.subr.bf16.mxu0 0
        %2806 = vmatpush1.bf16.msra.mxu0 %v2735
        %2807 = vmatprep.subr.bf16.mxu0 0
        %2808 = vmatpush1.bf16.msra.mxu0 %v2736
        %2809 = vmatprep.subr.bf16.mxu0 0
        %2810 = vmatpush1.bf16.msra.mxu0 %v2737
        %2811 = vmatprep.subr.bf16.mxu0 0
        %2812 = vmatpush1.bf16.msra.mxu0 %v2738
        %2813 = vmatprep.subr.bf16.mxu0 0
        %2814 = vmatpush1.bf16.msra.mxu0 %v2739
        %2815 = vmatprep.subr.bf16.mxu0 0
        %2816 = vmatpush1.bf16.msra.mxu0 %v2740
        %2817 = vmatprep.subr.bf16.mxu0 0
        %2818 = vmatpush1.bf16.msra.mxu0 %v2741
        %2819 = vmatprep.subr.bf16.mxu0 0
        %2820 = vmatpush1.bf16.msra.mxu0 %v2742
        %2821 = vmatprep.subr.bf16.mxu0 0
        %2822 = vmatpush1.bf16.msra.mxu0 %v2743
        %2823 = vmatprep.subr.bf16.mxu0 0
        %2824 = vmatpush1.bf16.msra.mxu0 %v2744
        %2825 = vmatprep.mubr.bf16.mxu0 %v2534
        %2826 = vmatmul.mubr.bf16.gmra.mrb[0].mxu0 %v2533
        %v2827 = vpop.f32.mrb[0].mxu0
        %v2828 = vadd.f32 0.0, %v2827
        %v2829 = vpop.f32.mrb[0].mxu0
        %v2830 = vpop.f32.mrb[0].mxu0
        %v2831 = vpop.f32.mrb[0].mxu0
        %2832 = vdwg.mxu0
        %2833 = vmatprep.subr.bf16.mxu0 0
        %2834 = vmatpush1.bf16.msra.mxu0 %v2745
        %2835 = vmatprep.subr.bf16.mxu0 0
        %2836 = vmatpush1.bf16.msra.mxu0 %v2746
        %2837 = vmatprep.subr.bf16.mxu0 0
        %2838 = vmatpush1.bf16.msra.mxu0 %v2747
        %2839 = vmatprep.subr.bf16.mxu0 0
        %2840 = vmatpush1.bf16.msra.mxu0 %v2748
        %2841 = vmatprep.subr.bf16.mxu0 0
        %2842 = vmatpush1.bf16.msra.mxu0 %v2749
        %2843 = vmatprep.subr.bf16.mxu0 0
        %2844 = vmatpush1.bf16.msra.mxu0 %v2750
        %2845 = vmatprep.subr.bf16.mxu0 0
        %2846 = vmatpush1.bf16.msra.mxu0 %v2751
        %2847 = vmatprep.subr.bf16.mxu0 0
        %2848 = vmatpush1.bf16.msra.mxu0 %v2752
        %2849 = vmatprep.subr.bf16.mxu0 0
        %2850 = vmatpush1.bf16.msra.mxu0 %v2753
        %2851 = vmatprep.subr.bf16.mxu0 0
        %2852 = vmatpush1.bf16.msra.mxu0 %v2754
        %2853 = vmatprep.subr.bf16.mxu0 0
        %2854 = vmatpush1.bf16.msra.mxu0 %v2755
        %2855 = vmatprep.subr.bf16.mxu0 0
        %2856 = vmatpush1.bf16.msra.mxu0 %v2756
        %2857 = vmatprep.subr.bf16.mxu0 0
        %2858 = vmatpush1.bf16.msra.mxu0 %v2757
        %2859 = vmatprep.subr.bf16.mxu0 0
        %2860 = vmatpush1.bf16.msra.mxu0 %v2758
        %2861 = vmatprep.subr.bf16.mxu0 0
        %2862 = vmatpush1.bf16.msra.mxu0 %v2759
        %2863 = vmatprep.subr.bf16.mxu0 0
        %2864 = vmatpush1.bf16.msra.mxu0 %v2760
        %2865 = vmatprep.mubr.bf16.mxu0 %v2536
        %2866 = vmatmul.mubr.bf16.gmra.mrb[0].mxu0 %v2535
        %v2867 = vpop.f32.mrb[0].mxu0
        %v2868 = vadd.f32 %v2828, %v2867
        %v2869 = vpop.f32.mrb[0].mxu0
        %v2870 = vpop.f32.mrb[0].mxu0
        %v2871 = vpop.f32.mrb[0].mxu0
        %2872 = vdwg.mxu0
        %v2873 = vadd.f32 %v2199, %v2868
        %v2874 = vld [vmem:[#allocation20] sm:$0x1]
        %v2876 = vlaneseq
        %v2877 = vshrl.u32 %v2876, 7
        %v2878 = vsub.s32 0, %v2877
        %v2879 = vrot.slane %v2874, %v2878
        %v2881 = vadd.f32 %v2873, %v2879
        %v2882 = vld [vmem:[#allocation22] sm:$0x1]
        %v2883 = vld [vmem:[#allocation23] sm:$0x1]
        %2884 = vadd.xlane.f32.xlu0 %v2881
        %v2885 = vpop.xlane.xlu0 %2884
        %v2886 = vmul.f32 %v2885, %v876
        %v2887 = vsub.f32 %v2881, %v2886
        %v2888 = vmul.f32 %v2887, %v2887
        %2889 = vadd.xlane.f32.xlu0 %v2888
        %v2890 = vpop.xlane.xlu0 %2889
        %v2891 = vmul.f32 %v2890, %v876
        %v2892 = vadd.f32 %v2891, 1e-12
        %v2893 = vrsqrt.pop %v2892
        %v2894 = vmul.f32 %v2887, %v2893
        %v2896 = vlaneseq
        %v2897 = vshrl.u32 %v2896, 7
        %v2898 = vsub.s32 0, %v2897
        %v2899 = vrot.slane %v2882, %v2898
        %v2901 = vmul.f32 %v2894, %v2899
        %v2903 = vlaneseq
        %v2904 = vshrl.u32 %v2903, 7
        %v2905 = vsub.s32 0, %v2904
        %v2906 = vrot.slane %v2883, %v2905
        %v2908 = vadd.f32 %v2901, %v2906
        %v2909 = vpack.c.bf16 %v2908, %v2908
        %s2910 = scalar_lea.vmem [#allocation8], 192
        %v2911 = vld [vmem:[%s2910] sm:$0xff]
        %v2912 = vld [vmem:[%s2910 + $0x8] sm:$0xf]
        %v2913 = vld [vmem:[%s2910 + $0xc] sm:$0xff]
        %v2914 = vld [vmem:[%s2910 + $0x14] sm:$0xf]
        %v2915 = vld [vmem:[%s2910 + $0x18] sm:$0xff]
        %v2916 = vld [vmem:[%s2910 + $0x20] sm:$0xf]
        %v2917 = vld [vmem:[%s2910 + $0x24] sm:$0xff]
        %v2918 = vld [vmem:[%s2910 + $0x2c] sm:$0xf]
        %v2919 = vld [vmem:[%s2910 + $0x30] sm:$0xff]
        %v2920 = vld [vmem:[%s2910 + $0x38] sm:$0xf]
        %v2921 = vld [vmem:[%s2910 + $0x3c] sm:$0xff]
        %v2922 = vld [vmem:[%s2910 + $0x44] sm:$0xf]
        %v2923 = vld [vmem:[%s2910 + $0x48] sm:$0xff]
        %v2924 = vld [vmem:[%s2910 + $0x50] sm:$0xf]
        %v2925 = vld [vmem:[%s2910 + $0x54] sm:$0xff]
        %v2926 = vld [vmem:[%s2910 + $0x5c] sm:$0xf]
        %v2927 = vld [vmem:[%s2910 + $0x60] sm:$0xff]
        %v2928 = vld [vmem:[%s2910 + $0x68] sm:$0xf]
        %v2929 = vld [vmem:[%s2910 + $0x6c] sm:$0xff]
        %v2930 = vld [vmem:[%s2910 + $0x74] sm:$0xf]
        %v2931 = vld [vmem:[%s2910 + $0x78] sm:$0xff]
        %v2932 = vld [vmem:[%s2910 + $0x80] sm:$0xf]
        %v2933 = vld [vmem:[%s2910 + $0x84] sm:$0xff]
        %v2934 = vld [vmem:[%s2910 + $0x8c] sm:$0xf]
        %v2935 = vld [vmem:[%s2910 + $0x90] sm:$0xff]
        %v2936 = vld [vmem:[%s2910 + $0x98] sm:$0xf]
        %v2937 = vld [vmem:[%s2910 + $0x9c] sm:$0xff]
        %v2938 = vld [vmem:[%s2910 + $0xa4] sm:$0xf]
        %v2939 = vld [vmem:[%s2910 + $0xa8] sm:$0xff]
        %v2940 = vld [vmem:[%s2910 + $0xb0] sm:$0xf]
        %v2941 = vld [vmem:[%s2910 + $0xb4] sm:$0xff]
        %v2942 = vld [vmem:[%s2910 + $0xbc] sm:$0xf]
        %s2943 = scalar_lea.vmem [#allocation10], 3
        %v2944 = vld [vmem:[%s2943] sm:$0x7]
        %v2946 = vlaneseq
        %v2947 = vshrl.u32 %v2946, 7
        %v2948 = vsub.s32 0, %v2947
        %v2949 = vrot.slane %v2944, %v2948
        %v2950 = vlaneseq
        %v2951 = vshrl.u32 %v2950, 7
        %v2952 = vsub.s32 1, %v2951
        %v2953 = vrot.slane %v2944, %v2952
        %v2954 = vlaneseq
        %v2955 = vshrl.u32 %v2954, 7
        %v2956 = vsub.s32 2, %v2955
        %v2957 = vrot.slane %v2944, %v2956
        %v2993 = vunpack.c.l.b16 %v2911
        %v2994 = vunpack.c.h.b16 %v2911
        %v2995 = vunpack.c.l.b16 %v2912
        %v2996 = vunpack.c.l.b16 %v2913
        %v2997 = vunpack.c.h.b16 %v2913
        %v2998 = vunpack.c.l.b16 %v2914
        %v2999 = vunpack.c.l.b16 %v2915
        %v3000 = vunpack.c.h.b16 %v2915
        %v3001 = vunpack.c.l.b16 %v2916
        %v3002 = vunpack.c.l.b16 %v2917
        %v3003 = vunpack.c.h.b16 %v2917
        %v3004 = vunpack.c.l.b16 %v2918
        %v3005 = vunpack.c.l.b16 %v2919
        %v3006 = vunpack.c.h.b16 %v2919
        %v3007 = vunpack.c.l.b16 %v2920
        %v3008 = vunpack.c.l.b16 %v2921
        %v3009 = vunpack.c.h.b16 %v2921
        %v3010 = vunpack.c.l.b16 %v2922
        %v3011 = vunpack.c.l.b16 %v2923
        %v3012 = vunpack.c.h.b16 %v2923
        %v3013 = vunpack.c.l.b16 %v2924
        %v3014 = vunpack.c.l.b16 %v2925
        %v3015 = vunpack.c.h.b16 %v2925
        %v3016 = vunpack.c.l.b16 %v2926
        %v3017 = vunpack.c.l.b16 %v2927
        %v3018 = vunpack.c.h.b16 %v2927
        %v3019 = vunpack.c.l.b16 %v2928
        %v3020 = vunpack.c.l.b16 %v2929
        %v3021 = vunpack.c.h.b16 %v2929
        %v3022 = vunpack.c.l.b16 %v2930
        %v3023 = vunpack.c.l.b16 %v2931
        %v3024 = vunpack.c.h.b16 %v2931
        %v3025 = vunpack.c.l.b16 %v2932
        %v3026 = vunpack.c.l.b16 %v2933
        %v3027 = vunpack.c.h.b16 %v2933
        %v3028 = vunpack.c.l.b16 %v2934
        %v3029 = vunpack.c.l.b16 %v2935
        %v3030 = vunpack.c.h.b16 %v2935
        %v3031 = vunpack.c.l.b16 %v2936
        %v3032 = vunpack.c.l.b16 %v2937
        %v3033 = vunpack.c.h.b16 %v2937
        %v3034 = vunpack.c.l.b16 %v2938
        %v3035 = vunpack.c.l.b16 %v2939
        %v3036 = vunpack.c.h.b16 %v2939
        %v3037 = vunpack.c.l.b16 %v2940
        %v3038 = vunpack.c.l.b16 %v2941
        %v3039 = vunpack.c.h.b16 %v2941
        %v3040 = vunpack.c.l.b16 %v2942
        %v3041 = vpack.c.b16 %v2996, %v2993
        %v3042 = vpack.c.b16 %v2997, %v2994
        %v3043 = vpack.c.b16 %v2998, %v2995
        %v3044 = vpack.c.b16 %v3002, %v2999
        %v3045 = vpack.c.b16 %v3003, %v3000
        %v3046 = vpack.c.b16 %v3004, %v3001
        %v3047 = vpack.c.b16 %v3008, %v3005
        %v3048 = vpack.c.b16 %v3009, %v3006
        %v3049 = vpack.c.b16 %v3010, %v3007
        %v3050 = vpack.c.b16 %v3014, %v3011
        %v3051 = vpack.c.b16 %v3015, %v3012
        %v3052 = vpack.c.b16 %v3016, %v3013
        %v3053 = vpack.c.b16 %v3020, %v3017
        %v3054 = vpack.c.b16 %v3021, %v3018
        %v3055 = vpack.c.b16 %v3022, %v3019
        %v3056 = vpack.c.b16 %v3026, %v3023
        %v3057 = vpack.c.b16 %v3027, %v3024
        %v3058 = vpack.c.b16 %v3028, %v3025
        %v3059 = vpack.c.b16 %v3032, %v3029
        %v3060 = vpack.c.b16 %v3033, %v3030
        %v3061 = vpack.c.b16 %v3034, %v3031
        %v3062 = vpack.c.b16 %v3038, %v3035
        %v3063 = vpack.c.b16 %v3039, %v3036
        %v3064 = vpack.c.b16 %v3040, %v3037
        %3089 = vmatprep.subr.bf16.mxu0 %v3042
        %3090 = vmatpush1.bf16.msra.mxu0 %v3041
        %3091 = vmatprep.subr.bf16.mxu0 %v3045
        %3092 = vmatpush1.bf16.msra.mxu0 %v3044
        %3093 = vmatprep.subr.bf16.mxu0 %v3048
        %3094 = vmatpush1.bf16.msra.mxu0 %v3047
        %3095 = vmatprep.subr.bf16.mxu0 %v3051
        %3096 = vmatpush1.bf16.msra.mxu0 %v3050
        %3097 = vmatprep.subr.bf16.mxu0 %v3054
        %3098 = vmatpush1.bf16.msra.mxu0 %v3053
        %3099 = vmatprep.subr.bf16.mxu0 %v3057
        %3100 = vmatpush1.bf16.msra.mxu0 %v3056
        %3101 = vmatprep.subr.bf16.mxu0 %v3060
        %3102 = vmatpush1.bf16.msra.mxu0 %v3059
        %3103 = vmatprep.subr.bf16.mxu0 %v3063
        %3104 = vmatpush1.bf16.msra.mxu0 %v3062
        %3105 = vmatprep.subr.bf16.mxu0 0
        %3106 = vmatpush1.bf16.msra.mxu0 0
        %3107 = vmatprep.subr.bf16.mxu0 0
        %3108 = vmatpush1.bf16.msra.mxu0 0
        %3109 = vmatprep.subr.bf16.mxu0 0
        %3110 = vmatpush1.bf16.msra.mxu0 0
        %3111 = vmatprep.subr.bf16.mxu0 0
        %3112 = vmatpush1.bf16.msra.mxu0 0
        %3113 = vmatprep.subr.bf16.mxu0 0
        %3114 = vmatpush1.bf16.msra.mxu0 0
        %3115 = vmatprep.subr.bf16.mxu0 0
        %3116 = vmatpush1.bf16.msra.mxu0 0
        %3117 = vmatprep.subr.bf16.mxu0 0
        %3118 = vmatpush1.bf16.msra.mxu0 0
        %3119 = vmatprep.subr.bf16.mxu0 0
        %3120 = vmatpush1.bf16.msra.mxu0 0
        %3121 = vmatprep.mubr.bf16.mxu0 0
        %3122 = vmatmul.mubr.bf16.gmra.mrb[0].mxu0 %v2909
        %v3123 = vpop.f32.mrb[0].mxu0
        %v3124 = vadd.f32 %v2949, %v3123
        %v3125 = vpop.f32.mrb[0].mxu0
        %v3126 = vadd.f32 %v2953, %v3125
        %v3127 = vpop.f32.mrb[0].mxu0
        %v3128 = vpop.f32.mrb[0].mxu0
        %3129 = vdwg.mxu0
        %3130 = vmatprep.subr.bf16.mxu0 0
        %3131 = vmatpush1.bf16.msra.mxu0 %v3043
        %3132 = vmatprep.subr.bf16.mxu0 0
        %3133 = vmatpush1.bf16.msra.mxu0 %v3046
        %3134 = vmatprep.subr.bf16.mxu0 0
        %3135 = vmatpush1.bf16.msra.mxu0 %v3049
        %3136 = vmatprep.subr.bf16.mxu0 0
        %3137 = vmatpush1.bf16.msra.mxu0 %v3052
        %3138 = vmatprep.subr.bf16.mxu0 0
        %3139 = vmatpush1.bf16.msra.mxu0 %v3055
        %3140 = vmatprep.subr.bf16.mxu0 0
        %3141 = vmatpush1.bf16.msra.mxu0 %v3058
        %3142 = vmatprep.subr.bf16.mxu0 0
        %3143 = vmatpush1.bf16.msra.mxu0 %v3061
        %3144 = vmatprep.subr.bf16.mxu0 0
        %3145 = vmatpush1.bf16.msra.mxu0 %v3064
        %3146 = vmatprep.subr.bf16.mxu0 0
        %3147 = vmatpush1.bf16.msra.mxu0 0
        %3148 = vmatprep.subr.bf16.mxu0 0
        %3149 = vmatpush1.bf16.msra.mxu0 0
        %3150 = vmatprep.subr.bf16.mxu0 0
        %3151 = vmatpush1.bf16.msra.mxu0 0
        %3152 = vmatprep.subr.bf16.mxu0 0
        %3153 = vmatpush1.bf16.msra.mxu0 0
        %3154 = vmatprep.subr.bf16.mxu0 0
        %3155 = vmatpush1.bf16.msra.mxu0 0
        %3156 = vmatprep.subr.bf16.mxu0 0
        %3157 = vmatpush1.bf16.msra.mxu0 0
        %3158 = vmatprep.subr.bf16.mxu0 0
        %3159 = vmatpush1.bf16.msra.mxu0 0
        %3160 = vmatprep.subr.bf16.mxu0 0
        %3161 = vmatpush1.bf16.msra.mxu0 0
        %3162 = vmatprep.mubr.bf16.mxu0 0
        %3163 = vmatmul.mubr.bf16.gmra.mrb[0].mxu0 %v2909
        %v3164 = vpop.f32.mrb[0].mxu0
        %v3165 = vadd.f32 %v2957, %v3164
        %v3166 = vpop.f32.mrb[0].mxu0
        %v3167 = vpop.f32.mrb[0].mxu0
        %v3168 = vpop.f32.mrb[0].mxu0
        %3169 = vdwg.mxu0
        %v3170 = vpack.c.bf16 %v3124, %v3124
        %3172 = vrot.lane.b32.xlu0 %v3170, 96
        %v3173 = vpop.permute.xlu0 %3172
        %3174 = vrot.lane.b32.xlu0 %v3170, 64
        %v3175 = vpop.permute.xlu0 %3174
        %3176 = vrot.lane.b32.xlu0 %v3170, 32
        %v3177 = vpop.permute.xlu0 %3176
        %v3178 = vpack.c.bf16 %v3126, %v3126
        %3180 = vrot.lane.b32.xlu0 %v3178, 96
        %v3181 = vpop.permute.xlu0 %3180
        %3183 = vrot.lane.b32.xlu0 %v3178, 64
        %v3184 = vpop.permute.xlu0 %3183
        %3186 = vrot.lane.b32.xlu0 %v3178, 32
        %v3187 = vpop.permute.xlu0 %3186
        %v3189 = vpack.c.bf16 %v3165, %v3165
        %3191 = vrot.lane.b32.xlu0 %v3189, 96
        %v3192 = vpop.permute.xlu0 %3191
        %3194 = vrot.lane.b32.xlu0 %v3189, 64
        %v3195 = vpop.permute.xlu0 %3194
        %3197 = vrot.lane.b32.xlu0 %v3189, 32
        %v3198 = vpop.permute.xlu0 %3197
        %3200 = vxpose.xlu0.c.b16.start [1/8] %v3178, 128
        %3201 = vxpose.xlu0.c.b16.cont [2/8] 0, 128
        %3202 = vxpose.xlu0.c.b16.cont [3/8] 0, 128
        %3203 = vxpose.xlu0.c.b16.cont [4/8] 0, 128
        %3204 = vxpose.xlu0.c.b16.cont [5/8] 0, 128
        %3205 = vxpose.xlu0.c.b16.cont [6/8] 0, 128
        %3206 = vxpose.xlu0.c.b16.cont [7/8] 0, 128
        %3207 = vxpose.xlu0.c.b16.end [8/8] 0, 128
        %v3208 = vpop.trf.xlu0
        %v3209 = vpop.trf.xlu0
        %v3210 = vpop.trf.xlu0
        %v3211 = vpop.trf.xlu0
        %v3212 = vpop.trf.xlu0
        %v3213 = vpop.trf.xlu0
        %v3214 = vpop.trf.xlu0
        %v3215 = vpop.trf.xlu0
        %3216 = vxpose.xlu0.c.b16.start [1/8] %v3181, 128
        %3217 = vxpose.xlu0.c.b16.cont [2/8] 0, 128
        %3218 = vxpose.xlu0.c.b16.cont [3/8] 0, 128
        %3219 = vxpose.xlu0.c.b16.cont [4/8] 0, 128
        %3220 = vxpose.xlu0.c.b16.cont [5/8] 0, 128
        %3221 = vxpose.xlu0.c.b16.cont [6/8] 0, 128
        %3222 = vxpose.xlu0.c.b16.cont [7/8] 0, 128
        %3223 = vxpose.xlu0.c.b16.end [8/8] 0, 128
        %v3224 = vpop.trf.xlu0
        %v3225 = vpop.trf.xlu0
        %v3226 = vpop.trf.xlu0
        %v3227 = vpop.trf.xlu0
        %v3228 = vpop.trf.xlu0
        %v3229 = vpop.trf.xlu0
        %v3230 = vpop.trf.xlu0
        %v3231 = vpop.trf.xlu0
        %3232 = vxpose.xlu0.c.b16.start [1/8] %v3184, 128
        %3233 = vxpose.xlu0.c.b16.cont [2/8] 0, 128
        %3234 = vxpose.xlu0.c.b16.cont [3/8] 0, 128
        %3235 = vxpose.xlu0.c.b16.cont [4/8] 0, 128
        %3236 = vxpose.xlu0.c.b16.cont [5/8] 0, 128
        %3237 = vxpose.xlu0.c.b16.cont [6/8] 0, 128
        %3238 = vxpose.xlu0.c.b16.cont [7/8] 0, 128
        %3239 = vxpose.xlu0.c.b16.end [8/8] 0, 128
        %v3240 = vpop.trf.xlu0
        %v3241 = vpop.trf.xlu0
        %v3242 = vpop.trf.xlu0
        %v3243 = vpop.trf.xlu0
        %v3244 = vpop.trf.xlu0
        %v3245 = vpop.trf.xlu0
        %v3246 = vpop.trf.xlu0
        %v3247 = vpop.trf.xlu0
        %3248 = vxpose.xlu0.c.b16.start [1/8] %v3187, 128
        %3249 = vxpose.xlu0.c.b16.cont [2/8] 0, 128
        %3250 = vxpose.xlu0.c.b16.cont [3/8] 0, 128
        %3251 = vxpose.xlu0.c.b16.cont [4/8] 0, 128
        %3252 = vxpose.xlu0.c.b16.cont [5/8] 0, 128
        %3253 = vxpose.xlu0.c.b16.cont [6/8] 0, 128
        %3254 = vxpose.xlu0.c.b16.cont [7/8] 0, 128
        %3255 = vxpose.xlu0.c.b16.end [8/8] 0, 128
        %v3256 = vpop.trf.xlu0
        %v3257 = vpop.trf.xlu0
        %v3258 = vpop.trf.xlu0
        %v3259 = vpop.trf.xlu0
        %v3260 = vpop.trf.xlu0
        %v3261 = vpop.trf.xlu0
        %v3262 = vpop.trf.xlu0
        %v3263 = vpop.trf.xlu0
        %v3265 = vsel %vm1260, %v3170, 0
        %3267 = vmatprep.subr.bf16.mxu0 0
        %3268 = vmatpush1.bf16.msra.mxu0 %v3208
        %3269 = vmatprep.subr.bf16.mxu0 0
        %3270 = vmatpush1.bf16.msra.mxu0 %v3209
        %3271 = vmatprep.subr.bf16.mxu0 0
        %3272 = vmatpush1.bf16.msra.mxu0 0
        %3273 = vmatprep.subr.bf16.mxu0 0
        %3274 = vmatpush1.bf16.msra.mxu0 0
        %3275 = vmatprep.subr.bf16.mxu0 0
        %3276 = vmatpush1.bf16.msra.mxu0 0
        %3277 = vmatprep.subr.bf16.mxu0 0
        %3278 = vmatpush1.bf16.msra.mxu0 0
        %3279 = vmatprep.subr.bf16.mxu0 0
        %3280 = vmatpush1.bf16.msra.mxu0 0
        %3281 = vmatprep.subr.bf16.mxu0 0
        %3282 = vmatpush1.bf16.msra.mxu0 0
        %3283 = vmatprep.subr.bf16.mxu0 0
        %3284 = vmatpush1.bf16.msra.mxu0 0
        %3285 = vmatprep.subr.bf16.mxu0 0
        %3286 = vmatpush1.bf16.msra.mxu0 0
        %3287 = vmatprep.subr.bf16.mxu0 0
        %3288 = vmatpush1.bf16.msra.mxu0 0
        %3289 = vmatprep.subr.bf16.mxu0 0
        %3290 = vmatpush1.bf16.msra.mxu0 0
        %3291 = vmatprep.subr.bf16.mxu0 0
        %3292 = vmatpush1.bf16.msra.mxu0 0
        %3293 = vmatprep.subr.bf16.mxu0 0
        %3294 = vmatpush1.bf16.msra.mxu0 0
        %3295 = vmatprep.subr.bf16.mxu0 0
        %3296 = vmatpush1.bf16.msra.mxu0 0
        %3297 = vmatprep.subr.bf16.mxu0 0
        %3298 = vmatpush1.bf16.msra.mxu0 0
        %3299 = vmatprep.mubr.bf16.mxu0 0
        %3300 = vmatmul.mubr.bf16.gmra.mrb[0].mxu0 %v3265
        %v3301 = vpop.f32.mrb[0].mxu0
        %v3302 = vadd.f32 %v1194, %v3301
        %v3303 = vpop.f32.mrb[0].mxu0
        %v3304 = vpop.f32.mrb[0].mxu0
        %v3305 = vpop.f32.mrb[0].mxu0
        %3306 = vdwg.mxu0
        %v3308 = vsel %vm1260, %v3173, 0
        %3310 = vmatprep.subr.bf16.mxu0 0
        %3311 = vmatpush1.bf16.msra.mxu0 %v3224
        %3312 = vmatprep.subr.bf16.mxu0 0
        %3313 = vmatpush1.bf16.msra.mxu0 %v3225
        %3314 = vmatprep.subr.bf16.mxu0 0
        %3315 = vmatpush1.bf16.msra.mxu0 0
        %3316 = vmatprep.subr.bf16.mxu0 0
        %3317 = vmatpush1.bf16.msra.mxu0 0
        %3318 = vmatprep.subr.bf16.mxu0 0
        %3319 = vmatpush1.bf16.msra.mxu0 0
        %3320 = vmatprep.subr.bf16.mxu0 0
        %3321 = vmatpush1.bf16.msra.mxu0 0
        %3322 = vmatprep.subr.bf16.mxu0 0
        %3323 = vmatpush1.bf16.msra.mxu0 0
        %3324 = vmatprep.subr.bf16.mxu0 0
        %3325 = vmatpush1.bf16.msra.mxu0 0
        %3326 = vmatprep.subr.bf16.mxu0 0
        %3327 = vmatpush1.bf16.msra.mxu0 0
        %3328 = vmatprep.subr.bf16.mxu0 0
        %3329 = vmatpush1.bf16.msra.mxu0 0
        %3330 = vmatprep.subr.bf16.mxu0 0
        %3331 = vmatpush1.bf16.msra.mxu0 0
        %3332 = vmatprep.subr.bf16.mxu0 0
        %3333 = vmatpush1.bf16.msra.mxu0 0
        %3334 = vmatprep.subr.bf16.mxu0 0
        %3335 = vmatpush1.bf16.msra.mxu0 0
        %3336 = vmatprep.subr.bf16.mxu0 0
        %3337 = vmatpush1.bf16.msra.mxu0 0
        %3338 = vmatprep.subr.bf16.mxu0 0
        %3339 = vmatpush1.bf16.msra.mxu0 0
        %3340 = vmatprep.subr.bf16.mxu0 0
        %3341 = vmatpush1.bf16.msra.mxu0 0
        %3342 = vmatprep.mubr.bf16.mxu0 0
        %3343 = vmatmul.mubr.bf16.gmra.mrb[0].mxu0 %v3308
        %v3344 = vpop.f32.mrb[0].mxu0
        %v3345 = vadd.f32 %v1194, %v3344
        %v3346 = vpop.f32.mrb[0].mxu0
        %v3347 = vpop.f32.mrb[0].mxu0
        %v3348 = vpop.f32.mrb[0].mxu0
        %3349 = vdwg.mxu0
        %v3351 = vsel %vm1260, %v3175, 0
        %3353 = vmatprep.subr.bf16.mxu0 0
        %3354 = vmatpush1.bf16.msra.mxu0 %v3240
        %3355 = vmatprep.subr.bf16.mxu0 0
        %3356 = vmatpush1.bf16.msra.mxu0 %v3241
        %3357 = vmatprep.subr.bf16.mxu0 0
        %3358 = vmatpush1.bf16.msra.mxu0 0
        %3359 = vmatprep.subr.bf16.mxu0 0
        %3360 = vmatpush1.bf16.msra.mxu0 0
        %3361 = vmatprep.subr.bf16.mxu0 0
        %3362 = vmatpush1.bf16.msra.mxu0 0
        %3363 = vmatprep.subr.bf16.mxu0 0
        %3364 = vmatpush1.bf16.msra.mxu0 0
        %3365 = vmatprep.subr.bf16.mxu0 0
        %3366 = vmatpush1.bf16.msra.mxu0 0
        %3367 = vmatprep.subr.bf16.mxu0 0
        %3368 = vmatpush1.bf16.msra.mxu0 0
        %3369 = vmatprep.subr.bf16.mxu0 0
        %3370 = vmatpush1.bf16.msra.mxu0 0
        %3371 = vmatprep.subr.bf16.mxu0 0
        %3372 = vmatpush1.bf16.msra.mxu0 0
        %3373 = vmatprep.subr.bf16.mxu0 0
        %3374 = vmatpush1.bf16.msra.mxu0 0
        %3375 = vmatprep.subr.bf16.mxu0 0
        %3376 = vmatpush1.bf16.msra.mxu0 0
        %3377 = vmatprep.subr.bf16.mxu0 0
        %3378 = vmatpush1.bf16.msra.mxu0 0
        %3379 = vmatprep.subr.bf16.mxu0 0
        %3380 = vmatpush1.bf16.msra.mxu0 0
        %3381 = vmatprep.subr.bf16.mxu0 0
        %3382 = vmatpush1.bf16.msra.mxu0 0
        %3383 = vmatprep.subr.bf16.mxu0 0
        %3384 = vmatpush1.bf16.msra.mxu0 0
        %3385 = vmatprep.mubr.bf16.mxu0 0
        %3386 = vmatmul.mubr.bf16.gmra.mrb[0].mxu0 %v3351
        %v3387 = vpop.f32.mrb[0].mxu0
        %v3388 = vadd.f32 %v1194, %v3387
        %v3389 = vpop.f32.mrb[0].mxu0
        %v3390 = vpop.f32.mrb[0].mxu0
        %v3391 = vpop.f32.mrb[0].mxu0
        %3392 = vdwg.mxu0
        %v3394 = vsel %vm1260, %v3177, 0
        %3396 = vmatprep.subr.bf16.mxu0 0
        %3397 = vmatpush1.bf16.msra.mxu0 %v3256
        %3398 = vmatprep.subr.bf16.mxu0 0
        %3399 = vmatpush1.bf16.msra.mxu0 %v3257
        %3400 = vmatprep.subr.bf16.mxu0 0
        %3401 = vmatpush1.bf16.msra.mxu0 0
        %3402 = vmatprep.subr.bf16.mxu0 0
        %3403 = vmatpush1.bf16.msra.mxu0 0
        %3404 = vmatprep.subr.bf16.mxu0 0
        %3405 = vmatpush1.bf16.msra.mxu0 0
        %3406 = vmatprep.subr.bf16.mxu0 0
        %3407 = vmatpush1.bf16.msra.mxu0 0
        %3408 = vmatprep.subr.bf16.mxu0 0
        %3409 = vmatpush1.bf16.msra.mxu0 0
        %3410 = vmatprep.subr.bf16.mxu0 0
        %3411 = vmatpush1.bf16.msra.mxu0 0
        %3412 = vmatprep.subr.bf16.mxu0 0
        %3413 = vmatpush1.bf16.msra.mxu0 0
        %3414 = vmatprep.subr.bf16.mxu0 0
        %3415 = vmatpush1.bf16.msra.mxu0 0
        %3416 = vmatprep.subr.bf16.mxu0 0
        %3417 = vmatpush1.bf16.msra.mxu0 0
        %3418 = vmatprep.subr.bf16.mxu0 0
        %3419 = vmatpush1.bf16.msra.mxu0 0
        %3420 = vmatprep.subr.bf16.mxu0 0
        %3421 = vmatpush1.bf16.msra.mxu0 0
        %3422 = vmatprep.subr.bf16.mxu0 0
        %3423 = vmatpush1.bf16.msra.mxu0 0
        %3424 = vmatprep.subr.bf16.mxu0 0
        %3425 = vmatpush1.bf16.msra.mxu0 0
        %3426 = vmatprep.subr.bf16.mxu0 0
        %3427 = vmatpush1.bf16.msra.mxu0 0
        %3428 = vmatprep.mubr.bf16.mxu0 0
        %3429 = vmatmul.mubr.bf16.gmra.mrb[0].mxu0 %v3394
        %v3430 = vpop.f32.mrb[0].mxu0
        %v3431 = vadd.f32 %v1194, %v3430
        %v3432 = vpop.f32.mrb[0].mxu0
        %v3433 = vpop.f32.mrb[0].mxu0
        %v3434 = vpop.f32.mrb[0].mxu0
        %3435 = vdwg.mxu0
        %v3436 = vsel %vm1433, %v3302, -inf
        %3437 = vmax.xlane.f32.xlu0 %v3436
        %v3438 = vpop.xlane.xlu0 %3437
        %v3439 = vsel %vm1433, %v3345, -inf
        %3440 = vmax.xlane.f32.xlu0 %v3439
        %v3441 = vpop.xlane.xlu0 %3440
        %v3442 = vsel %vm1433, %v3388, -inf
        %3443 = vmax.xlane.f32.xlu0 %v3442
        %v3444 = vpop.xlane.xlu0 %3443
        %v3445 = vsel %vm1433, %v3431, -inf
        %3446 = vmax.xlane.f32.xlu0 %v3445
        %v3447 = vpop.xlane.xlu0 %3446
        %v3448 = vsub.f32 %v3302, %v3438
        %v3449 = vsub.f32 %v3345, %v3441
        %v3450 = vsub.f32 %v3388, %v3444
        %v3451 = vsub.f32 %v3431, %v3447
        %v3452 = vmul.f32 %v3448, 1.442695
        %v3453 = vpow.pop %v3452
        %v3454 = vmul.f32 %v3449, 1.442695
        %v3455 = vpow.pop %v3454
        %v3456 = vmul.f32 %v3450, 1.442695
        %v3457 = vpow.pop %v3456
        %v3458 = vmul.f32 %v3451, 1.442695
        %v3459 = vpow.pop %v3458
        %v3460 = vsel %vm1433, %v3453, 0.0
        %3461 = vadd.xlane.f32.xlu0 %v3460
        %v3462 = vpop.xlane.xlu0 %3461
        %v3463 = vsel %vm1433, %v3455, 0.0
        %3464 = vadd.xlane.f32.xlu0 %v3463
        %v3465 = vpop.xlane.xlu0 %3464
        %v3466 = vsel %vm1433, %v3457, 0.0
        %3467 = vadd.xlane.f32.xlu0 %v3466
        %v3468 = vpop.xlane.xlu0 %3467
        %v3469 = vsel %vm1433, %v3459, 0.0
        %3470 = vadd.xlane.f32.xlu0 %v3469
        %v3471 = vpop.xlane.xlu0 %3470
        %v3472 = vrcp.pop %v3462
        %v3473 = vrcp.pop %v3465
        %v3474 = vrcp.pop %v3468
        %v3475 = vrcp.pop %v3471
        %v3476 = vmul.f32 %v3453, %v3472
        %v3477 = vmul.f32 %v3455, %v3473
        %v3478 = vmul.f32 %v3457, %v3474
        %v3479 = vmul.f32 %v3459, %v3475
        %v3480 = vpack.c.bf16 %v3476, %v3476
        %v3481 = vpack.c.bf16 %v3477, %v3477
        %v3482 = vpack.c.bf16 %v3478, %v3478
        %v3483 = vpack.c.bf16 %v3479, %v3479
        %3484 = vxpose.xlu0.c.b16.start [1/8] %v3189, 128
        %3485 = vxpose.xlu0.c.b16.cont [2/8] 0, 128
        %3486 = vxpose.xlu0.c.b16.cont [3/8] 0, 128
        %3487 = vxpose.xlu0.c.b16.cont [4/8] 0, 128
        %3488 = vxpose.xlu0.c.b16.cont [5/8] 0, 128
        %3489 = vxpose.xlu0.c.b16.cont [6/8] 0, 128
        %3490 = vxpose.xlu0.c.b16.cont [7/8] 0, 128
        %3491 = vxpose.xlu0.c.b16.end [8/8] 0, 128
        %v3492 = vpop.trf.xlu0
        %v3493 = vpop.trf.xlu0
        %v3494 = vpop.trf.xlu0
        %v3495 = vpop.trf.xlu0
        %v3496 = vpop.trf.xlu0
        %v3497 = vpop.trf.xlu0
        %v3498 = vpop.trf.xlu0
        %v3499 = vpop.trf.xlu0
        %3500 = vxpose.xlu0.c.b16.start [1/8] %v3192, 128
        %3501 = vxpose.xlu0.c.b16.cont [2/8] 0, 128
        %3502 = vxpose.xlu0.c.b16.cont [3/8] 0, 128
        %3503 = vxpose.xlu0.c.b16.cont [4/8] 0, 128
        %3504 = vxpose.xlu0.c.b16.cont [5/8] 0, 128
        %3505 = vxpose.xlu0.c.b16.cont [6/8] 0, 128
        %3506 = vxpose.xlu0.c.b16.cont [7/8] 0, 128
        %3507 = vxpose.xlu0.c.b16.end [8/8] 0, 128
        %v3508 = vpop.trf.xlu0
        %v3509 = vpop.trf.xlu0
        %v3510 = vpop.trf.xlu0
        %v3511 = vpop.trf.xlu0
        %v3512 = vpop.trf.xlu0
        %v3513 = vpop.trf.xlu0
        %v3514 = vpop.trf.xlu0
        %v3515 = vpop.trf.xlu0
        %3516 = vxpose.xlu0.c.b16.start [1/8] %v3195, 128
        %3517 = vxpose.xlu0.c.b16.cont [2/8] 0, 128
        %3518 = vxpose.xlu0.c.b16.cont [3/8] 0, 128
        %3519 = vxpose.xlu0.c.b16.cont [4/8] 0, 128
        %3520 = vxpose.xlu0.c.b16.cont [5/8] 0, 128
        %3521 = vxpose.xlu0.c.b16.cont [6/8] 0, 128
        %3522 = vxpose.xlu0.c.b16.cont [7/8] 0, 128
        %3523 = vxpose.xlu0.c.b16.end [8/8] 0, 128
        %v3524 = vpop.trf.xlu0
        %v3525 = vpop.trf.xlu0
        %v3526 = vpop.trf.xlu0
        %v3527 = vpop.trf.xlu0
        %v3528 = vpop.trf.xlu0
        %v3529 = vpop.trf.xlu0
        %v3530 = vpop.trf.xlu0
        %v3531 = vpop.trf.xlu0
        %3532 = vxpose.xlu0.c.b16.start [1/8] %v3198, 128
        %3533 = vxpose.xlu0.c.b16.cont [2/8] 0, 128
        %3534 = vxpose.xlu0.c.b16.cont [3/8] 0, 128
        %3535 = vxpose.xlu0.c.b16.cont [4/8] 0, 128
        %3536 = vxpose.xlu0.c.b16.cont [5/8] 0, 128
        %3537 = vxpose.xlu0.c.b16.cont [6/8] 0, 128
        %3538 = vxpose.xlu0.c.b16.cont [7/8] 0, 128
        %3539 = vxpose.xlu0.c.b16.end [8/8] 0, 128
        %v3540 = vpop.trf.xlu0
        %v3541 = vpop.trf.xlu0
        %v3542 = vpop.trf.xlu0
        %v3543 = vpop.trf.xlu0
        %v3544 = vpop.trf.xlu0
        %v3545 = vpop.trf.xlu0
        %v3546 = vpop.trf.xlu0
        %v3547 = vpop.trf.xlu0
        %v3549 = vsel %vm1433, %v3492, 0
        %v3552 = vsel %vm1433, %v3493, 0
        %v3555 = vsel %vm1433, %v3480, 0
        %3557 = vmatprep.subr.bf16.mxu0 0
        %3558 = vmatpush1.bf16.xpose.msra.mxu0 %v3555
        %3559 = vmatprep.subr.bf16.mxu0 0
        %3560 = vmatpush1.bf16.xpose.msra.mxu0 0
        %3561 = vmatprep.subr.bf16.mxu0 0
        %3562 = vmatpush1.bf16.xpose.msra.mxu0 0
        %3563 = vmatprep.subr.bf16.mxu0 0
        %3564 = vmatpush1.bf16.xpose.msra.mxu0 0
        %3565 = vmatprep.subr.bf16.mxu0 0
        %3566 = vmatpush1.bf16.xpose.msra.mxu0 0
        %3567 = vmatprep.subr.bf16.mxu0 0
        %3568 = vmatpush1.bf16.xpose.msra.mxu0 0
        %3569 = vmatprep.subr.bf16.mxu0 0
        %3570 = vmatpush1.bf16.xpose.msra.mxu0 0
        %3571 = vmatprep.subr.bf16.mxu0 0
        %3572 = vmatpush1.bf16.xpose.msra.mxu0 0
        %3573 = vmatprep.subr.bf16.mxu0 0
        %3574 = vmatpush1.bf16.xpose.msra.mxu0 0
        %3575 = vmatprep.subr.bf16.mxu0 0
        %3576 = vmatpush1.bf16.xpose.msra.mxu0 0
        %3577 = vmatprep.subr.bf16.mxu0 0
        %3578 = vmatpush1.bf16.xpose.msra.mxu0 0
        %3579 = vmatprep.subr.bf16.mxu0 0
        %3580 = vmatpush1.bf16.xpose.msra.mxu0 0
        %3581 = vmatprep.subr.bf16.mxu0 0
        %3582 = vmatpush1.bf16.xpose.msra.mxu0 0
        %3583 = vmatprep.subr.bf16.mxu0 0
        %3584 = vmatpush1.bf16.xpose.msra.mxu0 0
        %3585 = vmatprep.subr.bf16.mxu0 0
        %3586 = vmatpush1.bf16.xpose.msra.mxu0 0
        %3587 = vmatprep.subr.bf16.mxu0 0
        %3588 = vmatpush1.bf16.xpose.msra.mxu0 0
        %3589 = vmatprep.mubr.bf16.mxu0 0
        %3590 = vmatmul.mubr.bf16.gmra.mrb[0].mxu0 %v3549
        %v3591 = vpop.f32.mrb[0].mxu0
        %v3592 = vadd.f32 0.0, %v3591
        %v3593 = vpop.f32.mrb[0].mxu0
        %v3594 = vpop.f32.mrb[0].mxu0
        %v3595 = vadd.f32 0.0, %v3594
        %v3596 = vpop.f32.mrb[0].mxu0
        %3597 = vmatprep.mubr.bf16.mxu0 0
        %3598 = vmatmul.mubr.bf16.gmra.mrb[0].mxu0 %v3552
        %v3599 = vpop.f32.mrb[0].mxu0
        %v3600 = vadd.f32 0.0, %v3599
        %v3601 = vpop.f32.mrb[0].mxu0
        %v3602 = vpop.f32.mrb[0].mxu0
        %v3603 = vadd.f32 0.0, %v3602
        %v3604 = vpop.f32.mrb[0].mxu0
        %3605 = vdwg.mxu0
        %v3607 = vsel %vm1433, %v3508, 0
        %v3610 = vsel %vm1433, %v3509, 0
        %v3613 = vsel %vm1433, %v3481, 0
        %3615 = vmatprep.subr.bf16.mxu0 0
        %3616 = vmatpush1.bf16.xpose.msra.mxu0 %v3613
        %3617 = vmatprep.subr.bf16.mxu0 0
        %3618 = vmatpush1.bf16.xpose.msra.mxu0 0
        %3619 = vmatprep.subr.bf16.mxu0 0
        %3620 = vmatpush1.bf16.xpose.msra.mxu0 0
        %3621 = vmatprep.subr.bf16.mxu0 0
        %3622 = vmatpush1.bf16.xpose.msra.mxu0 0
        %3623 = vmatprep.subr.bf16.mxu0 0
        %3624 = vmatpush1.bf16.xpose.msra.mxu0 0
        %3625 = vmatprep.subr.bf16.mxu0 0
        %3626 = vmatpush1.bf16.xpose.msra.mxu0 0
        %3627 = vmatprep.subr.bf16.mxu0 0
        %3628 = vmatpush1.bf16.xpose.msra.mxu0 0
        %3629 = vmatprep.subr.bf16.mxu0 0
        %3630 = vmatpush1.bf16.xpose.msra.mxu0 0
        %3631 = vmatprep.subr.bf16.mxu0 0
        %3632 = vmatpush1.bf16.xpose.msra.mxu0 0
        %3633 = vmatprep.subr.bf16.mxu0 0
        %3634 = vmatpush1.bf16.xpose.msra.mxu0 0
        %3635 = vmatprep.subr.bf16.mxu0 0
        %3636 = vmatpush1.bf16.xpose.msra.mxu0 0
        %3637 = vmatprep.subr.bf16.mxu0 0
        %3638 = vmatpush1.bf16.xpose.msra.mxu0 0
        %3639 = vmatprep.subr.bf16.mxu0 0
        %3640 = vmatpush1.bf16.xpose.msra.mxu0 0
        %3641 = vmatprep.subr.bf16.mxu0 0
        %3642 = vmatpush1.bf16.xpose.msra.mxu0 0
        %3643 = vmatprep.subr.bf16.mxu0 0
        %3644 = vmatpush1.bf16.xpose.msra.mxu0 0
        %3645 = vmatprep.subr.bf16.mxu0 0
        %3646 = vmatpush1.bf16.xpose.msra.mxu0 0
        %3647 = vmatprep.mubr.bf16.mxu0 0
        %3648 = vmatmul.mubr.bf16.gmra.mrb[0].mxu0 %v3607
        %v3649 = vpop.f32.mrb[0].mxu0
        %v3650 = vadd.f32 0.0, %v3649
        %v3651 = vpop.f32.mrb[0].mxu0
        %v3652 = vpop.f32.mrb[0].mxu0
        %v3653 = vadd.f32 0.0, %v3652
        %v3654 = vpop.f32.mrb[0].mxu0
        %3655 = vmatprep.mubr.bf16.mxu0 0
        %3656 = vmatmul.mubr.bf16.gmra.mrb[0].mxu0 %v3610
        %v3657 = vpop.f32.mrb[0].mxu0
        %v3658 = vadd.f32 0.0, %v3657
        %v3659 = vpop.f32.mrb[0].mxu0
        %v3660 = vpop.f32.mrb[0].mxu0
        %v3661 = vadd.f32 0.0, %v3660
        %v3662 = vpop.f32.mrb[0].mxu0
        %3663 = vdwg.mxu0
        %v3665 = vsel %vm1433, %v3524, 0
        %v3668 = vsel %vm1433, %v3525, 0
        %v3671 = vsel %vm1433, %v3482, 0
        %3673 = vmatprep.subr.bf16.mxu0 0
        %3674 = vmatpush1.bf16.xpose.msra.mxu0 %v3671
        %3675 = vmatprep.subr.bf16.mxu0 0
        %3676 = vmatpush1.bf16.xpose.msra.mxu0 0
        %3677 = vmatprep.subr.bf16.mxu0 0
        %3678 = vmatpush1.bf16.xpose.msra.mxu0 0
        %3679 = vmatprep.subr.bf16.mxu0 0
        %3680 = vmatpush1.bf16.xpose.msra.mxu0 0
        %3681 = vmatprep.subr.bf16.mxu0 0
        %3682 = vmatpush1.bf16.xpose.msra.mxu0 0
        %3683 = vmatprep.subr.bf16.mxu0 0
        %3684 = vmatpush1.bf16.xpose.msra.mxu0 0
        %3685 = vmatprep.subr.bf16.mxu0 0
        %3686 = vmatpush1.bf16.xpose.msra.mxu0 0
        %3687 = vmatprep.subr.bf16.mxu0 0
        %3688 = vmatpush1.bf16.xpose.msra.mxu0 0
        %3689 = vmatprep.subr.bf16.mxu0 0
        %3690 = vmatpush1.bf16.xpose.msra.mxu0 0
        %3691 = vmatprep.subr.bf16.mxu0 0
        %3692 = vmatpush1.bf16.xpose.msra.mxu0 0
        %3693 = vmatprep.subr.bf16.mxu0 0
        %3694 = vmatpush1.bf16.xpose.msra.mxu0 0
        %3695 = vmatprep.subr.bf16.mxu0 0
        %3696 = vmatpush1.bf16.xpose.msra.mxu0 0
        %3697 = vmatprep.subr.bf16.mxu0 0
        %3698 = vmatpush1.bf16.xpose.msra.mxu0 0
        %3699 = vmatprep.subr.bf16.mxu0 0
        %3700 = vmatpush1.bf16.xpose.msra.mxu0 0
        %3701 = vmatprep.subr.bf16.mxu0 0
        %3702 = vmatpush1.bf16.xpose.msra.mxu0 0
        %3703 = vmatprep.subr.bf16.mxu0 0
        %3704 = vmatpush1.bf16.xpose.msra.mxu0 0
        %3705 = vmatprep.mubr.bf16.mxu0 0
        %3706 = vmatmul.mubr.bf16.gmra.mrb[0].mxu0 %v3665
        %v3707 = vpop.f32.mrb[0].mxu0
        %v3708 = vadd.f32 0.0, %v3707
        %v3709 = vpop.f32.mrb[0].mxu0
        %v3710 = vpop.f32.mrb[0].mxu0
        %v3711 = vadd.f32 0.0, %v3710
        %v3712 = vpop.f32.mrb[0].mxu0
        %3713 = vmatprep.mubr.bf16.mxu0 0
        %3714 = vmatmul.mubr.bf16.gmra.mrb[0].mxu0 %v3668
        %v3715 = vpop.f32.mrb[0].mxu0
        %v3716 = vadd.f32 0.0, %v3715
        %v3717 = vpop.f32.mrb[0].mxu0
        %v3718 = vpop.f32.mrb[0].mxu0
        %v3719 = vadd.f32 0.0, %v3718
        %v3720 = vpop.f32.mrb[0].mxu0
        %3721 = vdwg.mxu0
        %v3723 = vsel %vm1433, %v3540, 0
        %v3726 = vsel %vm1433, %v3541, 0
        %v3729 = vsel %vm1433, %v3483, 0
        %3731 = vmatprep.subr.bf16.mxu0 0
        %3732 = vmatpush1.bf16.xpose.msra.mxu0 %v3729
        %3733 = vmatprep.subr.bf16.mxu0 0
        %3734 = vmatpush1.bf16.xpose.msra.mxu0 0
        %3735 = vmatprep.subr.bf16.mxu0 0
        %3736 = vmatpush1.bf16.xpose.msra.mxu0 0
        %3737 = vmatprep.subr.bf16.mxu0 0
        %3738 = vmatpush1.bf16.xpose.msra.mxu0 0
        %3739 = vmatprep.subr.bf16.mxu0 0
        %3740 = vmatpush1.bf16.xpose.msra.mxu0 0
        %3741 = vmatprep.subr.bf16.mxu0 0
        %3742 = vmatpush1.bf16.xpose.msra.mxu0 0
        %3743 = vmatprep.subr.bf16.mxu0 0
        %3744 = vmatpush1.bf16.xpose.msra.mxu0 0
        %3745 = vmatprep.subr.bf16.mxu0 0
        %3746 = vmatpush1.bf16.xpose.msra.mxu0 0
        %3747 = vmatprep.subr.bf16.mxu0 0
        %3748 = vmatpush1.bf16.xpose.msra.mxu0 0
        %3749 = vmatprep.subr.bf16.mxu0 0
        %3750 = vmatpush1.bf16.xpose.msra.mxu0 0
        %3751 = vmatprep.subr.bf16.mxu0 0
        %3752 = vmatpush1.bf16.xpose.msra.mxu0 0
        %3753 = vmatprep.subr.bf16.mxu0 0
        %3754 = vmatpush1.bf16.xpose.msra.mxu0 0
        %3755 = vmatprep.subr.bf16.mxu0 0
        %3756 = vmatpush1.bf16.xpose.msra.mxu0 0
        %3757 = vmatprep.subr.bf16.mxu0 0
        %3758 = vmatpush1.bf16.xpose.msra.mxu0 0
        %3759 = vmatprep.subr.bf16.mxu0 0
        %3760 = vmatpush1.bf16.xpose.msra.mxu0 0
        %3761 = vmatprep.subr.bf16.mxu0 0
        %3762 = vmatpush1.bf16.xpose.msra.mxu0 0
        %3763 = vmatprep.mubr.bf16.mxu0 0
        %3764 = vmatmul.mubr.bf16.gmra.mrb[0].mxu0 %v3723
        %v3765 = vpop.f32.mrb[0].mxu0
        %v3766 = vadd.f32 0.0, %v3765
        %v3767 = vpop.f32.mrb[0].mxu0
        %v3768 = vpop.f32.mrb[0].mxu0
        %v3769 = vadd.f32 0.0, %v3768
        %v3770 = vpop.f32.mrb[0].mxu0
        %3771 = vmatprep.mubr.bf16.mxu0 0
        %3772 = vmatmul.mubr.bf16.gmra.mrb[0].mxu0 %v3726
        %v3773 = vpop.f32.mrb[0].mxu0
        %v3774 = vadd.f32 0.0, %v3773
        %v3775 = vpop.f32.mrb[0].mxu0
        %v3776 = vpop.f32.mrb[0].mxu0
        %v3777 = vadd.f32 0.0, %v3776
        %v3778 = vpop.f32.mrb[0].mxu0
        %3779 = vdwg.mxu0
        %3780 = vxpose.xlu0.b32.start [1/16] %v3592, 128
        %3781 = vxpose.xlu0.b32.cont [2/16] %v3595, 128
        %3782 = vxpose.xlu0.b32.cont [3/16] %v3600, 128
        %3783 = vxpose.xlu0.b32.cont [4/16] %v3603, 128
        %3784 = vxpose.xlu0.b32.cont [5/16] 0.0, 128
        %3785 = vxpose.xlu0.b32.cont [6/16] 0.0, 128
        %3786 = vxpose.xlu0.b32.cont [7/16] 0.0, 128
        %3787 = vxpose.xlu0.b32.cont [8/16] 0.0, 128
        %3788 = vxpose.xlu0.b32.cont [9/16] 0.0, 128
        %3789 = vxpose.xlu0.b32.cont [10/16] 0.0, 128
        %3790 = vxpose.xlu0.b32.cont [11/16] 0.0, 128
        %3791 = vxpose.xlu0.b32.cont [12/16] 0.0, 128
        %3792 = vxpose.xlu0.b32.cont [13/16] 0.0, 128
        %3793 = vxpose.xlu0.b32.cont [14/16] 0.0, 128
        %3794 = vxpose.xlu0.b32.cont [15/16] 0.0, 128
        %3795 = vxpose.xlu0.b32.end [16/16] 0.0, 128
        %v3796 = vpop.trf.xlu0
        %v3797 = vpop.trf.xlu0
        %v3798 = vpop.trf.xlu0
        %v3799 = vpop.trf.xlu0
        %v3800 = vpop.trf.xlu0
        %v3801 = vpop.trf.xlu0
        %v3802 = vpop.trf.xlu0
        %v3803 = vpop.trf.xlu0
        %v3804 = vpop.trf.xlu0
        %v3805 = vpop.trf.xlu0
        %v3806 = vpop.trf.xlu0
        %v3807 = vpop.trf.xlu0
        %v3808 = vpop.trf.xlu0
        %v3809 = vpop.trf.xlu0
        %v3810 = vpop.trf.xlu0
        %v3811 = vpop.trf.xlu0
        %3812 = vxpose.xlu0.b32.start [1/16] %v3650, 128
        %3813 = vxpose.xlu0.b32.cont [2/16] %v3653, 128
        %3814 = vxpose.xlu0.b32.cont [3/16] %v3658, 128
        %3815 = vxpose.xlu0.b32.cont [4/16] %v3661, 128
        %3816 = vxpose.xlu0.b32.cont [5/16] 0.0, 128
        %3817 = vxpose.xlu0.b32.cont [6/16] 0.0, 128
        %3818 = vxpose.xlu0.b32.cont [7/16] 0.0, 128
        %3819 = vxpose.xlu0.b32.cont [8/16] 0.0, 128
        %3820 = vxpose.xlu0.b32.cont [9/16] 0.0, 128
        %3821 = vxpose.xlu0.b32.cont [10/16] 0.0, 128
        %3822 = vxpose.xlu0.b32.cont [11/16] 0.0, 128
        %3823 = vxpose.xlu0.b32.cont [12/16] 0.0, 128
        %3824 = vxpose.xlu0.b32.cont [13/16] 0.0, 128
        %3825 = vxpose.xlu0.b32.cont [14/16] 0.0, 128
        %3826 = vxpose.xlu0.b32.cont [15/16] 0.0, 128
        %3827 = vxpose.xlu0.b32.end [16/16] 0.0, 128
        %v3828 = vpop.trf.xlu0
        %v3829 = vpop.trf.xlu0
        %v3830 = vpop.trf.xlu0
        %v3831 = vpop.trf.xlu0
        %v3832 = vpop.trf.xlu0
        %v3833 = vpop.trf.xlu0
        %v3834 = vpop.trf.xlu0
        %v3835 = vpop.trf.xlu0
        %v3836 = vpop.trf.xlu0
        %v3837 = vpop.trf.xlu0
        %v3838 = vpop.trf.xlu0
        %v3839 = vpop.trf.xlu0
        %v3840 = vpop.trf.xlu0
        %v3841 = vpop.trf.xlu0
        %v3842 = vpop.trf.xlu0
        %v3843 = vpop.trf.xlu0
        %3844 = vxpose.xlu0.b32.start [1/16] %v3708, 128
        %3845 = vxpose.xlu0.b32.cont [2/16] %v3711, 128
        %3846 = vxpose.xlu0.b32.cont [3/16] %v3716, 128
        %3847 = vxpose.xlu0.b32.cont [4/16] %v3719, 128
        %3848 = vxpose.xlu0.b32.cont [5/16] 0.0, 128
        %3849 = vxpose.xlu0.b32.cont [6/16] 0.0, 128
        %3850 = vxpose.xlu0.b32.cont [7/16] 0.0, 128
        %3851 = vxpose.xlu0.b32.cont [8/16] 0.0, 128
        %3852 = vxpose.xlu0.b32.cont [9/16] 0.0, 128
        %3853 = vxpose.xlu0.b32.cont [10/16] 0.0, 128
        %3854 = vxpose.xlu0.b32.cont [11/16] 0.0, 128
        %3855 = vxpose.xlu0.b32.cont [12/16] 0.0, 128
        %3856 = vxpose.xlu0.b32.cont [13/16] 0.0, 128
        %3857 = vxpose.xlu0.b32.cont [14/16] 0.0, 128
        %3858 = vxpose.xlu0.b32.cont [15/16] 0.0, 128
        %3859 = vxpose.xlu0.b32.end [16/16] 0.0, 128
        %v3860 = vpop.trf.xlu0
        %v3861 = vpop.trf.xlu0
        %v3862 = vpop.trf.xlu0
        %v3863 = vpop.trf.xlu0
        %v3864 = vpop.trf.xlu0
        %v3865 = vpop.trf.xlu0
        %v3866 = vpop.trf.xlu0
        %v3867 = vpop.trf.xlu0
        %v3868 = vpop.trf.xlu0
        %v3869 = vpop.trf.xlu0
        %v3870 = vpop.trf.xlu0
        %v3871 = vpop.trf.xlu0
        %v3872 = vpop.trf.xlu0
        %v3873 = vpop.trf.xlu0
        %v3874 = vpop.trf.xlu0
        %v3875 = vpop.trf.xlu0
        %3876 = vxpose.xlu0.b32.start [1/16] %v3766, 128
        %3877 = vxpose.xlu0.b32.cont [2/16] %v3769, 128
        %3878 = vxpose.xlu0.b32.cont [3/16] %v3774, 128
        %3879 = vxpose.xlu0.b32.cont [4/16] %v3777, 128
        %3880 = vxpose.xlu0.b32.cont [5/16] 0.0, 128
        %3881 = vxpose.xlu0.b32.cont [6/16] 0.0, 128
        %3882 = vxpose.xlu0.b32.cont [7/16] 0.0, 128
        %3883 = vxpose.xlu0.b32.cont [8/16] 0.0, 128
        %3884 = vxpose.xlu0.b32.cont [9/16] 0.0, 128
        %3885 = vxpose.xlu0.b32.cont [10/16] 0.0, 128
        %3886 = vxpose.xlu0.b32.cont [11/16] 0.0, 128
        %3887 = vxpose.xlu0.b32.cont [12/16] 0.0, 128
        %3888 = vxpose.xlu0.b32.cont [13/16] 0.0, 128
        %3889 = vxpose.xlu0.b32.cont [14/16] 0.0, 128
        %3890 = vxpose.xlu0.b32.cont [15/16] 0.0, 128
        %3891 = vxpose.xlu0.b32.end [16/16] 0.0, 128
        %v3892 = vpop.trf.xlu0
        %v3893 = vpop.trf.xlu0
        %v3894 = vpop.trf.xlu0
        %v3895 = vpop.trf.xlu0
        %v3896 = vpop.trf.xlu0
        %v3897 = vpop.trf.xlu0
        %v3898 = vpop.trf.xlu0
        %v3899 = vpop.trf.xlu0
        %v3900 = vpop.trf.xlu0
        %v3901 = vpop.trf.xlu0
        %v3902 = vpop.trf.xlu0
        %v3903 = vpop.trf.xlu0
        %v3904 = vpop.trf.xlu0
        %v3905 = vpop.trf.xlu0
        %v3906 = vpop.trf.xlu0
        %v3907 = vpop.trf.xlu0
        %v3908 = vcombine.low %v3796, %v3860
        %v3909 = vcombine.high %v3796, %v3860
        %v3911 = vunpack.c.l.s4 1983009808
        %v3912 = vunpack.c.0.s8 %v3911
        %v3913 = vlaneseq
        %v3914 = vshrl.u32 %v3913, 7
        %v3915 = vsub.s32 %v3912, %v3914
        %v3916 = vrot.slane %v3908, %v3915
        %v3918 = vunpack.c.l.s4 1983009808
        %v3919 = vunpack.c.0.s8 %v3918
        %v3920 = vlaneseq
        %v3921 = vshrl.u32 %v3920, 7
        %v3922 = vsub.s32 %v3919, %v3921
        %v3923 = vrot.slane %v3909, %v3922
        %v3924 = vcombine.low %v3828, %v3892
        %v3925 = vcombine.high %v3828, %v3892
        %v3927 = vunpack.c.l.s4 1983009808
        %v3928 = vunpack.c.0.s8 %v3927
        %v3929 = vlaneseq
        %v3930 = vshrl.u32 %v3929, 7
        %v3931 = vsub.s32 %v3928, %v3930
        %v3932 = vrot.slane %v3924, %v3931
        %v3934 = vunpack.c.l.s4 1983009808
        %v3935 = vunpack.c.0.s8 %v3934
        %v3936 = vlaneseq
        %v3937 = vshrl.u32 %v3936, 7
        %v3938 = vsub.s32 %v3935, %v3937
        %v3939 = vrot.slane %v3925, %v3938
        %v3940 = vcombine.low %v3916, %v3932
        %v3941 = vcombine.high %v3916, %v3932
        %v3943 = vunpack.c.l.s4 1934713408
        %v3944 = vunpack.c.0.s8 %v3943
        %v3945 = vlaneseq
        %v3946 = vshrl.u32 %v3945, 7
        %v3947 = vsub.s32 %v3944, %v3946
        %v3948 = vrot.slane %v3940, %v3947
        %v3950 = vunpack.c.l.s4 1934713408
        %v3951 = vunpack.c.0.s8 %v3950
        %v3952 = vlaneseq
        %v3953 = vshrl.u32 %v3952, 7
        %v3954 = vsub.s32 %v3951, %v3953
        %v3955 = vrot.slane %v3941, %v3954
        %v3956 = vcombine.low %v3923, %v3939
        %v3957 = vcombine.high %v3923, %v3939
        %v3959 = vunpack.c.l.s4 1934713408
        %v3960 = vunpack.c.0.s8 %v3959
        %v3961 = vlaneseq
        %v3962 = vshrl.u32 %v3961, 7
        %v3963 = vsub.s32 %v3960, %v3962
        %v3964 = vrot.slane %v3956, %v3963
        %v3966 = vunpack.c.l.s4 1934713408
        %v3967 = vunpack.c.0.s8 %v3966
        %v3968 = vlaneseq
        %v3969 = vshrl.u32 %v3968, 7
        %v3970 = vsub.s32 %v3967, %v3969
        %v3971 = vrot.slane %v3957, %v3970
        %v3972 = vcombine.high %v3948, 0.0
        %v3973 = vcombine.high %v3955, 0.0
        %v3974 = vcombine.high %v3964, 0.0
        %v3975 = vcombine.high %v3971, 0.0
        %v3976 = vcombine.low %v3948, %v3955
        %v3978 = vunpack.c.l.s4 1983009808
        %v3979 = vunpack.c.0.s8 %v3978
        %v3980 = vlaneseq
        %v3981 = vshrl.u32 %v3980, 7
        %v3982 = vsub.s32 %v3979, %v3981
        %v3983 = vrot.slane %v3976, %v3982
        %v3984 = vcombine.low %v3972, %v3973
        %v3986 = vunpack.c.l.s4 1983009808
        %v3987 = vunpack.c.0.s8 %v3986
        %v3988 = vlaneseq
        %v3989 = vshrl.u32 %v3988, 7
        %v3990 = vsub.s32 %v3987, %v3989
        %v3991 = vrot.slane %v3984, %v3990
        %v3992 = vcombine.low %v3964, %v3971
        %v3994 = vunpack.c.l.s4 1983009808
        %v3995 = vunpack.c.0.s8 %v3994
        %v3996 = vlaneseq
        %v3997 = vshrl.u32 %v3996, 7
        %v3998 = vsub.s32 %v3995, %v3997
        %v3999 = vrot.slane %v3992, %v3998
        %v4000 = vcombine.low %v3974, %v3975
        %v4002 = vunpack.c.l.s4 1983009808
        %v4003 = vunpack.c.0.s8 %v4002
        %v4004 = vlaneseq
        %v4005 = vshrl.u32 %v4004, 7
        %v4006 = vsub.s32 %v4003, %v4005
        %v4007 = vrot.slane %v4000, %v4006
        %v4008 = vcombine.low %v3983, %v3991
        %v4009 = vcombine.high %v3983, %v3991
        %v4011 = vunpack.c.l.s4 1934713408
        %v4012 = vunpack.c.0.s8 %v4011
        %v4013 = vlaneseq
        %v4014 = vshrl.u32 %v4013, 7
        %v4015 = vsub.s32 %v4012, %v4014
        %v4016 = vrot.slane %v4008, %v4015
        %v4018 = vunpack.c.l.s4 1934713408
        %v4019 = vunpack.c.0.s8 %v4018
        %v4020 = vlaneseq
        %v4021 = vshrl.u32 %v4020, 7
        %v4022 = vsub.s32 %v4019, %v4021
        %v4023 = vrot.slane %v4009, %v4022
        %v4024 = vcombine.low %v3999, %v4007
        %v4025 = vcombine.high %v3999, %v4007
        %v4027 = vunpack.c.l.s4 1934713408
        %v4028 = vunpack.c.0.s8 %v4027
        %v4029 = vlaneseq
        %v4030 = vshrl.u32 %v4029, 7
        %v4031 = vsub.s32 %v4028, %v4030
        %v4032 = vrot.slane %v4024, %v4031
        %v4034 = vunpack.c.l.s4 1934713408
        %v4035 = vunpack.c.0.s8 %v4034
        %v4036 = vlaneseq
        %v4037 = vshrl.u32 %v4036, 7
        %v4038 = vsub.s32 %v4035, %v4037
        %v4039 = vrot.slane %v4025, %v4038
        %v4040 = vcombine.low %v4016, %v4032
        %v4041 = vcombine.high %v4016, %v4032
        %v4042 = vcombine.low %v4023, %v4039
        %v4043 = vcombine.high %v4023, %v4039
        %4045 = vrot.lane.b32.xlu0 %v4041, 32
        %v4046 = vpop.permute.xlu0 %4045
        %4049 = vrot.lane.b32.xlu0 %v4042, 64
        %v4050 = vpop.permute.xlu0 %4049
        %4053 = vrot.lane.b32.xlu0 %v4043, 96
        %v4054 = vpop.permute.xlu0 %4053
        %v4056 = vsel %vm1260, %v4040, %v4046
        %v4057 = vsel %vm2055, %v4056, %v4050
        %v4058 = vsel %vm2057, %v4057, %v4054
        %v4059 = vpack.c.bf16 %v4058, %v4058
        %s4060 = scalar_lea.vmem [#allocation11], 64
        %v4061 = vld [vmem:[%s4060] sm:$0xf]
        %v4062 = vld [vmem:[%s4060 + $0x4] sm:$0xf]
        %v4063 = vld [vmem:[%s4060 + $0x8] sm:$0xf]
        %v4064 = vld [vmem:[%s4060 + $0xc] sm:$0xf]
        %v4065 = vld [vmem:[%s4060 + $0x10] sm:$0xf]
        %v4066 = vld [vmem:[%s4060 + $0x14] sm:$0xf]
        %v4067 = vld [vmem:[%s4060 + $0x18] sm:$0xf]
        %v4068 = vld [vmem:[%s4060 + $0x1c] sm:$0xf]
        %v4069 = vld [vmem:[%s4060 + $0x20] sm:$0xf]
        %v4070 = vld [vmem:[%s4060 + $0x24] sm:$0xf]
        %v4071 = vld [vmem:[%s4060 + $0x28] sm:$0xf]
        %v4072 = vld [vmem:[%s4060 + $0x2c] sm:$0xf]
        %v4073 = vld [vmem:[%s4060 + $0x30] sm:$0xf]
        %v4074 = vld [vmem:[%s4060 + $0x34] sm:$0xf]
        %v4075 = vld [vmem:[%s4060 + $0x38] sm:$0xf]
        %v4076 = vld [vmem:[%s4060 + $0x3c] sm:$0xf]
        %v4093 = vunpack.c.l.b16 %v4061
        %v4094 = vunpack.c.l.b16 %v4062
        %v4095 = vunpack.c.l.b16 %v4063
        %v4096 = vunpack.c.l.b16 %v4064
        %v4097 = vunpack.c.l.b16 %v4065
        %v4098 = vunpack.c.l.b16 %v4066
        %v4099 = vunpack.c.l.b16 %v4067
        %v4100 = vunpack.c.l.b16 %v4068
        %v4101 = vunpack.c.l.b16 %v4069
        %v4102 = vunpack.c.l.b16 %v4070
        %v4103 = vunpack.c.l.b16 %v4071
        %v4104 = vunpack.c.l.b16 %v4072
        %v4105 = vunpack.c.l.b16 %v4073
        %v4106 = vunpack.c.l.b16 %v4074
        %v4107 = vunpack.c.l.b16 %v4075
        %v4108 = vunpack.c.l.b16 %v4076
        %v4109 = vpack.c.b16 %v4094, %v4093
        %v4110 = vpack.c.b16 %v4096, %v4095
        %v4111 = vpack.c.b16 %v4098, %v4097
        %v4112 = vpack.c.b16 %v4100, %v4099
        %v4113 = vpack.c.b16 %v4102, %v4101
        %v4114 = vpack.c.b16 %v4104, %v4103
        %v4115 = vpack.c.b16 %v4106, %v4105
        %v4116 = vpack.c.b16 %v4108, %v4107
        %4125 = vmatprep.subr.bf16.mxu0 0
        %4126 = vmatpush1.bf16.msra.mxu0 %v4109
        %4127 = vmatprep.subr.bf16.mxu0 0
        %4128 = vmatpush1.bf16.msra.mxu0 %v4110
        %4129 = vmatprep.subr.bf16.mxu0 0
        %4130 = vmatpush1.bf16.msra.mxu0 %v4111
        %4131 = vmatprep.subr.bf16.mxu0 0
        %4132 = vmatpush1.bf16.msra.mxu0 %v4112
        %4133 = vmatprep.subr.bf16.mxu0 0
        %4134 = vmatpush1.bf16.msra.mxu0 %v4113
        %4135 = vmatprep.subr.bf16.mxu0 0
        %4136 = vmatpush1.bf16.msra.mxu0 %v4114
        %4137 = vmatprep.subr.bf16.mxu0 0
        %4138 = vmatpush1.bf16.msra.mxu0 %v4115
        %4139 = vmatprep.subr.bf16.mxu0 0
        %4140 = vmatpush1.bf16.msra.mxu0 %v4116
        %4141 = vmatprep.subr.bf16.mxu0 0
        %4142 = vmatpush1.bf16.msra.mxu0 0
        %4143 = vmatprep.subr.bf16.mxu0 0
        %4144 = vmatpush1.bf16.msra.mxu0 0
        %4145 = vmatprep.subr.bf16.mxu0 0
        %4146 = vmatpush1.bf16.msra.mxu0 0
        %4147 = vmatprep.subr.bf16.mxu0 0
        %4148 = vmatpush1.bf16.msra.mxu0 0
        %4149 = vmatprep.subr.bf16.mxu0 0
        %4150 = vmatpush1.bf16.msra.mxu0 0
        %4151 = vmatprep.subr.bf16.mxu0 0
        %4152 = vmatpush1.bf16.msra.mxu0 0
        %4153 = vmatprep.subr.bf16.mxu0 0
        %4154 = vmatpush1.bf16.msra.mxu0 0
        %4155 = vmatprep.subr.bf16.mxu0 0
        %4156 = vmatpush1.bf16.msra.mxu0 0
        %4157 = vmatprep.mubr.bf16.mxu0 0
        %4158 = vmatmul.mubr.bf16.gmra.mrb[0].mxu0 %v4059
        %v4159 = vpop.f32.mrb[0].mxu0
        %v4160 = vadd.f32 0.0, %v4159
        %v4161 = vpop.f32.mrb[0].mxu0
        %v4162 = vpop.f32.mrb[0].mxu0
        %v4163 = vpop.f32.mrb[0].mxu0
        %4164 = vdwg.mxu0
        %v4165 = vadd.f32 %v2908, %v4160
        %s4166 = scalar_lea.vmem %s7, 1
        %v4167 = vld [vmem:[%s4166] sm:$0x1]
        %v4169 = vlaneseq
        %v4170 = vshrl.u32 %v4169, 7
        %v4171 = vsub.s32 0, %v4170
        %v4172 = vrot.slane %v4167, %v4171
        %v4174 = vadd.f32 %v4165, %v4172
        %s4175 = scalar_lea.vmem [#allocation13], 1
        %v4176 = vld [vmem:[%s4175] sm:$0x1]
        %s4177 = scalar_lea.vmem [#allocation14], 1
        %v4178 = vld [vmem:[%s4177] sm:$0x1]
        %4179 = vadd.xlane.f32.xlu0 %v4174
        %v4180 = vpop.xlane.xlu0 %4179
        %v4181 = vmul.f32 %v4180, %v876
        %v4182 = vsub.f32 %v4174, %v4181
        %v4183 = vmul.f32 %v4182, %v4182
        %4184 = vadd.xlane.f32.xlu0 %v4183
        %v4185 = vpop.xlane.xlu0 %4184
        %v4186 = vmul.f32 %v4185, %v876
        %v4187 = vadd.f32 %v4186, 1e-12
        %v4188 = vrsqrt.pop %v4187
        %v4189 = vmul.f32 %v4182, %v4188
        %v4191 = vlaneseq
        %v4192 = vshrl.u32 %v4191, 7
        %v4193 = vsub.s32 0, %v4192
        %v4194 = vrot.slane %v4176, %v4193
        %v4196 = vmul.f32 %v4189, %v4194
        %v4198 = vlaneseq
        %v4199 = vshrl.u32 %v4198, 7
        %v4200 = vsub.s32 0, %v4199
        %v4201 = vrot.slane %v4178, %v4200
        %v4203 = vadd.f32 %v4196, %v4201
        %v4204 = vpack.c.bf16 %v4203, %v4203
        %s4205 = scalar_lea.vmem [#allocation16], 256
        %v4206 = vld [vmem:[%s4205] sm:$0xff]
        %v4207 = vld [vmem:[%s4205 + $0x8] sm:$0xff]
        %v4208 = vld [vmem:[%s4205 + $0x10] sm:$0xff]
        %v4209 = vld [vmem:[%s4205 + $0x18] sm:$0xff]
        %v4210 = vld [vmem:[%s4205 + $0x20] sm:$0xff]
        %v4211 = vld [vmem:[%s4205 + $0x28] sm:$0xff]
        %v4212 = vld [vmem:[%s4205 + $0x30] sm:$0xff]
        %v4213 = vld [vmem:[%s4205 + $0x38] sm:$0xff]
        %v4214 = vld [vmem:[%s4205 + $0x40] sm:$0xff]
        %v4215 = vld [vmem:[%s4205 + $0x48] sm:$0xff]
        %v4216 = vld [vmem:[%s4205 + $0x50] sm:$0xff]
        %v4217 = vld [vmem:[%s4205 + $0x58] sm:$0xff]
        %v4218 = vld [vmem:[%s4205 + $0x60] sm:$0xff]
        %v4219 = vld [vmem:[%s4205 + $0x68] sm:$0xff]
        %v4220 = vld [vmem:[%s4205 + $0x70] sm:$0xff]
        %v4221 = vld [vmem:[%s4205 + $0x78] sm:$0xff]
        %v4222 = vld [vmem:[%s4205 + $0x80] sm:$0xff]
        %v4223 = vld [vmem:[%s4205 + $0x88] sm:$0xff]
        %v4224 = vld [vmem:[%s4205 + $0x90] sm:$0xff]
        %v4225 = vld [vmem:[%s4205 + $0x98] sm:$0xff]
        %v4226 = vld [vmem:[%s4205 + $0xa0] sm:$0xff]
        %v4227 = vld [vmem:[%s4205 + $0xa8] sm:$0xff]
        %v4228 = vld [vmem:[%s4205 + $0xb0] sm:$0xff]
        %v4229 = vld [vmem:[%s4205 + $0xb8] sm:$0xff]
        %v4230 = vld [vmem:[%s4205 + $0xc0] sm:$0xff]
        %v4231 = vld [vmem:[%s4205 + $0xc8] sm:$0xff]
        %v4232 = vld [vmem:[%s4205 + $0xd0] sm:$0xff]
        %v4233 = vld [vmem:[%s4205 + $0xd8] sm:$0xff]
        %v4234 = vld [vmem:[%s4205 + $0xe0] sm:$0xff]
        %v4235 = vld [vmem:[%s4205 + $0xe8] sm:$0xff]
        %v4236 = vld [vmem:[%s4205 + $0xf0] sm:$0xff]
        %v4237 = vld [vmem:[%s4205 + $0xf8] sm:$0xff]
        %s4238 = scalar_lea.vmem [#allocation17], 4
        %v4239 = vld [vmem:[%s4238] sm:$0xf]
        %v4241 = vlaneseq
        %v4242 = vshrl.u32 %v4241, 7
        %v4243 = vsub.s32 0, %v4242
        %v4244 = vrot.slane %v4239, %v4243
        %v4245 = vlaneseq
        %v4246 = vshrl.u32 %v4245, 7
        %v4247 = vsub.s32 1, %v4246
        %v4248 = vrot.slane %v4239, %v4247
        %v4249 = vlaneseq
        %v4250 = vshrl.u32 %v4249, 7
        %v4251 = vsub.s32 2, %v4250
        %v4252 = vrot.slane %v4239, %v4251
        %v4253 = vlaneseq
        %v4254 = vshrl.u32 %v4253, 7
        %v4255 = vsub.s32 3, %v4254
        %v4256 = vrot.slane %v4239, %v4255
        %v4293 = vunpack.c.l.b16 %v4206
        %v4294 = vunpack.c.h.b16 %v4206
        %v4295 = vunpack.c.l.b16 %v4207
        %v4296 = vunpack.c.h.b16 %v4207
        %v4297 = vunpack.c.l.b16 %v4208
        %v4298 = vunpack.c.h.b16 %v4208
        %v4299 = vunpack.c.l.b16 %v4209
        %v4300 = vunpack.c.h.b16 %v4209
        %v4301 = vunpack.c.l.b16 %v4210
        %v4302 = vunpack.c.h.b16 %v4210
        %v4303 = vunpack.c.l.b16 %v4211
        %v4304 = vunpack.c.h.b16 %v4211
        %v4305 = vunpack.c.l.b16 %v4212
        %v4306 = vunpack.c.h.b16 %v4212
        %v4307 = vunpack.c.l.b16 %v4213
        %v4308 = vunpack.c.h.b16 %v4213
        %v4309 = vunpack.c.l.b16 %v4214
        %v4310 = vunpack.c.h.b16 %v4214
        %v4311 = vunpack.c.l.b16 %v4215
        %v4312 = vunpack.c.h.b16 %v4215
        %v4313 = vunpack.c.l.b16 %v4216
        %v4314 = vunpack.c.h.b16 %v4216
        %v4315 = vunpack.c.l.b16 %v4217
        %v4316 = vunpack.c.h.b16 %v4217
        %v4317 = vunpack.c.l.b16 %v4218
        %v4318 = vunpack.c.h.b16 %v4218
        %v4319 = vunpack.c.l.b16 %v4219
        %v4320 = vunpack.c.h.b16 %v4219
        %v4321 = vunpack.c.l.b16 %v4220
        %v4322 = vunpack.c.h.b16 %v4220
        %v4323 = vunpack.c.l.b16 %v4221
        %v4324 = vunpack.c.h.b16 %v4221
        %v4325 = vunpack.c.l.b16 %v4222
        %v4326 = vunpack.c.h.b16 %v4222
        %v4327 = vunpack.c.l.b16 %v4223
        %v4328 = vunpack.c.h.b16 %v4223
        %v4329 = vunpack.c.l.b16 %v4224
        %v4330 = vunpack.c.h.b16 %v4224
        %v4331 = vunpack.c.l.b16 %v4225
        %v4332 = vunpack.c.h.b16 %v4225
        %v4333 = vunpack.c.l.b16 %v4226
        %v4334 = vunpack.c.h.b16 %v4226
        %v4335 = vunpack.c.l.b16 %v4227
        %v4336 = vunpack.c.h.b16 %v4227
        %v4337 = vunpack.c.l.b16 %v4228
        %v4338 = vunpack.c.h.b16 %v4228
        %v4339 = vunpack.c.l.b16 %v4229
        %v4340 = vunpack.c.h.b16 %v4229
        %v4341 = vunpack.c.l.b16 %v4230
        %v4342 = vunpack.c.h.b16 %v4230
        %v4343 = vunpack.c.l.b16 %v4231
        %v4344 = vunpack.c.h.b16 %v4231
        %v4345 = vunpack.c.l.b16 %v4232
        %v4346 = vunpack.c.h.b16 %v4232
        %v4347 = vunpack.c.l.b16 %v4233
        %v4348 = vunpack.c.h.b16 %v4233
        %v4349 = vunpack.c.l.b16 %v4234
        %v4350 = vunpack.c.h.b16 %v4234
        %v4351 = vunpack.c.l.b16 %v4235
        %v4352 = vunpack.c.h.b16 %v4235
        %v4353 = vunpack.c.l.b16 %v4236
        %v4354 = vunpack.c.h.b16 %v4236
        %v4355 = vunpack.c.l.b16 %v4237
        %v4356 = vunpack.c.h.b16 %v4237
        %v4357 = vpack.c.b16 %v4297, %v4293
        %v4358 = vpack.c.b16 %v4298, %v4294
        %v4359 = vpack.c.b16 %v4299, %v4295
        %v4360 = vpack.c.b16 %v4300, %v4296
        %v4361 = vpack.c.b16 %v4305, %v4301
        %v4362 = vpack.c.b16 %v4306, %v4302
        %v4363 = vpack.c.b16 %v4307, %v4303
        %v4364 = vpack.c.b16 %v4308, %v4304
        %v4365 = vpack.c.b16 %v4313, %v4309
        %v4366 = vpack.c.b16 %v4314, %v4310
        %v4367 = vpack.c.b16 %v4315, %v4311
        %v4368 = vpack.c.b16 %v4316, %v4312
        %v4369 = vpack.c.b16 %v4321, %v4317
        %v4370 = vpack.c.b16 %v4322, %v4318
        %v4371 = vpack.c.b16 %v4323, %v4319
        %v4372 = vpack.c.b16 %v4324, %v4320
        %v4373 = vpack.c.b16 %v4329, %v4325
        %v4374 = vpack.c.b16 %v4330, %v4326
        %v4375 = vpack.c.b16 %v4331, %v4327
        %v4376 = vpack.c.b16 %v4332, %v4328
        %v4377 = vpack.c.b16 %v4337, %v4333
        %v4378 = vpack.c.b16 %v4338, %v4334
        %v4379 = vpack.c.b16 %v4339, %v4335
        %v4380 = vpack.c.b16 %v4340, %v4336
        %v4381 = vpack.c.b16 %v4345, %v4341
        %v4382 = vpack.c.b16 %v4346, %v4342
        %v4383 = vpack.c.b16 %v4347, %v4343
        %v4384 = vpack.c.b16 %v4348, %v4344
        %v4385 = vpack.c.b16 %v4353, %v4349
        %v4386 = vpack.c.b16 %v4354, %v4350
        %v4387 = vpack.c.b16 %v4355, %v4351
        %v4388 = vpack.c.b16 %v4356, %v4352
        %4421 = vmatprep.subr.bf16.mxu0 %v4358
        %4422 = vmatpush1.bf16.msra.mxu0 %v4357
        %4423 = vmatprep.subr.bf16.mxu0 %v4362
        %4424 = vmatpush1.bf16.msra.mxu0 %v4361
        %4425 = vmatprep.subr.bf16.mxu0 %v4366
        %4426 = vmatpush1.bf16.msra.mxu0 %v4365
        %4427 = vmatprep.subr.bf16.mxu0 %v4370
        %4428 = vmatpush1.bf16.msra.mxu0 %v4369
        %4429 = vmatprep.subr.bf16.mxu0 %v4374
        %4430 = vmatpush1.bf16.msra.mxu0 %v4373
        %4431 = vmatprep.subr.bf16.mxu0 %v4378
        %4432 = vmatpush1.bf16.msra.mxu0 %v4377
        %4433 = vmatprep.subr.bf16.mxu0 %v4382
        %4434 = vmatpush1.bf16.msra.mxu0 %v4381
        %4435 = vmatprep.subr.bf16.mxu0 %v4386
        %4436 = vmatpush1.bf16.msra.mxu0 %v4385
        %4437 = vmatprep.subr.bf16.mxu0 0
        %4438 = vmatpush1.bf16.msra.mxu0 0
        %4439 = vmatprep.subr.bf16.mxu0 0
        %4440 = vmatpush1.bf16.msra.mxu0 0
        %4441 = vmatprep.subr.bf16.mxu0 0
        %4442 = vmatpush1.bf16.msra.mxu0 0
        %4443 = vmatprep.subr.bf16.mxu0 0
        %4444 = vmatpush1.bf16.msra.mxu0 0
        %4445 = vmatprep.subr.bf16.mxu0 0
        %4446 = vmatpush1.bf16.msra.mxu0 0
        %4447 = vmatprep.subr.bf16.mxu0 0
        %4448 = vmatpush1.bf16.msra.mxu0 0
        %4449 = vmatprep.subr.bf16.mxu0 0
        %4450 = vmatpush1.bf16.msra.mxu0 0
        %4451 = vmatprep.subr.bf16.mxu0 0
        %4452 = vmatpush1.bf16.msra.mxu0 0
        %4453 = vmatprep.mubr.bf16.mxu0 0
        %4454 = vmatmul.mubr.bf16.gmra.mrb[0].mxu0 %v4204
        %v4455 = vpop.f32.mrb[0].mxu0
        %v4456 = vadd.f32 %v4244, %v4455
        %v4457 = vpop.f32.mrb[0].mxu0
        %v4458 = vadd.f32 %v4248, %v4457
        %v4459 = vpop.f32.mrb[0].mxu0
        %v4460 = vpop.f32.mrb[0].mxu0
        %4461 = vdwg.mxu0
        %4462 = vmatprep.subr.bf16.mxu0 %v4360
        %4463 = vmatpush1.bf16.msra.mxu0 %v4359
        %4464 = vmatprep.subr.bf16.mxu0 %v4364
        %4465 = vmatpush1.bf16.msra.mxu0 %v4363
        %4466 = vmatprep.subr.bf16.mxu0 %v4368
        %4467 = vmatpush1.bf16.msra.mxu0 %v4367
        %4468 = vmatprep.subr.bf16.mxu0 %v4372
        %4469 = vmatpush1.bf16.msra.mxu0 %v4371
        %4470 = vmatprep.subr.bf16.mxu0 %v4376
        %4471 = vmatpush1.bf16.msra.mxu0 %v4375
        %4472 = vmatprep.subr.bf16.mxu0 %v4380
        %4473 = vmatpush1.bf16.msra.mxu0 %v4379
        %4474 = vmatprep.subr.bf16.mxu0 %v4384
        %4475 = vmatpush1.bf16.msra.mxu0 %v4383
        %4476 = vmatprep.subr.bf16.mxu0 %v4388
        %4477 = vmatpush1.bf16.msra.mxu0 %v4387
        %4478 = vmatprep.subr.bf16.mxu0 0
        %4479 = vmatpush1.bf16.msra.mxu0 0
        %4480 = vmatprep.subr.bf16.mxu0 0
        %4481 = vmatpush1.bf16.msra.mxu0 0
        %4482 = vmatprep.subr.bf16.mxu0 0
        %4483 = vmatpush1.bf16.msra.mxu0 0
        %4484 = vmatprep.subr.bf16.mxu0 0
        %4485 = vmatpush1.bf16.msra.mxu0 0
        %4486 = vmatprep.subr.bf16.mxu0 0
        %4487 = vmatpush1.bf16.msra.mxu0 0
        %4488 = vmatprep.subr.bf16.mxu0 0
        %4489 = vmatpush1.bf16.msra.mxu0 0
        %4490 = vmatprep.subr.bf16.mxu0 0
        %4491 = vmatpush1.bf16.msra.mxu0 0
        %4492 = vmatprep.subr.bf16.mxu0 0
        %4493 = vmatpush1.bf16.msra.mxu0 0
        %4494 = vmatprep.mubr.bf16.mxu0 0
        %4495 = vmatmul.mubr.bf16.gmra.mrb[0].mxu0 %v4204
        %v4496 = vpop.f32.mrb[0].mxu0
        %v4497 = vadd.f32 %v4252, %v4496
        %v4498 = vpop.f32.mrb[0].mxu0
        %v4499 = vadd.f32 %v4256, %v4498
        %v4500 = vpop.f32.mrb[0].mxu0
        %v4501 = vpop.f32.mrb[0].mxu0
        %4502 = vdwg.mxu0
        %v4503 = vmul.f32 %v4456, %v4456
        %v4504 = vmul.f32 %v4458, %v4458
        %v4505 = vmul.f32 %v4497, %v4497
        %v4506 = vmul.f32 %v4499, %v4499
        %v4507 = vmul.f32 %v4456, %v4503
        %v4508 = vmul.f32 %v4458, %v4504
        %v4509 = vmul.f32 %v4497, %v4505
        %v4510 = vmul.f32 %v4499, %v4506
        %v4511 = vmul.f32 %v4507, 0.044715
        %v4512 = vmul.f32 %v4508, 0.044715
        %v4513 = vmul.f32 %v4509, 0.044715
        %v4514 = vmul.f32 %v4510, 0.044715
        %v4515 = vadd.f32 %v4456, %v4511
        %v4516 = vadd.f32 %v4458, %v4512
        %v4517 = vadd.f32 %v4497, %v4513
        %v4518 = vadd.f32 %v4499, %v4514
        %v4519 = vmul.f32 %v4515, 0.7978846
        %v4520 = vmul.f32 %v4516, 0.7978846
        %v4521 = vmul.f32 %v4517, 0.7978846
        %v4522 = vmul.f32 %v4518, 0.7978846
        %v4523 = vtanh.pop %v4519
        %v4524 = vtanh.pop %v4520
        %v4525 = vtanh.pop %v4521
        %v4526 = vtanh.pop %v4522
        %v4527 = vadd.f32 %v4523, 1.0
        %v4528 = vadd.f32 %v4524, 1.0
        %v4529 = vadd.f32 %v4525, 1.0
        %v4530 = vadd.f32 %v4526, 1.0
        %v4531 = vmul.f32 %v4527, 0.5
        %v4532 = vmul.f32 %v4528, 0.5
        %v4533 = vmul.f32 %v4529, 0.5
        %v4534 = vmul.f32 %v4530, 0.5
        %v4535 = vmul.f32 %v4456, %v4531
        %v4536 = vmul.f32 %v4458, %v4532
        %v4537 = vmul.f32 %v4497, %v4533
        %v4538 = vmul.f32 %v4499, %v4534
        %v4539 = vpack.c.bf16 %v4535, %v4535
        %v4540 = vpack.c.bf16 %v4536, %v4536
        %v4541 = vpack.c.bf16 %v4537, %v4537
        %v4542 = vpack.c.bf16 %v4538, %v4538
        %s4543 = scalar_lea.vmem [#allocation19], 256
        %v4544 = vld [vmem:[%s4543] sm:$0xf]
        %v4545 = vld [vmem:[%s4543 + $0x4] sm:$0xf]
        %v4546 = vld [vmem:[%s4543 + $0x8] sm:$0xf]
        %v4547 = vld [vmem:[%s4543 + $0xc] sm:$0xf]
        %v4548 = vld [vmem:[%s4543 + $0x10] sm:$0xf]
        %v4549 = vld [vmem:[%s4543 + $0x14] sm:$0xf]
        %v4550 = vld [vmem:[%s4543 + $0x18] sm:$0xf]
        %v4551 = vld [vmem:[%s4543 + $0x1c] sm:$0xf]
        %v4552 = vld [vmem:[%s4543 + $0x20] sm:$0xf]
        %v4553 = vld [vmem:[%s4543 + $0x24] sm:$0xf]
        %v4554 = vld [vmem:[%s4543 + $0x28] sm:$0xf]
        %v4555 = vld [vmem:[%s4543 + $0x2c] sm:$0xf]
        %v4556 = vld [vmem:[%s4543 + $0x30] sm:$0xf]
        %v4557 = vld [vmem:[%s4543 + $0x34] sm:$0xf]
        %v4558 = vld [vmem:[%s4543 + $0x38] sm:$0xf]
        %v4559 = vld [vmem:[%s4543 + $0x3c] sm:$0xf]
        %v4560 = vld [vmem:[%s4543 + $0x40] sm:$0xf]
        %v4561 = vld [vmem:[%s4543 + $0x44] sm:$0xf]
        %v4562 = vld [vmem:[%s4543 + $0x48] sm:$0xf]
        %v4563 = vld [vmem:[%s4543 + $0x4c] sm:$0xf]
        %v4564 = vld [vmem:[%s4543 + $0x50] sm:$0xf]
        %v4565 = vld [vmem:[%s4543 + $0x54] sm:$0xf]
        %v4566 = vld [vmem:[%s4543 + $0x58] sm:$0xf]
        %v4567 = vld [vmem:[%s4543 + $0x5c] sm:$0xf]
        %v4568 = vld [vmem:[%s4543 + $0x60] sm:$0xf]
        %v4569 = vld [vmem:[%s4543 + $0x64] sm:$0xf]
        %v4570 = vld [vmem:[%s4543 + $0x68] sm:$0xf]
        %v4571 = vld [vmem:[%s4543 + $0x6c] sm:$0xf]
        %v4572 = vld [vmem:[%s4543 + $0x70] sm:$0xf]
        %v4573 = vld [vmem:[%s4543 + $0x74] sm:$0xf]
        %v4574 = vld [vmem:[%s4543 + $0x78] sm:$0xf]
        %v4575 = vld [vmem:[%s4543 + $0x7c] sm:$0xf]
        %v4576 = vld [vmem:[%s4543 + $0x80] sm:$0xf]
        %v4577 = vld [vmem:[%s4543 + $0x84] sm:$0xf]
        %v4578 = vld [vmem:[%s4543 + $0x88] sm:$0xf]
        %v4579 = vld [vmem:[%s4543 + $0x8c] sm:$0xf]
        %v4580 = vld [vmem:[%s4543 + $0x90] sm:$0xf]
        %v4581 = vld [vmem:[%s4543 + $0x94] sm:$0xf]
        %v4582 = vld [vmem:[%s4543 + $0x98] sm:$0xf]
        %v4583 = vld [vmem:[%s4543 + $0x9c] sm:$0xf]
        %v4584 = vld [vmem:[%s4543 + $0xa0] sm:$0xf]
        %v4585 = vld [vmem:[%s4543 + $0xa4] sm:$0xf]
        %v4586 = vld [vmem:[%s4543 + $0xa8] sm:$0xf]
        %v4587 = vld [vmem:[%s4543 + $0xac] sm:$0xf]
        %v4588 = vld [vmem:[%s4543 + $0xb0] sm:$0xf]
        %v4589 = vld [vmem:[%s4543 + $0xb4] sm:$0xf]
        %v4590 = vld [vmem:[%s4543 + $0xb8] sm:$0xf]
        %v4591 = vld [vmem:[%s4543 + $0xbc] sm:$0xf]
        %v4592 = vld [vmem:[%s4543 + $0xc0] sm:$0xf]
        %v4593 = vld [vmem:[%s4543 + $0xc4] sm:$0xf]
        %v4594 = vld [vmem:[%s4543 + $0xc8] sm:$0xf]
        %v4595 = vld [vmem:[%s4543 + $0xcc] sm:$0xf]
        %v4596 = vld [vmem:[%s4543 + $0xd0] sm:$0xf]
        %v4597 = vld [vmem:[%s4543 + $0xd4] sm:$0xf]
        %v4598 = vld [vmem:[%s4543 + $0xd8] sm:$0xf]
        %v4599 = vld [vmem:[%s4543 + $0xdc] sm:$0xf]
        %v4600 = vld [vmem:[%s4543 + $0xe0] sm:$0xf]
        %v4601 = vld [vmem:[%s4543 + $0xe4] sm:$0xf]
        %v4602 = vld [vmem:[%s4543 + $0xe8] sm:$0xf]
        %v4603 = vld [vmem:[%s4543 + $0xec] sm:$0xf]
        %v4604 = vld [vmem:[%s4543 + $0xf0] sm:$0xf]
        %v4605 = vld [vmem:[%s4543 + $0xf4] sm:$0xf]
        %v4606 = vld [vmem:[%s4543 + $0xf8] sm:$0xf]
        %v4607 = vld [vmem:[%s4543 + $0xfc] sm:$0xf]
        %v4672 = vunpack.c.l.b16 %v4544
        %v4673 = vunpack.c.l.b16 %v4545
        %v4674 = vunpack.c.l.b16 %v4546
        %v4675 = vunpack.c.l.b16 %v4547
        %v4676 = vunpack.c.l.b16 %v4548
        %v4677 = vunpack.c.l.b16 %v4549
        %v4678 = vunpack.c.l.b16 %v4550
        %v4679 = vunpack.c.l.b16 %v4551
        %v4680 = vunpack.c.l.b16 %v4552
        %v4681 = vunpack.c.l.b16 %v4553
        %v4682 = vunpack.c.l.b16 %v4554
        %v4683 = vunpack.c.l.b16 %v4555
        %v4684 = vunpack.c.l.b16 %v4556
        %v4685 = vunpack.c.l.b16 %v4557
        %v4686 = vunpack.c.l.b16 %v4558
        %v4687 = vunpack.c.l.b16 %v4559
        %v4688 = vunpack.c.l.b16 %v4560
        %v4689 = vunpack.c.l.b16 %v4561
        %v4690 = vunpack.c.l.b16 %v4562
        %v4691 = vunpack.c.l.b16 %v4563
        %v4692 = vunpack.c.l.b16 %v4564
        %v4693 = vunpack.c.l.b16 %v4565
        %v4694 = vunpack.c.l.b16 %v4566
        %v4695 = vunpack.c.l.b16 %v4567
        %v4696 = vunpack.c.l.b16 %v4568
        %v4697 = vunpack.c.l.b16 %v4569
        %v4698 = vunpack.c.l.b16 %v4570
        %v4699 = vunpack.c.l.b16 %v4571
        %v4700 = vunpack.c.l.b16 %v4572
        %v4701 = vunpack.c.l.b16 %v4573
        %v4702 = vunpack.c.l.b16 %v4574
        %v4703 = vunpack.c.l.b16 %v4575
        %v4704 = vunpack.c.l.b16 %v4576
        %v4705 = vunpack.c.l.b16 %v4577
        %v4706 = vunpack.c.l.b16 %v4578
        %v4707 = vunpack.c.l.b16 %v4579
        %v4708 = vunpack.c.l.b16 %v4580
        %v4709 = vunpack.c.l.b16 %v4581
        %v4710 = vunpack.c.l.b16 %v4582
        %v4711 = vunpack.c.l.b16 %v4583
        %v4712 = vunpack.c.l.b16 %v4584
        %v4713 = vunpack.c.l.b16 %v4585
        %v4714 = vunpack.c.l.b16 %v4586
        %v4715 = vunpack.c.l.b16 %v4587
        %v4716 = vunpack.c.l.b16 %v4588
        %v4717 = vunpack.c.l.b16 %v4589
        %v4718 = vunpack.c.l.b16 %v4590
        %v4719 = vunpack.c.l.b16 %v4591
        %v4720 = vunpack.c.l.b16 %v4592
        %v4721 = vunpack.c.l.b16 %v4593
        %v4722 = vunpack.c.l.b16 %v4594
        %v4723 = vunpack.c.l.b16 %v4595
        %v4724 = vunpack.c.l.b16 %v4596
        %v4725 = vunpack.c.l.b16 %v4597
        %v4726 = vunpack.c.l.b16 %v4598
        %v4727 = vunpack.c.l.b16 %v4599
        %v4728 = vunpack.c.l.b16 %v4600
        %v4729 = vunpack.c.l.b16 %v4601
        %v4730 = vunpack.c.l.b16 %v4602
        %v4731 = vunpack.c.l.b16 %v4603
        %v4732 = vunpack.c.l.b16 %v4604
        %v4733 = vunpack.c.l.b16 %v4605
        %v4734 = vunpack.c.l.b16 %v4606
        %v4735 = vunpack.c.l.b16 %v4607
        %v4736 = vpack.c.b16 %v4673, %v4672
        %v4737 = vpack.c.b16 %v4675, %v4674
        %v4738 = vpack.c.b16 %v4677, %v4676
        %v4739 = vpack.c.b16 %v4679, %v4678
        %v4740 = vpack.c.b16 %v4681, %v4680
        %v4741 = vpack.c.b16 %v4683, %v4682
        %v4742 = vpack.c.b16 %v4685, %v4684
        %v4743 = vpack.c.b16 %v4687, %v4686
        %v4744 = vpack.c.b16 %v4689, %v4688
        %v4745 = vpack.c.b16 %v4691, %v4690
        %v4746 = vpack.c.b16 %v4693, %v4692
        %v4747 = vpack.c.b16 %v4695, %v4694
        %v4748 = vpack.c.b16 %v4697, %v4696
        %v4749 = vpack.c.b16 %v4699, %v4698
        %v4750 = vpack.c.b16 %v4701, %v4700
        %v4751 = vpack.c.b16 %v4703, %v4702
        %v4752 = vpack.c.b16 %v4705, %v4704
        %v4753 = vpack.c.b16 %v4707, %v4706
        %v4754 = vpack.c.b16 %v4709, %v4708
        %v4755 = vpack.c.b16 %v4711, %v4710
        %v4756 = vpack.c.b16 %v4713, %v4712
        %v4757 = vpack.c.b16 %v4715, %v4714
        %v4758 = vpack.c.b16 %v4717, %v4716
        %v4759 = vpack.c.b16 %v4719, %v4718
        %v4760 = vpack.c.b16 %v4721, %v4720
        %v4761 = vpack.c.b16 %v4723, %v4722
        %v4762 = vpack.c.b16 %v4725, %v4724
        %v4763 = vpack.c.b16 %v4727, %v4726
        %v4764 = vpack.c.b16 %v4729, %v4728
        %v4765 = vpack.c.b16 %v4731, %v4730
        %v4766 = vpack.c.b16 %v4733, %v4732
        %v4767 = vpack.c.b16 %v4735, %v4734
        %4800 = vmatprep.subr.bf16.mxu0 0
        %4801 = vmatpush1.bf16.msra.mxu0 %v4736
        %4802 = vmatprep.subr.bf16.mxu0 0
        %4803 = vmatpush1.bf16.msra.mxu0 %v4737
        %4804 = vmatprep.subr.bf16.mxu0 0
        %4805 = vmatpush1.bf16.msra.mxu0 %v4738
        %4806 = vmatprep.subr.bf16.mxu0 0
        %4807 = vmatpush1.bf16.msra.mxu0 %v4739
        %4808 = vmatprep.subr.bf16.mxu0 0
        %4809 = vmatpush1.bf16.msra.mxu0 %v4740
        %4810 = vmatprep.subr.bf16.mxu0 0
        %4811 = vmatpush1.bf16.msra.mxu0 %v4741
        %4812 = vmatprep.subr.bf16.mxu0 0
        %4813 = vmatpush1.bf16.msra.mxu0 %v4742
        %4814 = vmatprep.subr.bf16.mxu0 0
        %4815 = vmatpush1.bf16.msra.mxu0 %v4743
        %4816 = vmatprep.subr.bf16.mxu0 0
        %4817 = vmatpush1.bf16.msra.mxu0 %v4744
        %4818 = vmatprep.subr.bf16.mxu0 0
        %4819 = vmatpush1.bf16.msra.mxu0 %v4745
        %4820 = vmatprep.subr.bf16.mxu0 0
        %4821 = vmatpush1.bf16.msra.mxu0 %v4746
        %4822 = vmatprep.subr.bf16.mxu0 0
        %4823 = vmatpush1.bf16.msra.mxu0 %v4747
        %4824 = vmatprep.subr.bf16.mxu0 0
        %4825 = vmatpush1.bf16.msra.mxu0 %v4748
        %4826 = vmatprep.subr.bf16.mxu0 0
        %4827 = vmatpush1.bf16.msra.mxu0 %v4749
        %4828 = vmatprep.subr.bf16.mxu0 0
        %4829 = vmatpush1.bf16.msra.mxu0 %v4750
        %4830 = vmatprep.subr.bf16.mxu0 0
        %4831 = vmatpush1.bf16.msra.mxu0 %v4751
        %4832 = vmatprep.mubr.bf16.mxu0 %v4540
        %4833 = vmatmul.mubr.bf16.gmra.mrb[0].mxu0 %v4539
        %v4834 = vpop.f32.mrb[0].mxu0
        %v4835 = vadd.f32 0.0, %v4834
        %v4836 = vpop.f32.mrb[0].mxu0
        %v4837 = vpop.f32.mrb[0].mxu0
        %v4838 = vpop.f32.mrb[0].mxu0
        %4839 = vdwg.mxu0
        %4840 = vmatprep.subr.bf16.mxu0 0
        %4841 = vmatpush1.bf16.msra.mxu0 %v4752
        %4842 = vmatprep.subr.bf16.mxu0 0
        %4843 = vmatpush1.bf16.msra.mxu0 %v4753
        %4844 = vmatprep.subr.bf16.mxu0 0
        %4845 = vmatpush1.bf16.msra.mxu0 %v4754
        %4846 = vmatprep.subr.bf16.mxu0 0
        %4847 = vmatpush1.bf16.msra.mxu0 %v4755
        %4848 = vmatprep.subr.bf16.mxu0 0
        %4849 = vmatpush1.bf16.msra.mxu0 %v4756
        %4850 = vmatprep.subr.bf16.mxu0 0
        %4851 = vmatpush1.bf16.msra.mxu0 %v4757
        %4852 = vmatprep.subr.bf16.mxu0 0
        %4853 = vmatpush1.bf16.msra.mxu0 %v4758
        %4854 = vmatprep.subr.bf16.mxu0 0
        %4855 = vmatpush1.bf16.msra.mxu0 %v4759
        %4856 = vmatprep.subr.bf16.mxu0 0
        %4857 = vmatpush1.bf16.msra.mxu0 %v4760
        %4858 = vmatprep.subr.bf16.mxu0 0
        %4859 = vmatpush1.bf16.msra.mxu0 %v4761
        %4860 = vmatprep.subr.bf16.mxu0 0
        %4861 = vmatpush1.bf16.msra.mxu0 %v4762
        %4862 = vmatprep.subr.bf16.mxu0 0
        %4863 = vmatpush1.bf16.msra.mxu0 %v4763
        %4864 = vmatprep.subr.bf16.mxu0 0
        %4865 = vmatpush1.bf16.msra.mxu0 %v4764
        %4866 = vmatprep.subr.bf16.mxu0 0
        %4867 = vmatpush1.bf16.msra.mxu0 %v4765
        %4868 = vmatprep.subr.bf16.mxu0 0
        %4869 = vmatpush1.bf16.msra.mxu0 %v4766
        %4870 = vmatprep.subr.bf16.mxu0 0
        %4871 = vmatpush1.bf16.msra.mxu0 %v4767
        %4872 = vmatprep.mubr.bf16.mxu0 %v4542
        %4873 = vmatmul.mubr.bf16.gmra.mrb[0].mxu0 %v4541
        %v4874 = vpop.f32.mrb[0].mxu0
        %v4875 = vadd.f32 %v4835, %v4874
        %v4876 = vpop.f32.mrb[0].mxu0
        %v4877 = vpop.f32.mrb[0].mxu0
        %v4878 = vpop.f32.mrb[0].mxu0
        %4879 = vdwg.mxu0
        %v4880 = vadd.f32 %v4203, %v4875
        %s4881 = scalar_lea.vmem [#allocation20], 1
        %v4882 = vld [vmem:[%s4881] sm:$0x1]
        %v4884 = vlaneseq
        %v4885 = vshrl.u32 %v4884, 7
        %v4886 = vsub.s32 0, %v4885
        %v4887 = vrot.slane %v4882, %v4886
        %v4889 = vadd.f32 %v4880, %v4887
        %s4890 = scalar_lea.vmem [#allocation22], 1
        %v4891 = vld [vmem:[%s4890] sm:$0x1]
        %s4892 = scalar_lea.vmem [#allocation23], 1
        %v4893 = vld [vmem:[%s4892] sm:$0x1]
        %4894 = vadd.xlane.f32.xlu0 %v4889
        %v4895 = vpop.xlane.xlu0 %4894
        %v4896 = vmul.f32 %v4895, %v876
        %v4897 = vsub.f32 %v4889, %v4896
        %v4898 = vmul.f32 %v4897, %v4897
        %4899 = vadd.xlane.f32.xlu0 %v4898
        %v4900 = vpop.xlane.xlu0 %4899
        %v4901 = vmul.f32 %v4900, %v876
        %v4902 = vadd.f32 %v4901, 1e-12
        %v4903 = vrsqrt.pop %v4902
        %v4904 = vmul.f32 %v4897, %v4903
        %v4906 = vlaneseq
        %v4907 = vshrl.u32 %v4906, 7
        %v4908 = vsub.s32 0, %v4907
        %v4909 = vrot.slane %v4891, %v4908
        %v4911 = vmul.f32 %v4904, %v4909
        %v4913 = vlaneseq
        %v4914 = vshrl.u32 %v4913, 7
        %v4915 = vsub.s32 0, %v4914
        %v4916 = vrot.slane %v4893, %v4915
        %v4918 = vadd.f32 %v4911, %v4916
        %v4919 = vpack.c.bf16 %v4918, %v4918
        %v4920 = vld [vmem:[#allocation25] sm:$0xf]
        %v4921 = vld [vmem:[#allocation25 + $0x4] sm:$0xf]
        %v4922 = vld [vmem:[#allocation25 + $0x8] sm:$0xf]
        %v4923 = vld [vmem:[#allocation25 + $0xc] sm:$0xf]
        %v4924 = vld [vmem:[#allocation25 + $0x10] sm:$0xf]
        %v4925 = vld [vmem:[#allocation25 + $0x14] sm:$0xf]
        %v4926 = vld [vmem:[#allocation25 + $0x18] sm:$0xf]
        %v4927 = vld [vmem:[#allocation25 + $0x1c] sm:$0xf]
        %v4928 = vld [vmem:[#allocation25 + $0x20] sm:$0xf]
        %v4929 = vld [vmem:[#allocation25 + $0x24] sm:$0xf]
        %v4930 = vld [vmem:[#allocation25 + $0x28] sm:$0xf]
        %v4931 = vld [vmem:[#allocation25 + $0x2c] sm:$0xf]
        %v4932 = vld [vmem:[#allocation25 + $0x30] sm:$0xf]
        %v4933 = vld [vmem:[#allocation25 + $0x34] sm:$0xf]
        %v4934 = vld [vmem:[#allocation25 + $0x38] sm:$0xf]
        %v4935 = vld [vmem:[#allocation25 + $0x3c] sm:$0xf]
        %v4936 = vld [vmem:[#allocation26] sm:$0x1]
        %v4953 = vunpack.c.l.b16 %v4920
        %v4954 = vunpack.c.l.b16 %v4921
        %v4955 = vunpack.c.l.b16 %v4922
        %v4956 = vunpack.c.l.b16 %v4923
        %v4957 = vunpack.c.l.b16 %v4924
        %v4958 = vunpack.c.l.b16 %v4925
        %v4959 = vunpack.c.l.b16 %v4926
        %v4960 = vunpack.c.l.b16 %v4927
        %v4961 = vunpack.c.l.b16 %v4928
        %v4962 = vunpack.c.l.b16 %v4929
        %v4963 = vunpack.c.l.b16 %v4930
        %v4964 = vunpack.c.l.b16 %v4931
        %v4965 = vunpack.c.l.b16 %v4932
        %v4966 = vunpack.c.l.b16 %v4933
        %v4967 = vunpack.c.l.b16 %v4934
        %v4968 = vunpack.c.l.b16 %v4935
        %v4969 = vpack.c.b16 %v4954, %v4953
        %v4970 = vpack.c.b16 %v4956, %v4955
        %v4971 = vpack.c.b16 %v4958, %v4957
        %v4972 = vpack.c.b16 %v4960, %v4959
        %v4973 = vpack.c.b16 %v4962, %v4961
        %v4974 = vpack.c.b16 %v4964, %v4963
        %v4975 = vpack.c.b16 %v4966, %v4965
        %v4976 = vpack.c.b16 %v4968, %v4967
        %4985 = vmatprep.subr.bf16.mxu0 0
        %4986 = vmatpush1.bf16.msra.mxu0 %v4969
        %4987 = vmatprep.subr.bf16.mxu0 0
        %4988 = vmatpush1.bf16.msra.mxu0 %v4970
        %4989 = vmatprep.subr.bf16.mxu0 0
        %4990 = vmatpush1.bf16.msra.mxu0 %v4971
        %4991 = vmatprep.subr.bf16.mxu0 0
        %4992 = vmatpush1.bf16.msra.mxu0 %v4972
        %4993 = vmatprep.subr.bf16.mxu0 0
        %4994 = vmatpush1.bf16.msra.mxu0 %v4973
        %4995 = vmatprep.subr.bf16.mxu0 0
        %4996 = vmatpush1.bf16.msra.mxu0 %v4974
        %4997 = vmatprep.subr.bf16.mxu0 0
        %4998 = vmatpush1.bf16.msra.mxu0 %v4975
        %4999 = vmatprep.subr.bf16.mxu0 0
        %5000 = vmatpush1.bf16.msra.mxu0 %v4976
        %5001 = vmatprep.subr.bf16.mxu0 0
        %5002 = vmatpush1.bf16.msra.mxu0 0
        %5003 = vmatprep.subr.bf16.mxu0 0
        %5004 = vmatpush1.bf16.msra.mxu0 0
        %5005 = vmatprep.subr.bf16.mxu0 0
        %5006 = vmatpush1.bf16.msra.mxu0 0
        %5007 = vmatprep.subr.bf16.mxu0 0
        %5008 = vmatpush1.bf16.msra.mxu0 0
        %5009 = vmatprep.subr.bf16.mxu0 0
        %5010 = vmatpush1.bf16.msra.mxu0 0
        %5011 = vmatprep.subr.bf16.mxu0 0
        %5012 = vmatpush1.bf16.msra.mxu0 0
        %5013 = vmatprep.subr.bf16.mxu0 0
        %5014 = vmatpush1.bf16.msra.mxu0 0
        %5015 = vmatprep.subr.bf16.mxu0 0
        %5016 = vmatpush1.bf16.msra.mxu0 0
        %5017 = vmatprep.mubr.bf16.mxu0 0
        %5018 = vmatmul.mubr.bf16.gmra.mrb[0].mxu0 %v4919
        %v5019 = vpop.f32.mrb[0].mxu0
        %v5020 = vadd.f32 %v4936, %v5019
        %v5021 = vpop.f32.mrb[0].mxu0
        %v5022 = vpop.f32.mrb[0].mxu0
        %v5023 = vpop.f32.mrb[0].mxu0
        %5024 = vdwg.mxu0
        %v5025 = vtanh.pop %v5020
        %v5026 = vpack.c.bf16 %v5025, %v5025
        %v5027 = vld [vmem:[%s18] sm:$0xf]
        %v5028 = vld [vmem:[%s18 + $0x4] sm:$0xf]
        %v5029 = vld [vmem:[%s18 + $0x8] sm:$0xf]
        %v5030 = vld [vmem:[%s18 + $0xc] sm:$0xf]
        %v5031 = vld [vmem:[%s18 + $0x10] sm:$0xf]
        %v5032 = vld [vmem:[%s18 + $0x14] sm:$0xf]
        %v5033 = vld [vmem:[%s18 + $0x18] sm:$0xf]
        %v5034 = vld [vmem:[%s18 + $0x1c] sm:$0xf]
        %v5035 = vld [vmem:[%s18 + $0x20] sm:$0xf]
        %v5036 = vld [vmem:[%s18 + $0x24] sm:$0xf]
        %v5037 = vld [vmem:[%s18 + $0x28] sm:$0xf]
        %v5038 = vld [vmem:[%s18 + $0x2c] sm:$0xf]
        %v5039 = vld [vmem:[%s18 + $0x30] sm:$0xf]
        %v5040 = vld [vmem:[%s18 + $0x34] sm:$0xf]
        %v5041 = vld [vmem:[%s18 + $0x38] sm:$0xf]
        %v5042 = vld [vmem:[%s18 + $0x3c] sm:$0xf]
        %v5043 = vld [vmem:[%s19] sm:$0x1]
        %v5060 = vunpack.c.l.b16 %v5027
        %v5061 = vunpack.c.l.b16 %v5028
        %v5062 = vunpack.c.l.b16 %v5029
        %v5063 = vunpack.c.l.b16 %v5030
        %v5064 = vunpack.c.l.b16 %v5031
        %v5065 = vunpack.c.l.b16 %v5032
        %v5066 = vunpack.c.l.b16 %v5033
        %v5067 = vunpack.c.l.b16 %v5034
        %v5068 = vunpack.c.l.b16 %v5035
        %v5069 = vunpack.c.l.b16 %v5036
        %v5070 = vunpack.c.l.b16 %v5037
        %v5071 = vunpack.c.l.b16 %v5038
        %v5072 = vunpack.c.l.b16 %v5039
        %v5073 = vunpack.c.l.b16 %v5040
        %v5074 = vunpack.c.l.b16 %v5041
        %v5075 = vunpack.c.l.b16 %v5042
        %v5076 = vpack.c.b16 %v5061, %v5060
        %v5077 = vpack.c.b16 %v5063, %v5062
        %v5078 = vpack.c.b16 %v5065, %v5064
        %v5079 = vpack.c.b16 %v5067, %v5066
        %v5080 = vpack.c.b16 %v5069, %v5068
        %v5081 = vpack.c.b16 %v5071, %v5070
        %v5082 = vpack.c.b16 %v5073, %v5072
        %v5083 = vpack.c.b16 %v5075, %v5074
        %5092 = vmatprep.subr.bf16.mxu0 0
        %5093 = vmatpush1.bf16.msra.mxu0 %v5076
        %5094 = vmatprep.subr.bf16.mxu0 0
        %5095 = vmatpush1.bf16.msra.mxu0 %v5077
        %5096 = vmatprep.subr.bf16.mxu0 0
        %5097 = vmatpush1.bf16.msra.mxu0 %v5078
        %5098 = vmatprep.subr.bf16.mxu0 0
        %5099 = vmatpush1.bf16.msra.mxu0 %v5079
        %5100 = vmatprep.subr.bf16.mxu0 0
        %5101 = vmatpush1.bf16.msra.mxu0 %v5080
        %5102 = vmatprep.subr.bf16.mxu0 0
        %5103 = vmatpush1.bf16.msra.mxu0 %v5081
        %5104 = vmatprep.subr.bf16.mxu0 0
        %5105 = vmatpush1.bf16.msra.mxu0 %v5082
        %5106 = vmatprep.subr.bf16.mxu0 0
        %5107 = vmatpush1.bf16.msra.mxu0 %v5083
        %5108 = vmatprep.subr.bf16.mxu0 0
        %5109 = vmatpush1.bf16.msra.mxu0 0
        %5110 = vmatprep.subr.bf16.mxu0 0
        %5111 = vmatpush1.bf16.msra.mxu0 0
        %5112 = vmatprep.subr.bf16.mxu0 0
        %5113 = vmatpush1.bf16.msra.mxu0 0
        %5114 = vmatprep.subr.bf16.mxu0 0
        %5115 = vmatpush1.bf16.msra.mxu0 0
        %5116 = vmatprep.subr.bf16.mxu0 0
        %5117 = vmatpush1.bf16.msra.mxu0 0
        %5118 = vmatprep.subr.bf16.mxu0 0
        %5119 = vmatpush1.bf16.msra.mxu0 0
        %5120 = vmatprep.subr.bf16.mxu0 0
        %5121 = vmatpush1.bf16.msra.mxu0 0
        %5122 = vmatprep.subr.bf16.mxu0 0
        %5123 = vmatpush1.bf16.msra.mxu0 0
        %5124 = vmatprep.mubr.bf16.mxu0 0
        %5125 = vmatmul.mubr.bf16.gmra.mrb[0].mxu0 %v5026
        %v5126 = vpop.f32.mrb[0].mxu0
        %v5127 = vadd.f32 %v5043, %v5126
        %v5128 = vpop.f32.mrb[0].mxu0
        %v5129 = vpop.f32.mrb[0].mxu0
        %v5130 = vpop.f32.mrb[0].mxu0
        %5131 = vdwg.mxu0
        %v5132 = vxor.u32 %v5127, 2147483648
        %v5133 = vmul.f32 %v5132, 1.442695
        %v5134 = vpow.pop %v5133
        %v5135 = vadd.f32 %v5134, 1.0
        %v5136 = vrcp.pop %v5135
        %v5137 = vmul.f32 1.0, %v5136
        %5138 = vst [vmem:[%s866] sm:$0x1] %v5137
        %s5139 = sand.u32 %s483, 1
        %s5140 = scalar_lea.sflag [#allocation4], %s5139
        %s5141 = sand.u32 %s483, 1
        %s5142 = scalar_lea.vmem [#allocation28], %s5141
        // Predicated region
        $region165: #{tpu_custom_call.1} parent=99 // pred_check
          %p5143 = pneg %p493
        $region166: #{tpu_custom_call.1} parent=99 // pred_check_branch
          %5145 = sbr.rel (%p5143) target = $region168
        $region167: #{tpu_custom_call.1} parent=99 // pred_region
          %s5147 = ssub.s32 16, 16
          %5148 = vsyncadd %s5140, %s5147
          %s5149 = smul.addr %s45, 16
          %s5150 = scalar_lea.hbm %s20, %s5149
          %s5152 = sshll.u32 %s5142, 4
          %s5153 = int_to_ptr.vmem [resolvable:$true] %s5152
          %5155 = dma.vmem_to_hbm [thread:$0]  %s5153, 16, %s5150, %s5140
        $region168: #{tpu_custom_call.1} parent=99 // pred_fallthru
          _
      $region100: #{tpu_custom_call.1} parent=5 // pred_fallthru
        _
      %p5156 = scmp.le.s32.totalorder 2, %s40
      // Predicated region
      $region169: #{tpu_custom_call.1} parent=5 // pred_check
        %p5157 = pneg %p5156
      $region170: #{tpu_custom_call.1} parent=5 // pred_check_branch
        %5159 = sbr.rel (%p5157) target = $region172
      $region171: #{tpu_custom_call.1} parent=5 // pred_region
        %s5160 = ssub.s32 %s40, 2
        // Predicated region
        $region173: #{tpu_custom_call.1} parent=171 // pred_check
          %p5161 = pneg %p499
        $region174: #{tpu_custom_call.1} parent=171 // pred_check_branch
          %5163 = sbr.rel (%p5161) target = $region176
        $region175: #{tpu_custom_call.1} parent=171 // pred_region
          %s5164 = sand.u32 %s484, 1
          %s5165 = scalar_lea.sflag [#allocation4], %s5164
          %s5166 = sand.u32 %s484, 1
          %s5167 = scalar_lea.vmem [#allocation28], %s5166
          %5168 = dma.done %s5165, 16
        $region176: #{tpu_custom_call.1} parent=171 // pred_fallthru
          _
      $region172: #{tpu_custom_call.1} parent=5 // pred_fallthru
        _
    $region6: #{tpu_custom_call.1} parent=1 // loop_footer
      %s44 = sadd.s32 1, %s40
    $region7: #{tpu_custom_call.1} parent=1 // loop_footer_branch
      %39 = sbr.rel target = $region3
    $region8: #{tpu_custom_call.1} parent=1 // loop_exit
      _
    %5169 = vsyncpa [#allocation3], 1
    %s5170 = scalar_lea.sflag [#allocation3], 1
    %5171 = vsyncpa %s5170, 1
    %5172 = vsyncpa [#allocation6], 1
    %5173 = vsyncpa [#allocation9], 1
    %5174 = vsyncpa [#allocation12], 1
    %5175 = vsyncpa [#allocation15], 1
    %5176 = vsyncpa [#allocation18], 1
    %5177 = vsyncpa [#allocation21], 1
    %5178 = vsyncpa [#allocation24], 1
    %5179 = vsyncpa [#allocation27], 1
    %5180 = vsyncpa [#allocation4], 1
    %s5181 = scalar_lea.sflag [#allocation4], 1
    %5182 = vsyncpa %s5181, 1

</llo_original>
